<compile_context>
chip_gen: v7x
topology: tpu7x:2x2x1
jax: 0.10.0
libtpu: 0.0.40
codegen_flags: <defaults>
</compile_context>

<pallas_src>
import math
import numpy as np

import jax
import jax.numpy as jnp
from jax.experimental import pallas as pl
from jax.experimental.pallas import tpu as pltpu

# ------------------------------------------------------------------ config ---
LMAX = 2
MMAX = 2
K = (LMAX + 1) ** 2                          # 9 spherical coefficients (l-primary)
SPHERE_CH = 8
HIDDEN_CH = 8
NUM_HEADS = 2
ATTN_ALPHA_CH = 4
ATTN_VALUE_CH = 4
OUTPUT_CH = 8
MAX_ELEMENTS = 10
EDGE_DIST_CH = 8
EDGE_HIDDEN = 16                             # edge_channels_list[-1]
NUM_NODES = 8
NUM_EDGES = 16
GRID_LAT, GRID_LON = 2 * (LMAX + 1), 2 * MMAX + 1
GRID_PTS = GRID_LAT * GRID_LON               # 30 synthetic S2 grid points
SILU_SCALE = 1.0 / 0.6                       # "scaled_silu"

C_IN1 = 2 * SPHERE_CH                        # 16 (source+target channels)
ALPHA_TOT = NUM_HEADS * ATTN_ALPHA_CH        # 8
VALUE_TOT = NUM_HEADS * ATTN_VALUE_CH        # 8
EXTRA_M0 = ALPHA_TOT + HIDDEN_CH             # 16 extra m=0 channels from conv1
EDGE_IN = EDGE_DIST_CH + 2 * EDGE_HIDDEN     # 40
RAD_OUT = sum((LMAX - m + 1) * C_IN1 for m in range(0, MMAX + 1))   # 96

EDGE_TILE = 8                                # edges per grid step (raise at real E)

MSG_W = K * VALUE_TOT                        # 72 lanes of value message
PACK_W = 128                                 # lane-dense output slab (unmasked vst)
PAD_W = PACK_W - MSG_W - NUM_HEADS           # zero pad

PROJ_W = K * OUTPUT_CH                       # 72
PROJ_PACK_W = 128                            # lane-dense projection output

# l-primary coefficient indices per |m| block: (plus_indices, minus_indices)
M_IDX = [([l * l + l for l in range(LMAX + 1)], [])]
for _m in range(1, MMAX + 1):
    M_IDX.append(([l * l + l + _m for l in range(_m, LMAX + 1)],
                  [l * l + l - _m for l in range(_m, LMAX + 1)]))

L_PER_COEF = np.concatenate([[l] * (2 * l + 1) for l in range(LMAX + 1)]).astype(np.int32)


# ------------------------------------------------------------ kernel helpers ---
def _scaled_silu(x):
    return x * jax.nn.sigmoid(x) * SILU_SCALE


def _layer_norm(x, g, b, eps=1e-5):
    mu = jnp.mean(x, axis=-1, keepdims=True)
    var = jnp.mean((x - mu) ** 2, axis=-1, keepdims=True)
    return (x - mu) * jax.lax.rsqrt(var + eps) * g + b


def _smooth_leaky_relu(x, alpha=0.2):
    return ((1.0 + alpha) / 2.0) * x + ((1.0 - alpha) / 2.0) * x * (2.0 * jax.nn.sigmoid(x) - 1.0)


def _rotate_coefs(wig_flat, coefs):
    """Per-edge rotation. wig_flat: (TE, K*K) with [:, k*K+j] = D[e,k,j];
    coefs: K arrays (TE, C). Returns K arrays out_k = sum_j D[:,k,j] * coefs[j]."""
    out = []
    for k in range(K):
        acc = wig_flat[:, k * K:k * K + 1] * coefs[0]
        for j in range(1, K):
            acc = acc + wig_flat[:, k * K + j:k * K + j + 1] * coefs[j]
        out.append(acc)
    return out


def _so2_conv_coefs(coefs, w_list, b0, c_in, m_out, rad=None, extra=0):
    """SO2_Convolution on per-coefficient slices (l-primary list of (TE, c_in))."""
    out = [None] * K
    f32 = jnp.float32
    # m = 0 block (real only)
    idx0 = M_IDX[0][0]
    x0 = jnp.concatenate([coefs[i] for i in idx0], axis=-1)            # (TE, n0*c_in)
    off = len(idx0) * c_in
    if rad is not None:
        x0 = x0 * rad[:, :off]
    y0 = jnp.dot(x0, w_list[0], preferred_element_type=f32) + b0
    x_extra = None
    if extra:
        x_extra = y0[:, :extra]
        y0 = y0[:, extra:]
    for t, i in enumerate(idx0):
        out[i] = y0[:, t * m_out:(t + 1) * m_out]
    # m > 0 blocks (complex pairs)
    for m in range(1, MMAX + 1):
        plus_idx, minus_idx = M_IDX[m]
        nm = len(plus_idx)
        in_w = nm * c_in
        half = nm * m_out
        xp = jnp.concatenate([coefs[i] for i in plus_idx], axis=-1)
        xm = jnp.concatenate([coefs[i] for i in minus_idx], axis=-1)
        if rad is not None:
            r = rad[:, off:off + in_w]
            xp = xp * r
            xm = xm * r
        off += in_w
        yp = jnp.dot(xp, w_list[m], preferred_element_type=f32)        # (TE, 2*half)
        ym = jnp.dot(xm, w_list[m], preferred_element_type=f32)
        op = yp[:, :half] - ym[:, half:]                               # +m outputs
        om = yp[:, half:] + ym[:, :half]                               # -m outputs
        for t, i in enumerate(plus_idx):
            out[i] = op[:, t * m_out:(t + 1) * m_out]
        for t, i in enumerate(minus_idx):
            out[i] = om[:, t * m_out:(t + 1) * m_out]
    return out, x_extra


def _s2_act_coefs(coefs, gating, tg_exp, fg_exp, ch):
    """SeparableS2Activation: grid SiLU on l>0, scaled-SiLU scalar gating on l=0."""
    x = jnp.concatenate(coefs, axis=-1)                                # (TE, K*ch)
    g = _scaled_silu(jnp.dot(x, tg_exp, preferred_element_type=jnp.float32))
    y = jnp.dot(g, fg_exp, preferred_element_type=jnp.float32)         # (TE, K*ch)
    out = [_scaled_silu(gating)]
    for k in range(1, K):
        out.append(y[:, k * ch:(k + 1) * ch])
    return out


# -------------------------------------------------------- fused edge kernel ---
def _fused_edge_kernel(
        x_edge_ref, x_msg_ref, wig_ref, wiginv_ref,
        rw1_ref, rb1_ref, rg1_ref, rbe1_ref,
        rw2_ref, rb2_ref, rg2_ref, rbe2_ref,
        rw3_ref, rb3_ref,
        c1w0_ref, c1b0_ref, c1w1_ref, c1w2_ref,
        tgx_ref, fgx_ref,
        c2w0_ref, c2b0_ref, c2w1_ref, c2w2_ref,
        ag_ref, ab_ref, adot_ref,
        out_ref):
    f32 = jnp.float32
    te = x_edge_ref.shape[0]

    # ---- radial MLP (kept entirely in VMEM) -------------------------------
    h = jnp.dot(x_edge_ref[...], rw1_ref[...], preferred_element_type=f32) + rb1_ref[...]
    h = _scaled_silu(_layer_norm(h, rg1_ref[...], rbe1_ref[...]))
    h = jnp.dot(h, rw2_ref[...], preferred_element_type=f32) + rb2_ref[...]
    h = _scaled_silu(_layer_norm(h, rg2_ref[...], rbe2_ref[...]))
    rad = jnp.dot(h, rw3_ref[...], preferred_element_type=f32) + rb3_ref[...]   # (TE, 96)

    # ---- Wigner rotation into the edge frame -------------------------------
    xin = x_msg_ref[...]                                               # (TE, K*C_IN1)
    in_coefs = [xin[:, j * C_IN1:(j + 1) * C_IN1] for j in range(K)]
    rot = _rotate_coefs(wig_ref[...], in_coefs)

    # ---- SO(2) conv 1 (radial-weighted, extra m=0 channels) ----------------
    hid, extra = _so2_conv_coefs(
        rot, [c1w0_ref[...], c1w1_ref[...], c1w2_ref[...]], c1b0_ref[...],
        c_in=C_IN1, m_out=HIDDEN_CH, rad=rad, extra=EXTRA_M0)
    alpha_feat = extra[:, :ALPHA_TOT]                                  # (TE, 8)
    gating = extra[:, ALPHA_TOT:]                                      # (TE, 8)

    # ---- separable S2 activation -------------------------------------------
    act = _s2_act_coefs(hid, gating, tgx_ref[...], fgx_ref[...], HIDDEN_CH)

    # ---- SO(2) conv 2 (internal weights) ------------------------------------
    val, _ = _so2_conv_coefs(
        act, [c2w0_ref[...], c2w1_ref[...], c2w2_ref[...]], c2b0_ref[...],
        c_in=HIDDEN_CH, m_out=VALUE_TOT, rad=None, extra=0)

    # ---- attention-alpha logits (LayerNorm -> SmoothLeakyReLU -> dot) ------
    adot = adot_ref[...]                                               # (H, A)
    cols = []
    for hd in range(NUM_HEADS):
        a = alpha_feat[:, hd * ATTN_ALPHA_CH:(hd + 1) * ATTN_ALPHA_CH]
        a = _smooth_leaky_relu(_layer_norm(a, ag_ref[...], ab_ref[...]))
        cols.append(jnp.sum(a * adot[hd:hd + 1, :], axis=-1, keepdims=True))
    alpha = jnp.concatenate(cols, axis=-1)                             # (TE, H)

    # ---- rotate value message back to the global frame ----------------------
    out_coefs = _rotate_coefs(wiginv_ref[...], val)
    msg = jnp.concatenate(out_coefs, axis=-1)                          # (TE, K*VALUE_TOT)

    # ---- single lane-dense 128-wide writeback (unmasked vst) ----------------
    out_ref[...] = jnp.concatenate(
        [msg, alpha, jnp.zeros((te, PAD_W), f32)], axis=-1)            # (TE, 128)


def fused_edge_messages(x_edge, x_msg, wig2, wiginv2, weights, te=EDGE_TILE):
    E = x_edge.shape[0]
    assert E % te == 0, "edge count must be a multiple of the edge tile"
    grid = (E // te,)

    def row_spec(width):
        return pl.BlockSpec((te, width), lambda i: (i, 0))

    in_specs = [row_spec(x_edge.shape[1]), row_spec(x_msg.shape[1]),
                row_spec(wig2.shape[1]), row_spec(wiginv2.shape[1])]
    # weights: full-array blocks, resident in VMEM (constant index maps)
    in_specs += [pl.BlockSpec(w.shape, lambda i: (0, 0)) for w in weights]

    out_shape = jax.ShapeDtypeStruct((E, PACK_W), jnp.float32)
    out_specs = pl.BlockSpec((te, PACK_W), lambda i: (i, 0))

    packed = pl.pallas_call(
        _fused_edge_kernel,
        out_shape=out_shape,
        grid=grid,
        in_specs=in_specs,
        out_specs=out_specs,
        compiler_params=pltpu.CompilerParams(
            dimension_semantics=("parallel",),        # megacore-shard edge tiles (v7x)
            vmem_limit_bytes=32 * 1024 * 1024),
    )(x_edge, x_msg, wig2, wiginv2, *weights)

    msg = packed[:, :MSG_W]                                            # (E, 72)
    alpha = packed[:, MSG_W:MSG_W + NUM_HEADS]                         # (E, H)
    return msg, alpha


# --------------------------------------------- SO3_LinearV2 projection kernel ---
def _bias_matmul_kernel(x_ref, w_ref, b_ref, o_ref):
    o_ref[...] = jnp.dot(x_ref[...], w_ref[...],
                         preferred_element_type=jnp.float32) + b_ref[...]


def pallas_bias_matmul(x, w, b_row):
    """x:(M,Kin) @ w:(Kin,Nout) + b_row:(1,Nout).  Nout is lane-padded by the caller."""
    M, Kin = x.shape
    Nout = w.shape[1]
    return pl.pallas_call(
        _bias_matmul_kernel,
        out_shape=jax.ShapeDtypeStruct((M, Nout), jnp.float32),
        grid=(1,),
        in_specs=[pl.BlockSpec((M, Kin), lambda i: (0, 0)),
                  pl.BlockSpec((Kin, Nout), lambda i: (0, 0)),
                  pl.BlockSpec((1, Nout), lambda i: (0, 0))],
        out_specs=pl.BlockSpec((M, Nout), lambda i: (0, 0)),
    )(x, w, b_row)


# -------------------------------------------------------------------- forward ---
def forward(params, x_emb, atomic_numbers, edge_distance, edge_index,
            wigner, wigner_inv, to_grid, from_grid):
    E = edge_index.shape[1]
    N = x_emb.shape[0]
    src, tgt = edge_index[0], edge_index[1]

    # atom-edge embedding: concat(edge_distance, source_emb, target_emb)
    src_e = params['source_embedding'][atomic_numbers[src]]
    tgt_e = params['target_embedding'][atomic_numbers[tgt]]
    x_edge = jnp.concatenate([edge_distance, src_e, tgt_e], axis=1)          # (E, 40)

    # edge message input (coefficient-major lane flattening) and flattened Wigner
    x_msg = jnp.concatenate([x_emb[src], x_emb[tgt]], axis=2).reshape(E, K * C_IN1)
    wig2 = wigner.reshape(E, K * K)
    wiginv2 = wigner_inv.reshape(E, K * K)

    # channel-block expanded S2 grid matrices -> plain 2-D matmuls in the kernel
    eye_h = jnp.eye(HIDDEN_CH, dtype=jnp.float32)
    tg_exp = jnp.kron(to_grid.T, eye_h)                                      # (K*H, G*H)
    fg_exp = jnp.kron(from_grid, eye_h)                                      # (G*H, K*H)

    r1, c1, c2 = params['rad1'], params['conv1'], params['conv2']
    _r = lambda v: v.reshape(1, -1)
    weights = [
        r1['w1'], _r(r1['b1']), _r(r1['ln1_g']), _r(r1['ln1_b']),
        r1['w2'], _r(r1['b2']), _r(r1['ln2_g']), _r(r1['ln2_b']),
        r1['w3'], _r(r1['b3']),
        c1['w0'], _r(c1['b0']), c1['w1'], c1['w2'],
        tg_exp, fg_exp,
        c2['w0'], _r(c2['b0']), c2['w1'], c2['w2'],
        _r(params['alpha_ln_g']), _r(params['alpha_ln_b']), params['alpha_dot'],
    ]

    # ---- fused per-edge pipeline (single Pallas call) -----------------------
    msg, alpha = fused_edge_messages(x_edge, x_msg, wig2, wiginv2, weights)

    # ---- segment softmax over target nodes (torch_geometric.utils.softmax) --
    seg_max = jax.ops.segment_max(alpha, tgt, num_segments=N)
    a = jnp.exp(alpha - seg_max[tgt])
    seg_sum = jax.ops.segment_sum(a, tgt, num_segments=N)
    a = a / (seg_sum[tgt] + 1e-16)
    # TODO(synk): alpha_dropout / variational dropout omitted (alpha_drop=0.0)

    # alpha weighting (commutes with the in-kernel inverse rotation)
    attn = msg.reshape(E, K, NUM_HEADS, ATTN_VALUE_CH) * a[:, None, :, None]

    # edge -> target-node reduction: O(E*K*C) scatter-add instead of one-hot matmul
    node_msg = jax.ops.segment_sum(attn.reshape(E, K * VALUE_TOT), tgt, num_segments=N)

    # SO3_LinearV2 projection: one block-diagonal matmul, bias on l=0 only,
    # lane-padded to 128 output columns for an unmasked store in the kernel.
    w_per = jnp.transpose(params['proj_w'][L_PER_COEF], (0, 2, 1))           # (K, Cin, Cout)
    eye_k = jnp.eye(K, dtype=jnp.float32)
    wbd = (eye_k[:, None, :, None] * w_per[:, :, None, :]).reshape(K * VALUE_TOT,
                                                                   K * OUTPUT_CH)
    wbd_pad = jnp.zeros((K * VALUE_TOT, PROJ_PACK_W), jnp.float32).at[:, :PROJ_W].set(wbd)
    bias_row = jnp.zeros((1, PROJ_PACK_W), jnp.float32).at[0, :OUTPUT_CH].set(
        params['proj_b'])
    out = pallas_bias_matmul(node_msg, wbd_pad, bias_row)[:, :PROJ_W]        # (N, K*Cout)
    return out.reshape(N, K, OUTPUT_CH)


# ---------------------------------------------------------------- parameters ---
def _uniform(key, shape, bound):
    return jax.random.uniform(key, shape, jnp.float32, -bound, bound)


def linear_params(key, fan_in, fan_out, bias=True):
    k1, k2 = jax.random.split(key)
    bnd = 1.0 / math.sqrt(fan_in)
    w = _uniform(k1, (fan_in, fan_out), bnd)       # stored as (in, out)
    return (w, _uniform(k2, (fan_out,), bnd)) if bias else (w, None)


def init_params(key):
    keys = iter(jax.random.split(key, 32))
    p = {}
    p['source_embedding'] = _uniform(next(keys), (MAX_ELEMENTS, EDGE_HIDDEN), 0.001)
    p['target_embedding'] = _uniform(next(keys), (MAX_ELEMENTS, EDGE_HIDDEN), 0.001)

    w1, b1 = linear_params(next(keys), EDGE_IN, EDGE_HIDDEN)
    w2, b2 = linear_params(next(keys), EDGE_HIDDEN, EDGE_HIDDEN)
    w3, b3 = linear_params(next(keys), EDGE_HIDDEN, RAD_OUT)
    p['rad1'] = dict(w1=w1, b1=b1, ln1_g=jnp.ones(EDGE_HIDDEN), ln1_b=jnp.zeros(EDGE_HIDDEN),
                     w2=w2, b2=b2, ln2_g=jnp.ones(EDGE_HIDDEN), ln2_b=jnp.zeros(EDGE_HIDDEN),
                     w3=w3, b3=b3)

    # SO(2) conv 1 (extra m=0 channels come first in the fc_m0 output)
    w0, b0 = linear_params(next(keys), (LMAX + 1) * C_IN1, HIDDEN_CH * (LMAX + 1) + EXTRA_M0)
    conv1 = {'w0': w0, 'b0': b0}
    for m in range(1, MMAX + 1):
        ncoef = LMAX - m + 1
        wm, _ = linear_params(next(keys), ncoef * C_IN1, 2 * HIDDEN_CH * ncoef, bias=False)
        conv1[f'w{m}'] = wm / math.sqrt(2.0)
    p['conv1'] = conv1

    # SO(2) conv 2 (internal weights)
    w0, b0 = linear_params(next(keys), (LMAX + 1) * HIDDEN_CH, VALUE_TOT * (LMAX + 1))
    conv2 = {'w0': w0, 'b0': b0}
    for m in range(1, MMAX + 1):
        ncoef = LMAX - m + 1
        wm, _ = linear_params(next(keys), ncoef * HIDDEN_CH, 2 * VALUE_TOT * ncoef, bias=False)
        conv2[f'w{m}'] = wm / math.sqrt(2.0)
    p['conv2'] = conv2

    # attention alpha
    p['alpha_ln_g'] = jnp.ones(ATTN_ALPHA_CH)
    p['alpha_ln_b'] = jnp.zeros(ATTN_ALPHA_CH)
    p['alpha_dot'] = _uniform(next(keys), (NUM_HEADS, ATTN_ALPHA_CH),
                              1.0 / math.sqrt(ATTN_ALPHA_CH))

    # SO3_LinearV2 projection
    p['proj_w'] = _uniform(next(keys), (LMAX + 1, OUTPUT_CH, VALUE_TOT),
                           1.0 / math.sqrt(VALUE_TOT))
    p['proj_b'] = jnp.zeros(OUTPUT_CH)
    return p


# --------------------------------------------------------------------- main ---
if __name__ == "__main__":
    key = jax.random.PRNGKey(0)
    k_par, k_x, k_d, k_w, k_g1, k_g2 = jax.random.split(key, 6)

    params = init_params(k_par)

    # inputs
    x_emb = jax.random.normal(k_x, (NUM_NODES, K, SPHERE_CH), jnp.float32)
    atomic_numbers = jnp.arange(NUM_NODES, dtype=jnp.int32) % MAX_ELEMENTS
    edge_distance = jax.random.normal(k_d, (NUM_EDGES, EDGE_DIST_CH), jnp.float32)
    src = (jnp.arange(NUM_EDGES, dtype=jnp.int32) * 3 + 1) % NUM_NODES
    tgt = jnp.arange(NUM_EDGES, dtype=jnp.int32) % NUM_NODES
    edge_index = jnp.stack([src, tgt], axis=0)

    # synthetic SO3_Rotation Wigner-D matrices (per-edge) and SO3_grid matrices.
    # TODO(synk): real Wigner-D / spherical-harmonic grid matrices come from the
    # SO3_Rotation / SO3_grid helper classes; deterministic stand-ins used here.
    wigner = 0.3 * jax.random.normal(k_w, (NUM_EDGES, K, K), jnp.float32)
    wigner = wigner + jnp.eye(K)[None]
    wigner_inv = jnp.transpose(wigner, (0, 2, 1))
    to_grid = 0.3 * jax.random.normal(k_g1, (GRID_PTS, K), jnp.float32)
    from_grid = 0.1 * jax.random.normal(k_g2, (GRID_PTS, K), jnp.float32)

    fwd = jax.jit(forward)
    out = fwd(params, x_emb, atomic_numbers, edge_distance, edge_index,
              wigner, wigner_inv, to_grid, from_grid)
    out = jax.block_until_ready(out)

    assert out.shape == (NUM_NODES, K, OUTPUT_CH), out.shape
    assert bool(jnp.all(jnp.isfinite(out)))
    print("KERNEL_OK")
</pallas_src>

<mosaic_0001>
module attributes {stable_mosaic.version = 11 : i64} {
  func.func @_fused_edge_kernel(%arg0: i32, %arg1: memref<8x40xf32, #tpu.memory_space<vmem>>, %arg2: memref<8x144xf32, #tpu.memory_space<vmem>>, %arg3: memref<8x81xf32, #tpu.memory_space<vmem>>, %arg4: memref<8x81xf32, #tpu.memory_space<vmem>>, %arg5: memref<40x16xf32, #tpu.memory_space<vmem>>, %arg6: memref<1x16xf32, #tpu.memory_space<vmem>>, %arg7: memref<1x16xf32, #tpu.memory_space<vmem>>, %arg8: memref<1x16xf32, #tpu.memory_space<vmem>>, %arg9: memref<16x16xf32, #tpu.memory_space<vmem>>, %arg10: memref<1x16xf32, #tpu.memory_space<vmem>>, %arg11: memref<1x16xf32, #tpu.memory_space<vmem>>, %arg12: memref<1x16xf32, #tpu.memory_space<vmem>>, %arg13: memref<16x96xf32, #tpu.memory_space<vmem>>, %arg14: memref<1x96xf32, #tpu.memory_space<vmem>>, %arg15: memref<48x40xf32, #tpu.memory_space<vmem>>, %arg16: memref<1x40xf32, #tpu.memory_space<vmem>>, %arg17: memref<32x32xf32, #tpu.memory_space<vmem>>, %arg18: memref<16x16xf32, #tpu.memory_space<vmem>>, %arg19: memref<72x240xf32, #tpu.memory_space<vmem>>, %arg20: memref<240x72xf32, #tpu.memory_space<vmem>>, %arg21: memref<24x24xf32, #tpu.memory_space<vmem>>, %arg22: memref<1x24xf32, #tpu.memory_space<vmem>>, %arg23: memref<16x32xf32, #tpu.memory_space<vmem>>, %arg24: memref<8x16xf32, #tpu.memory_space<vmem>>, %arg25: memref<1x4xf32, #tpu.memory_space<vmem>>, %arg26: memref<1x4xf32, #tpu.memory_space<vmem>>, %arg27: memref<2x4xf32, #tpu.memory_space<vmem>>, %arg28: memref<8x128xf32, #tpu.memory_space<vmem>>) attributes {dimension_semantics = [#tpu.dimension_semantics<parallel>], iteration_bounds = array<i64: 2>, scalar_prefetch = 0 : i64, scratch_operands = 0 : i64, tpu.core_type = #tpu.core_type<tc>, window_params = [{transform_indices = @transform_0, window_bounds = array<i64: 8, 40>}, {transform_indices = @transform_1, window_bounds = array<i64: 8, 144>}, {transform_indices = @transform_2, window_bounds = array<i64: 8, 81>}, {transform_indices = @transform_3, window_bounds = array<i64: 8, 81>}, {pipeline_mode = #tpu.pipeline_mode<synchronous>, transform_indices = @transform_4, window_bounds = array<i64: 40, 16>}, {pipeline_mode = #tpu.pipeline_mode<synchronous>, transform_indices = @transform_5, window_bounds = array<i64: 1, 16>}, {pipeline_mode = #tpu.pipeline_mode<synchronous>, transform_indices = @transform_6, window_bounds = array<i64: 1, 16>}, {pipeline_mode = #tpu.pipeline_mode<synchronous>, transform_indices = @transform_7, window_bounds = array<i64: 1, 16>}, {pipeline_mode = #tpu.pipeline_mode<synchronous>, transform_indices = @transform_8, window_bounds = array<i64: 16, 16>}, {pipeline_mode = #tpu.pipeline_mode<synchronous>, transform_indices = @transform_9, window_bounds = array<i64: 1, 16>}, {pipeline_mode = #tpu.pipeline_mode<synchronous>, transform_indices = @transform_10, window_bounds = array<i64: 1, 16>}, {pipeline_mode = #tpu.pipeline_mode<synchronous>, transform_indices = @transform_11, window_bounds = array<i64: 1, 16>}, {pipeline_mode = #tpu.pipeline_mode<synchronous>, transform_indices = @transform_12, window_bounds = array<i64: 16, 96>}, {pipeline_mode = #tpu.pipeline_mode<synchronous>, transform_indices = @transform_13, window_bounds = array<i64: 1, 96>}, {pipeline_mode = #tpu.pipeline_mode<synchronous>, transform_indices = @transform_14, window_bounds = array<i64: 48, 40>}, {pipeline_mode = #tpu.pipeline_mode<synchronous>, transform_indices = @transform_15, window_bounds = array<i64: 1, 40>}, {pipeline_mode = #tpu.pipeline_mode<synchronous>, transform_indices = @transform_16, window_bounds = array<i64: 32, 32>}, {pipeline_mode = #tpu.pipeline_mode<synchronous>, transform_indices = @transform_17, window_bounds = array<i64: 16, 16>}, {pipeline_mode = #tpu.pipeline_mode<synchronous>, transform_indices = @transform_18, window_bounds = array<i64: 72, 240>}, {pipeline_mode = #tpu.pipeline_mode<synchronous>, transform_indices = @transform_19, window_bounds = array<i64: 240, 72>}, {pipeline_mode = #tpu.pipeline_mode<synchronous>, transform_indices = @transform_20, window_bounds = array<i64: 24, 24>}, {pipeline_mode = #tpu.pipeline_mode<synchronous>, transform_indices = @transform_21, window_bounds = array<i64: 1, 24>}, {pipeline_mode = #tpu.pipeline_mode<synchronous>, transform_indices = @transform_22, window_bounds = array<i64: 16, 32>}, {pipeline_mode = #tpu.pipeline_mode<synchronous>, transform_indices = @transform_23, window_bounds = array<i64: 8, 16>}, {pipeline_mode = #tpu.pipeline_mode<synchronous>, transform_indices = @transform_24, window_bounds = array<i64: 1, 4>}, {pipeline_mode = #tpu.pipeline_mode<synchronous>, transform_indices = @transform_25, window_bounds = array<i64: 1, 4>}, {pipeline_mode = #tpu.pipeline_mode<synchronous>, transform_indices = @transform_26, window_bounds = array<i64: 2, 4>}, {transform_indices = @transform_27, window_bounds = array<i64: 8, 128>}]} {
    %c0 = arith.constant 0 : index
    %c0_0 = arith.constant 0 : index
    %0 = vector.load %arg1[%c0, %c0_0] : memref<8x40xf32, #tpu.memory_space<vmem>>, vector<8x40xf32>
    %c0_1 = arith.constant 0 : index
    %c0_2 = arith.constant 0 : index
    %1 = vector.load %arg5[%c0_1, %c0_2] : memref<40x16xf32, #tpu.memory_space<vmem>>, vector<40x16xf32>
    %cst = arith.constant dense<0.000000e+00> : vector<8x16xf32>
    %2 = tpu.matmul %0, %1, %cst {dimension_numbers = #tpu.dot_dimension_numbers<[1], [0], [0], [1], [0, 0, 1, 1], [], []>} : vector<8x40xf32>, vector<40x16xf32>, vector<8x16xf32> -> vector<8x16xf32>
    %c0_3 = arith.constant 0 : index
    %c0_4 = arith.constant 0 : index
    %3 = vector.load %arg6[%c0_3, %c0_4] : memref<1x16xf32, #tpu.memory_space<vmem>>, vector<1x16xf32>
    %4 = vector.broadcast %3 : vector<1x16xf32> to vector<8x16xf32>
    %5 = arith.addf %2, %4 : vector<8x16xf32>
    %c0_5 = arith.constant 0 : index
    %c0_6 = arith.constant 0 : index
    %6 = vector.load %arg7[%c0_5, %c0_6] : memref<1x16xf32, #tpu.memory_space<vmem>>, vector<1x16xf32>
    %c0_7 = arith.constant 0 : index
    %c0_8 = arith.constant 0 : index
    %7 = vector.load %arg8[%c0_7, %c0_8] : memref<1x16xf32, #tpu.memory_space<vmem>>, vector<1x16xf32>
    %cst_9 = arith.constant dense<0.000000e+00> : vector<8xf32>
    %8 = vector.multi_reduction <add>, %5, %cst_9 [1] : vector<8x16xf32> to vector<8xf32>
    %9 = vector.shape_cast %8 : vector<8xf32> to vector<8x1xf32>
    %cst_10 = arith.constant 1.600000e+01 : f32
    %10 = vector.broadcast %cst_10 : f32 to vector<8x1xf32>
    %11 = arith.divf %9, %10 : vector<8x1xf32>
    %12 = vector.broadcast %11 : vector<8x1xf32> to vector<8x16xf32>
    %13 = arith.subf %5, %12 : vector<8x16xf32>
    %14 = arith.mulf %13, %13 : vector<8x16xf32>
    %cst_11 = arith.constant dense<0.000000e+00> : vector<8xf32>
    %15 = vector.multi_reduction <add>, %14, %cst_11 [1] : vector<8x16xf32> to vector<8xf32>
    %16 = vector.shape_cast %15 : vector<8xf32> to vector<8x1xf32>
    %cst_12 = arith.constant 1.600000e+01 : f32
    %17 = vector.broadcast %cst_12 : f32 to vector<8x1xf32>
    %18 = arith.divf %16, %17 : vector<8x1xf32>
    %19 = vector.broadcast %11 : vector<8x1xf32> to vector<8x16xf32>
    %20 = arith.subf %5, %19 : vector<8x16xf32>
    %cst_13 = arith.constant 9.99999974E-6 : f32
    %21 = vector.broadcast %cst_13 : f32 to vector<8x1xf32>
    %22 = arith.addf %18, %21 : vector<8x1xf32>
    %23 = math.rsqrt %22 : vector<8x1xf32>
    %24 = vector.broadcast %23 : vector<8x1xf32> to vector<8x16xf32>
    %25 = arith.mulf %20, %24 : vector<8x16xf32>
    %26 = vector.broadcast %6 : vector<1x16xf32> to vector<8x16xf32>
    %27 = arith.mulf %25, %26 : vector<8x16xf32>
    %28 = vector.broadcast %7 : vector<1x16xf32> to vector<8x16xf32>
    %29 = arith.addf %27, %28 : vector<8x16xf32>
    %30 = arith.negf %29 : vector<8x16xf32>
    %31 = math.exp %30 : vector<8x16xf32>
    %cst_14 = arith.constant 1.000000e+00 : f32
    %32 = vector.broadcast %cst_14 : f32 to vector<8x16xf32>
    %33 = arith.addf %32, %31 : vector<8x16xf32>
    %34 = arith.divf %32, %33 : vector<8x16xf32>
    %35 = arith.mulf %29, %34 : vector<8x16xf32>
    %cst_15 = arith.constant 1.66666663 : f32
    %36 = vector.broadcast %cst_15 : f32 to vector<8x16xf32>
    %37 = arith.mulf %35, %36 : vector<8x16xf32>
    %c0_16 = arith.constant 0 : index
    %c0_17 = arith.constant 0 : index
    %38 = vector.load %arg9[%c0_16, %c0_17] : memref<16x16xf32, #tpu.memory_space<vmem>>, vector<16x16xf32>
    %cst_18 = arith.constant dense<0.000000e+00> : vector<8x16xf32>
    %39 = tpu.matmul %37, %38, %cst_18 {dimension_numbers = #tpu.dot_dimension_numbers<[1], [0], [0], [1], [0, 0, 1, 1], [], []>} : vector<8x16xf32>, vector<16x16xf32>, vector<8x16xf32> -> vector<8x16xf32>
    %c0_19 = arith.constant 0 : index
    %c0_20 = arith.constant 0 : index
    %40 = vector.load %arg10[%c0_19, %c0_20] : memref<1x16xf32, #tpu.memory_space<vmem>>, vector<1x16xf32>
    %41 = vector.broadcast %40 : vector<1x16xf32> to vector<8x16xf32>
    %42 = arith.addf %39, %41 : vector<8x16xf32>
    %c0_21 = arith.constant 0 : index
    %c0_22 = arith.constant 0 : index
    %43 = vector.load %arg11[%c0_21, %c0_22] : memref<1x16xf32, #tpu.memory_space<vmem>>, vector<1x16xf32>
    %c0_23 = arith.constant 0 : index
    %c0_24 = arith.constant 0 : index
    %44 = vector.load %arg12[%c0_23, %c0_24] : memref<1x16xf32, #tpu.memory_space<vmem>>, vector<1x16xf32>
    %cst_25 = arith.constant dense<0.000000e+00> : vector<8xf32>
    %45 = vector.multi_reduction <add>, %42, %cst_25 [1] : vector<8x16xf32> to vector<8xf32>
    %46 = vector.shape_cast %45 : vector<8xf32> to vector<8x1xf32>
    %cst_26 = arith.constant 1.600000e+01 : f32
    %47 = vector.broadcast %cst_26 : f32 to vector<8x1xf32>
    %48 = arith.divf %46, %47 : vector<8x1xf32>
    %49 = vector.broadcast %48 : vector<8x1xf32> to vector<8x16xf32>
    %50 = arith.subf %42, %49 : vector<8x16xf32>
    %51 = arith.mulf %50, %50 : vector<8x16xf32>
    %cst_27 = arith.constant dense<0.000000e+00> : vector<8xf32>
    %52 = vector.multi_reduction <add>, %51, %cst_27 [1] : vector<8x16xf32> to vector<8xf32>
    %53 = vector.shape_cast %52 : vector<8xf32> to vector<8x1xf32>
    %cst_28 = arith.constant 1.600000e+01 : f32
    %54 = vector.broadcast %cst_28 : f32 to vector<8x1xf32>
    %55 = arith.divf %53, %54 : vector<8x1xf32>
    %56 = vector.broadcast %48 : vector<8x1xf32> to vector<8x16xf32>
    %57 = arith.subf %42, %56 : vector<8x16xf32>
    %cst_29 = arith.constant 9.99999974E-6 : f32
    %58 = vector.broadcast %cst_29 : f32 to vector<8x1xf32>
    %59 = arith.addf %55, %58 : vector<8x1xf32>
    %60 = math.rsqrt %59 : vector<8x1xf32>
    %61 = vector.broadcast %60 : vector<8x1xf32> to vector<8x16xf32>
    %62 = arith.mulf %57, %61 : vector<8x16xf32>
    %63 = vector.broadcast %43 : vector<1x16xf32> to vector<8x16xf32>
    %64 = arith.mulf %62, %63 : vector<8x16xf32>
    %65 = vector.broadcast %44 : vector<1x16xf32> to vector<8x16xf32>
    %66 = arith.addf %64, %65 : vector<8x16xf32>
    %67 = arith.negf %66 : vector<8x16xf32>
    %68 = math.exp %67 : vector<8x16xf32>
    %cst_30 = arith.constant 1.000000e+00 : f32
    %69 = vector.broadcast %cst_30 : f32 to vector<8x16xf32>
    %70 = arith.addf %69, %68 : vector<8x16xf32>
    %71 = arith.divf %69, %70 : vector<8x16xf32>
    %72 = arith.mulf %66, %71 : vector<8x16xf32>
    %cst_31 = arith.constant 1.66666663 : f32
    %73 = vector.broadcast %cst_31 : f32 to vector<8x16xf32>
    %74 = arith.mulf %72, %73 : vector<8x16xf32>
    %c0_32 = arith.constant 0 : index
    %c0_33 = arith.constant 0 : index
    %75 = vector.load %arg13[%c0_32, %c0_33] : memref<16x96xf32, #tpu.memory_space<vmem>>, vector<16x96xf32>
    %cst_34 = arith.constant dense<0.000000e+00> : vector<8x96xf32>
    %76 = tpu.matmul %74, %75, %cst_34 {dimension_numbers = #tpu.dot_dimension_numbers<[1], [0], [0], [1], [0, 0, 1, 1], [], []>} : vector<8x16xf32>, vector<16x96xf32>, vector<8x96xf32> -> vector<8x96xf32>
    %c0_35 = arith.constant 0 : index
    %c0_36 = arith.constant 0 : index
    %77 = vector.load %arg14[%c0_35, %c0_36] : memref<1x96xf32, #tpu.memory_space<vmem>>, vector<1x96xf32>
    %78 = vector.broadcast %77 : vector<1x96xf32> to vector<8x96xf32>
    %79 = arith.addf %76, %78 : vector<8x96xf32>
    %c0_37 = arith.constant 0 : index
    %c0_38 = arith.constant 0 : index
    %80 = vector.load %arg2[%c0_37, %c0_38] : memref<8x144xf32, #tpu.memory_space<vmem>>, vector<8x144xf32>
    %81 = vector.extract_strided_slice %80 {offsets = [0, 0], sizes = [8, 16], strides = [1, 1]} : vector<8x144xf32> to vector<8x16xf32>
    %82 = vector.extract_strided_slice %80 {offsets = [0, 16], sizes = [8, 16], strides = [1, 1]} : vector<8x144xf32> to vector<8x16xf32>
    %83 = vector.extract_strided_slice %80 {offsets = [0, 32], sizes = [8, 16], strides = [1, 1]} : vector<8x144xf32> to vector<8x16xf32>
    %84 = vector.extract_strided_slice %80 {offsets = [0, 48], sizes = [8, 16], strides = [1, 1]} : vector<8x144xf32> to vector<8x16xf32>
    %85 = vector.extract_strided_slice %80 {offsets = [0, 64], sizes = [8, 16], strides = [1, 1]} : vector<8x144xf32> to vector<8x16xf32>
    %86 = vector.extract_strided_slice %80 {offsets = [0, 80], sizes = [8, 16], strides = [1, 1]} : vector<8x144xf32> to vector<8x16xf32>
    %87 = vector.extract_strided_slice %80 {offsets = [0, 96], sizes = [8, 16], strides = [1, 1]} : vector<8x144xf32> to vector<8x16xf32>
    %88 = vector.extract_strided_slice %80 {offsets = [0, 112], sizes = [8, 16], strides = [1, 1]} : vector<8x144xf32> to vector<8x16xf32>
    %89 = vector.extract_strided_slice %80 {offsets = [0, 128], sizes = [8, 16], strides = [1, 1]} : vector<8x144xf32> to vector<8x16xf32>
    %c0_39 = arith.constant 0 : index
    %c0_40 = arith.constant 0 : index
    %90 = vector.load %arg3[%c0_39, %c0_40] : memref<8x81xf32, #tpu.memory_space<vmem>>, vector<8x81xf32>
    %91 = vector.extract_strided_slice %90 {offsets = [0, 0], sizes = [8, 1], strides = [1, 1]} : vector<8x81xf32> to vector<8x1xf32>
    %92 = vector.broadcast %91 : vector<8x1xf32> to vector<8x16xf32>
    %93 = arith.mulf %92, %81 : vector<8x16xf32>
    %94 = vector.extract_strided_slice %90 {offsets = [0, 1], sizes = [8, 1], strides = [1, 1]} : vector<8x81xf32> to vector<8x1xf32>
    %95 = vector.broadcast %94 : vector<8x1xf32> to vector<8x16xf32>
    %96 = arith.mulf %95, %82 : vector<8x16xf32>
    %97 = arith.addf %93, %96 : vector<8x16xf32>
    %98 = vector.extract_strided_slice %90 {offsets = [0, 2], sizes = [8, 1], strides = [1, 1]} : vector<8x81xf32> to vector<8x1xf32>
    %99 = vector.broadcast %98 : vector<8x1xf32> to vector<8x16xf32>
    %100 = arith.mulf %99, %83 : vector<8x16xf32>
    %101 = arith.addf %97, %100 : vector<8x16xf32>
    %102 = vector.extract_strided_slice %90 {offsets = [0, 3], sizes = [8, 1], strides = [1, 1]} : vector<8x81xf32> to vector<8x1xf32>
    %103 = vector.broadcast %102 : vector<8x1xf32> to vector<8x16xf32>
    %104 = arith.mulf %103, %84 : vector<8x16xf32>
    %105 = arith.addf %101, %104 : vector<8x16xf32>
    %106 = vector.extract_strided_slice %90 {offsets = [0, 4], sizes = [8, 1], strides = [1, 1]} : vector<8x81xf32> to vector<8x1xf32>
    %107 = vector.broadcast %106 : vector<8x1xf32> to vector<8x16xf32>
    %108 = arith.mulf %107, %85 : vector<8x16xf32>
    %109 = arith.addf %105, %108 : vector<8x16xf32>
    %110 = vector.extract_strided_slice %90 {offsets = [0, 5], sizes = [8, 1], strides = [1, 1]} : vector<8x81xf32> to vector<8x1xf32>
    %111 = vector.broadcast %110 : vector<8x1xf32> to vector<8x16xf32>
    %112 = arith.mulf %111, %86 : vector<8x16xf32>
    %113 = arith.addf %109, %112 : vector<8x16xf32>
    %114 = vector.extract_strided_slice %90 {offsets = [0, 6], sizes = [8, 1], strides = [1, 1]} : vector<8x81xf32> to vector<8x1xf32>
    %115 = vector.broadcast %114 : vector<8x1xf32> to vector<8x16xf32>
    %116 = arith.mulf %115, %87 : vector<8x16xf32>
    %117 = arith.addf %113, %116 : vector<8x16xf32>
    %118 = vector.extract_strided_slice %90 {offsets = [0, 7], sizes = [8, 1], strides = [1, 1]} : vector<8x81xf32> to vector<8x1xf32>
    %119 = vector.broadcast %118 : vector<8x1xf32> to vector<8x16xf32>
    %120 = arith.mulf %119, %88 : vector<8x16xf32>
    %121 = arith.addf %117, %120 : vector<8x16xf32>
    %122 = vector.extract_strided_slice %90 {offsets = [0, 8], sizes = [8, 1], strides = [1, 1]} : vector<8x81xf32> to vector<8x1xf32>
    %123 = vector.broadcast %122 : vector<8x1xf32> to vector<8x16xf32>
    %124 = arith.mulf %123, %89 : vector<8x16xf32>
    %125 = arith.addf %121, %124 : vector<8x16xf32>
    %126 = vector.extract_strided_slice %90 {offsets = [0, 9], sizes = [8, 1], strides = [1, 1]} : vector<8x81xf32> to vector<8x1xf32>
    %127 = vector.broadcast %126 : vector<8x1xf32> to vector<8x16xf32>
    %128 = arith.mulf %127, %81 : vector<8x16xf32>
    %129 = vector.extract_strided_slice %90 {offsets = [0, 10], sizes = [8, 1], strides = [1, 1]} : vector<8x81xf32> to vector<8x1xf32>
    %130 = vector.broadcast %129 : vector<8x1xf32> to vector<8x16xf32>
    %131 = arith.mulf %130, %82 : vector<8x16xf32>
    %132 = arith.addf %128, %131 : vector<8x16xf32>
    %133 = vector.extract_strided_slice %90 {offsets = [0, 11], sizes = [8, 1], strides = [1, 1]} : vector<8x81xf32> to vector<8x1xf32>
    %134 = vector.broadcast %133 : vector<8x1xf32> to vector<8x16xf32>
    %135 = arith.mulf %134, %83 : vector<8x16xf32>
    %136 = arith.addf %132, %135 : vector<8x16xf32>
    %137 = vector.extract_strided_slice %90 {offsets = [0, 12], sizes = [8, 1], strides = [1, 1]} : vector<8x81xf32> to vector<8x1xf32>
    %138 = vector.broadcast %137 : vector<8x1xf32> to vector<8x16xf32>
    %139 = arith.mulf %138, %84 : vector<8x16xf32>
    %140 = arith.addf %136, %139 : vector<8x16xf32>
    %141 = vector.extract_strided_slice %90 {offsets = [0, 13], sizes = [8, 1], strides = [1, 1]} : vector<8x81xf32> to vector<8x1xf32>
    %142 = vector.broadcast %141 : vector<8x1xf32> to vector<8x16xf32>
    %143 = arith.mulf %142, %85 : vector<8x16xf32>
    %144 = arith.addf %140, %143 : vector<8x16xf32>
    %145 = vector.extract_strided_slice %90 {offsets = [0, 14], sizes = [8, 1], strides = [1, 1]} : vector<8x81xf32> to vector<8x1xf32>
    %146 = vector.broadcast %145 : vector<8x1xf32> to vector<8x16xf32>
    %147 = arith.mulf %146, %86 : vector<8x16xf32>
    %148 = arith.addf %144, %147 : vector<8x16xf32>
    %149 = vector.extract_strided_slice %90 {offsets = [0, 15], sizes = [8, 1], strides = [1, 1]} : vector<8x81xf32> to vector<8x1xf32>
    %150 = vector.broadcast %149 : vector<8x1xf32> to vector<8x16xf32>
    %151 = arith.mulf %150, %87 : vector<8x16xf32>
    %152 = arith.addf %148, %151 : vector<8x16xf32>
    %153 = vector.extract_strided_slice %90 {offsets = [0, 16], sizes = [8, 1], strides = [1, 1]} : vector<8x81xf32> to vector<8x1xf32>
    %154 = vector.broadcast %153 : vector<8x1xf32> to vector<8x16xf32>
    %155 = arith.mulf %154, %88 : vector<8x16xf32>
    %156 = arith.addf %152, %155 : vector<8x16xf32>
    %157 = vector.extract_strided_slice %90 {offsets = [0, 17], sizes = [8, 1], strides = [1, 1]} : vector<8x81xf32> to vector<8x1xf32>
    %158 = vector.broadcast %157 : vector<8x1xf32> to vector<8x16xf32>
    %159 = arith.mulf %158, %89 : vector<8x16xf32>
    %160 = arith.addf %156, %159 : vector<8x16xf32>
    %161 = vector.extract_strided_slice %90 {offsets = [0, 18], sizes = [8, 1], strides = [1, 1]} : vector<8x81xf32> to vector<8x1xf32>
    %162 = vector.broadcast %161 : vector<8x1xf32> to vector<8x16xf32>
    %163 = arith.mulf %162, %81 : vector<8x16xf32>
    %164 = vector.extract_strided_slice %90 {offsets = [0, 19], sizes = [8, 1], strides = [1, 1]} : vector<8x81xf32> to vector<8x1xf32>
    %165 = vector.broadcast %164 : vector<8x1xf32> to vector<8x16xf32>
    %166 = arith.mulf %165, %82 : vector<8x16xf32>
    %167 = arith.addf %163, %166 : vector<8x16xf32>
    %168 = vector.extract_strided_slice %90 {offsets = [0, 20], sizes = [8, 1], strides = [1, 1]} : vector<8x81xf32> to vector<8x1xf32>
    %169 = vector.broadcast %168 : vector<8x1xf32> to vector<8x16xf32>
    %170 = arith.mulf %169, %83 : vector<8x16xf32>
    %171 = arith.addf %167, %170 : vector<8x16xf32>
    %172 = vector.extract_strided_slice %90 {offsets = [0, 21], sizes = [8, 1], strides = [1, 1]} : vector<8x81xf32> to vector<8x1xf32>
    %173 = vector.broadcast %172 : vector<8x1xf32> to vector<8x16xf32>
    %174 = arith.mulf %173, %84 : vector<8x16xf32>
    %175 = arith.addf %171, %174 : vector<8x16xf32>
    %176 = vector.extract_strided_slice %90 {offsets = [0, 22], sizes = [8, 1], strides = [1, 1]} : vector<8x81xf32> to vector<8x1xf32>
    %177 = vector.broadcast %176 : vector<8x1xf32> to vector<8x16xf32>
    %178 = arith.mulf %177, %85 : vector<8x16xf32>
    %179 = arith.addf %175, %178 : vector<8x16xf32>
    %180 = vector.extract_strided_slice %90 {offsets = [0, 23], sizes = [8, 1], strides = [1, 1]} : vector<8x81xf32> to vector<8x1xf32>
    %181 = vector.broadcast %180 : vector<8x1xf32> to vector<8x16xf32>
    %182 = arith.mulf %181, %86 : vector<8x16xf32>
    %183 = arith.addf %179, %182 : vector<8x16xf32>
    %184 = vector.extract_strided_slice %90 {offsets = [0, 24], sizes = [8, 1], strides = [1, 1]} : vector<8x81xf32> to vector<8x1xf32>
    %185 = vector.broadcast %184 : vector<8x1xf32> to vector<8x16xf32>
    %186 = arith.mulf %185, %87 : vector<8x16xf32>
    %187 = arith.addf %183, %186 : vector<8x16xf32>
    %188 = vector.extract_strided_slice %90 {offsets = [0, 25], sizes = [8, 1], strides = [1, 1]} : vector<8x81xf32> to vector<8x1xf32>
    %189 = vector.broadcast %188 : vector<8x1xf32> to vector<8x16xf32>
    %190 = arith.mulf %189, %88 : vector<8x16xf32>
    %191 = arith.addf %187, %190 : vector<8x16xf32>
    %192 = vector.extract_strided_slice %90 {offsets = [0, 26], sizes = [8, 1], strides = [1, 1]} : vector<8x81xf32> to vector<8x1xf32>
    %193 = vector.broadcast %192 : vector<8x1xf32> to vector<8x16xf32>
    %194 = arith.mulf %193, %89 : vector<8x16xf32>
    %195 = arith.addf %191, %194 : vector<8x16xf32>
    %196 = vector.extract_strided_slice %90 {offsets = [0, 27], sizes = [8, 1], strides = [1, 1]} : vector<8x81xf32> to vector<8x1xf32>
    %197 = vector.broadcast %196 : vector<8x1xf32> to vector<8x16xf32>
    %198 = arith.mulf %197, %81 : vector<8x16xf32>
    %199 = vector.extract_strided_slice %90 {offsets = [0, 28], sizes = [8, 1], strides = [1, 1]} : vector<8x81xf32> to vector<8x1xf32>
    %200 = vector.broadcast %199 : vector<8x1xf32> to vector<8x16xf32>
    %201 = arith.mulf %200, %82 : vector<8x16xf32>
    %202 = arith.addf %198, %201 : vector<8x16xf32>
    %203 = vector.extract_strided_slice %90 {offsets = [0, 29], sizes = [8, 1], strides = [1, 1]} : vector<8x81xf32> to vector<8x1xf32>
    %204 = vector.broadcast %203 : vector<8x1xf32> to vector<8x16xf32>
    %205 = arith.mulf %204, %83 : vector<8x16xf32>
    %206 = arith.addf %202, %205 : vector<8x16xf32>
    %207 = vector.extract_strided_slice %90 {offsets = [0, 30], sizes = [8, 1], strides = [1, 1]} : vector<8x81xf32> to vector<8x1xf32>
    %208 = vector.broadcast %207 : vector<8x1xf32> to vector<8x16xf32>
    %209 = arith.mulf %208, %84 : vector<8x16xf32>
    %210 = arith.addf %206, %209 : vector<8x16xf32>
    %211 = vector.extract_strided_slice %90 {offsets = [0, 31], sizes = [8, 1], strides = [1, 1]} : vector<8x81xf32> to vector<8x1xf32>
    %212 = vector.broadcast %211 : vector<8x1xf32> to vector<8x16xf32>
    %213 = arith.mulf %212, %85 : vector<8x16xf32>
    %214 = arith.addf %210, %213 : vector<8x16xf32>
    %215 = vector.extract_strided_slice %90 {offsets = [0, 32], sizes = [8, 1], strides = [1, 1]} : vector<8x81xf32> to vector<8x1xf32>
    %216 = vector.broadcast %215 : vector<8x1xf32> to vector<8x16xf32>
    %217 = arith.mulf %216, %86 : vector<8x16xf32>
    %218 = arith.addf %214, %217 : vector<8x16xf32>
    %219 = vector.extract_strided_slice %90 {offsets = [0, 33], sizes = [8, 1], strides = [1, 1]} : vector<8x81xf32> to vector<8x1xf32>
    %220 = vector.broadcast %219 : vector<8x1xf32> to vector<8x16xf32>
    %221 = arith.mulf %220, %87 : vector<8x16xf32>
    %222 = arith.addf %218, %221 : vector<8x16xf32>
    %223 = vector.extract_strided_slice %90 {offsets = [0, 34], sizes = [8, 1], strides = [1, 1]} : vector<8x81xf32> to vector<8x1xf32>
    %224 = vector.broadcast %223 : vector<8x1xf32> to vector<8x16xf32>
    %225 = arith.mulf %224, %88 : vector<8x16xf32>
    %226 = arith.addf %222, %225 : vector<8x16xf32>
    %227 = vector.extract_strided_slice %90 {offsets = [0, 35], sizes = [8, 1], strides = [1, 1]} : vector<8x81xf32> to vector<8x1xf32>
    %228 = vector.broadcast %227 : vector<8x1xf32> to vector<8x16xf32>
    %229 = arith.mulf %228, %89 : vector<8x16xf32>
    %230 = arith.addf %226, %229 : vector<8x16xf32>
    %231 = vector.extract_strided_slice %90 {offsets = [0, 36], sizes = [8, 1], strides = [1, 1]} : vector<8x81xf32> to vector<8x1xf32>
    %232 = vector.broadcast %231 : vector<8x1xf32> to vector<8x16xf32>
    %233 = arith.mulf %232, %81 : vector<8x16xf32>
    %234 = vector.extract_strided_slice %90 {offsets = [0, 37], sizes = [8, 1], strides = [1, 1]} : vector<8x81xf32> to vector<8x1xf32>
    %235 = vector.broadcast %234 : vector<8x1xf32> to vector<8x16xf32>
    %236 = arith.mulf %235, %82 : vector<8x16xf32>
    %237 = arith.addf %233, %236 : vector<8x16xf32>
    %238 = vector.extract_strided_slice %90 {offsets = [0, 38], sizes = [8, 1], strides = [1, 1]} : vector<8x81xf32> to vector<8x1xf32>
    %239 = vector.broadcast %238 : vector<8x1xf32> to vector<8x16xf32>
    %240 = arith.mulf %239, %83 : vector<8x16xf32>
    %241 = arith.addf %237, %240 : vector<8x16xf32>
    %242 = vector.extract_strided_slice %90 {offsets = [0, 39], sizes = [8, 1], strides = [1, 1]} : vector<8x81xf32> to vector<8x1xf32>
    %243 = vector.broadcast %242 : vector<8x1xf32> to vector<8x16xf32>
    %244 = arith.mulf %243, %84 : vector<8x16xf32>
    %245 = arith.addf %241, %244 : vector<8x16xf32>
    %246 = vector.extract_strided_slice %90 {offsets = [0, 40], sizes = [8, 1], strides = [1, 1]} : vector<8x81xf32> to vector<8x1xf32>
    %247 = vector.broadcast %246 : vector<8x1xf32> to vector<8x16xf32>
    %248 = arith.mulf %247, %85 : vector<8x16xf32>
    %249 = arith.addf %245, %248 : vector<8x16xf32>
    %250 = vector.extract_strided_slice %90 {offsets = [0, 41], sizes = [8, 1], strides = [1, 1]} : vector<8x81xf32> to vector<8x1xf32>
    %251 = vector.broadcast %250 : vector<8x1xf32> to vector<8x16xf32>
    %252 = arith.mulf %251, %86 : vector<8x16xf32>
    %253 = arith.addf %249, %252 : vector<8x16xf32>
    %254 = vector.extract_strided_slice %90 {offsets = [0, 42], sizes = [8, 1], strides = [1, 1]} : vector<8x81xf32> to vector<8x1xf32>
    %255 = vector.broadcast %254 : vector<8x1xf32> to vector<8x16xf32>
    %256 = arith.mulf %255, %87 : vector<8x16xf32>
    %257 = arith.addf %253, %256 : vector<8x16xf32>
    %258 = vector.extract_strided_slice %90 {offsets = [0, 43], sizes = [8, 1], strides = [1, 1]} : vector<8x81xf32> to vector<8x1xf32>
    %259 = vector.broadcast %258 : vector<8x1xf32> to vector<8x16xf32>
    %260 = arith.mulf %259, %88 : vector<8x16xf32>
    %261 = arith.addf %257, %260 : vector<8x16xf32>
    %262 = vector.extract_strided_slice %90 {offsets = [0, 44], sizes = [8, 1], strides = [1, 1]} : vector<8x81xf32> to vector<8x1xf32>
    %263 = vector.broadcast %262 : vector<8x1xf32> to vector<8x16xf32>
    %264 = arith.mulf %263, %89 : vector<8x16xf32>
    %265 = arith.addf %261, %264 : vector<8x16xf32>
    %266 = vector.extract_strided_slice %90 {offsets = [0, 45], sizes = [8, 1], strides = [1, 1]} : vector<8x81xf32> to vector<8x1xf32>
    %267 = vector.broadcast %266 : vector<8x1xf32> to vector<8x16xf32>
    %268 = arith.mulf %267, %81 : vector<8x16xf32>
    %269 = vector.extract_strided_slice %90 {offsets = [0, 46], sizes = [8, 1], strides = [1, 1]} : vector<8x81xf32> to vector<8x1xf32>
    %270 = vector.broadcast %269 : vector<8x1xf32> to vector<8x16xf32>
    %271 = arith.mulf %270, %82 : vector<8x16xf32>
    %272 = arith.addf %268, %271 : vector<8x16xf32>
    %273 = vector.extract_strided_slice %90 {offsets = [0, 47], sizes = [8, 1], strides = [1, 1]} : vector<8x81xf32> to vector<8x1xf32>
    %274 = vector.broadcast %273 : vector<8x1xf32> to vector<8x16xf32>
    %275 = arith.mulf %274, %83 : vector<8x16xf32>
    %276 = arith.addf %272, %275 : vector<8x16xf32>
    %277 = vector.extract_strided_slice %90 {offsets = [0, 48], sizes = [8, 1], strides = [1, 1]} : vector<8x81xf32> to vector<8x1xf32>
    %278 = vector.broadcast %277 : vector<8x1xf32> to vector<8x16xf32>
    %279 = arith.mulf %278, %84 : vector<8x16xf32>
    %280 = arith.addf %276, %279 : vector<8x16xf32>
    %281 = vector.extract_strided_slice %90 {offsets = [0, 49], sizes = [8, 1], strides = [1, 1]} : vector<8x81xf32> to vector<8x1xf32>
    %282 = vector.broadcast %281 : vector<8x1xf32> to vector<8x16xf32>
    %283 = arith.mulf %282, %85 : vector<8x16xf32>
    %284 = arith.addf %280, %283 : vector<8x16xf32>
    %285 = vector.extract_strided_slice %90 {offsets = [0, 50], sizes = [8, 1], strides = [1, 1]} : vector<8x81xf32> to vector<8x1xf32>
    %286 = vector.broadcast %285 : vector<8x1xf32> to vector<8x16xf32>
    %287 = arith.mulf %286, %86 : vector<8x16xf32>
    %288 = arith.addf %284, %287 : vector<8x16xf32>
    %289 = vector.extract_strided_slice %90 {offsets = [0, 51], sizes = [8, 1], strides = [1, 1]} : vector<8x81xf32> to vector<8x1xf32>
    %290 = vector.broadcast %289 : vector<8x1xf32> to vector<8x16xf32>
    %291 = arith.mulf %290, %87 : vector<8x16xf32>
    %292 = arith.addf %288, %291 : vector<8x16xf32>
    %293 = vector.extract_strided_slice %90 {offsets = [0, 52], sizes = [8, 1], strides = [1, 1]} : vector<8x81xf32> to vector<8x1xf32>
    %294 = vector.broadcast %293 : vector<8x1xf32> to vector<8x16xf32>
    %295 = arith.mulf %294, %88 : vector<8x16xf32>
    %296 = arith.addf %292, %295 : vector<8x16xf32>
    %297 = vector.extract_strided_slice %90 {offsets = [0, 53], sizes = [8, 1], strides = [1, 1]} : vector<8x81xf32> to vector<8x1xf32>
    %298 = vector.broadcast %297 : vector<8x1xf32> to vector<8x16xf32>
    %299 = arith.mulf %298, %89 : vector<8x16xf32>
    %300 = arith.addf %296, %299 : vector<8x16xf32>
    %301 = vector.extract_strided_slice %90 {offsets = [0, 54], sizes = [8, 1], strides = [1, 1]} : vector<8x81xf32> to vector<8x1xf32>
    %302 = vector.broadcast %301 : vector<8x1xf32> to vector<8x16xf32>
    %303 = arith.mulf %302, %81 : vector<8x16xf32>
    %304 = vector.extract_strided_slice %90 {offsets = [0, 55], sizes = [8, 1], strides = [1, 1]} : vector<8x81xf32> to vector<8x1xf32>
    %305 = vector.broadcast %304 : vector<8x1xf32> to vector<8x16xf32>
    %306 = arith.mulf %305, %82 : vector<8x16xf32>
    %307 = arith.addf %303, %306 : vector<8x16xf32>
    %308 = vector.extract_strided_slice %90 {offsets = [0, 56], sizes = [8, 1], strides = [1, 1]} : vector<8x81xf32> to vector<8x1xf32>
    %309 = vector.broadcast %308 : vector<8x1xf32> to vector<8x16xf32>
    %310 = arith.mulf %309, %83 : vector<8x16xf32>
    %311 = arith.addf %307, %310 : vector<8x16xf32>
    %312 = vector.extract_strided_slice %90 {offsets = [0, 57], sizes = [8, 1], strides = [1, 1]} : vector<8x81xf32> to vector<8x1xf32>
    %313 = vector.broadcast %312 : vector<8x1xf32> to vector<8x16xf32>
    %314 = arith.mulf %313, %84 : vector<8x16xf32>
    %315 = arith.addf %311, %314 : vector<8x16xf32>
    %316 = vector.extract_strided_slice %90 {offsets = [0, 58], sizes = [8, 1], strides = [1, 1]} : vector<8x81xf32> to vector<8x1xf32>
    %317 = vector.broadcast %316 : vector<8x1xf32> to vector<8x16xf32>
    %318 = arith.mulf %317, %85 : vector<8x16xf32>
    %319 = arith.addf %315, %318 : vector<8x16xf32>
    %320 = vector.extract_strided_slice %90 {offsets = [0, 59], sizes = [8, 1], strides = [1, 1]} : vector<8x81xf32> to vector<8x1xf32>
    %321 = vector.broadcast %320 : vector<8x1xf32> to vector<8x16xf32>
    %322 = arith.mulf %321, %86 : vector<8x16xf32>
    %323 = arith.addf %319, %322 : vector<8x16xf32>
    %324 = vector.extract_strided_slice %90 {offsets = [0, 60], sizes = [8, 1], strides = [1, 1]} : vector<8x81xf32> to vector<8x1xf32>
    %325 = vector.broadcast %324 : vector<8x1xf32> to vector<8x16xf32>
    %326 = arith.mulf %325, %87 : vector<8x16xf32>
    %327 = arith.addf %323, %326 : vector<8x16xf32>
    %328 = vector.extract_strided_slice %90 {offsets = [0, 61], sizes = [8, 1], strides = [1, 1]} : vector<8x81xf32> to vector<8x1xf32>
    %329 = vector.broadcast %328 : vector<8x1xf32> to vector<8x16xf32>
    %330 = arith.mulf %329, %88 : vector<8x16xf32>
    %331 = arith.addf %327, %330 : vector<8x16xf32>
    %332 = vector.extract_strided_slice %90 {offsets = [0, 62], sizes = [8, 1], strides = [1, 1]} : vector<8x81xf32> to vector<8x1xf32>
    %333 = vector.broadcast %332 : vector<8x1xf32> to vector<8x16xf32>
    %334 = arith.mulf %333, %89 : vector<8x16xf32>
    %335 = arith.addf %331, %334 : vector<8x16xf32>
    %336 = vector.extract_strided_slice %90 {offsets = [0, 63], sizes = [8, 1], strides = [1, 1]} : vector<8x81xf32> to vector<8x1xf32>
    %337 = vector.broadcast %336 : vector<8x1xf32> to vector<8x16xf32>
    %338 = arith.mulf %337, %81 : vector<8x16xf32>
    %339 = vector.extract_strided_slice %90 {offsets = [0, 64], sizes = [8, 1], strides = [1, 1]} : vector<8x81xf32> to vector<8x1xf32>
    %340 = vector.broadcast %339 : vector<8x1xf32> to vector<8x16xf32>
    %341 = arith.mulf %340, %82 : vector<8x16xf32>
    %342 = arith.addf %338, %341 : vector<8x16xf32>
    %343 = vector.extract_strided_slice %90 {offsets = [0, 65], sizes = [8, 1], strides = [1, 1]} : vector<8x81xf32> to vector<8x1xf32>
    %344 = vector.broadcast %343 : vector<8x1xf32> to vector<8x16xf32>
    %345 = arith.mulf %344, %83 : vector<8x16xf32>
    %346 = arith.addf %342, %345 : vector<8x16xf32>
    %347 = vector.extract_strided_slice %90 {offsets = [0, 66], sizes = [8, 1], strides = [1, 1]} : vector<8x81xf32> to vector<8x1xf32>
    %348 = vector.broadcast %347 : vector<8x1xf32> to vector<8x16xf32>
    %349 = arith.mulf %348, %84 : vector<8x16xf32>
    %350 = arith.addf %346, %349 : vector<8x16xf32>
    %351 = vector.extract_strided_slice %90 {offsets = [0, 67], sizes = [8, 1], strides = [1, 1]} : vector<8x81xf32> to vector<8x1xf32>
    %352 = vector.broadcast %351 : vector<8x1xf32> to vector<8x16xf32>
    %353 = arith.mulf %352, %85 : vector<8x16xf32>
    %354 = arith.addf %350, %353 : vector<8x16xf32>
    %355 = vector.extract_strided_slice %90 {offsets = [0, 68], sizes = [8, 1], strides = [1, 1]} : vector<8x81xf32> to vector<8x1xf32>
    %356 = vector.broadcast %355 : vector<8x1xf32> to vector<8x16xf32>
    %357 = arith.mulf %356, %86 : vector<8x16xf32>
    %358 = arith.addf %354, %357 : vector<8x16xf32>
    %359 = vector.extract_strided_slice %90 {offsets = [0, 69], sizes = [8, 1], strides = [1, 1]} : vector<8x81xf32> to vector<8x1xf32>
    %360 = vector.broadcast %359 : vector<8x1xf32> to vector<8x16xf32>
    %361 = arith.mulf %360, %87 : vector<8x16xf32>
    %362 = arith.addf %358, %361 : vector<8x16xf32>
    %363 = vector.extract_strided_slice %90 {offsets = [0, 70], sizes = [8, 1], strides = [1, 1]} : vector<8x81xf32> to vector<8x1xf32>
    %364 = vector.broadcast %363 : vector<8x1xf32> to vector<8x16xf32>
    %365 = arith.mulf %364, %88 : vector<8x16xf32>
    %366 = arith.addf %362, %365 : vector<8x16xf32>
    %367 = vector.extract_strided_slice %90 {offsets = [0, 71], sizes = [8, 1], strides = [1, 1]} : vector<8x81xf32> to vector<8x1xf32>
    %368 = vector.broadcast %367 : vector<8x1xf32> to vector<8x16xf32>
    %369 = arith.mulf %368, %89 : vector<8x16xf32>
    %370 = arith.addf %366, %369 : vector<8x16xf32>
    %371 = vector.extract_strided_slice %90 {offsets = [0, 72], sizes = [8, 1], strides = [1, 1]} : vector<8x81xf32> to vector<8x1xf32>
    %372 = vector.broadcast %371 : vector<8x1xf32> to vector<8x16xf32>
    %373 = arith.mulf %372, %81 : vector<8x16xf32>
    %374 = vector.extract_strided_slice %90 {offsets = [0, 73], sizes = [8, 1], strides = [1, 1]} : vector<8x81xf32> to vector<8x1xf32>
    %375 = vector.broadcast %374 : vector<8x1xf32> to vector<8x16xf32>
    %376 = arith.mulf %375, %82 : vector<8x16xf32>
    %377 = arith.addf %373, %376 : vector<8x16xf32>
    %378 = vector.extract_strided_slice %90 {offsets = [0, 74], sizes = [8, 1], strides = [1, 1]} : vector<8x81xf32> to vector<8x1xf32>
    %379 = vector.broadcast %378 : vector<8x1xf32> to vector<8x16xf32>
    %380 = arith.mulf %379, %83 : vector<8x16xf32>
    %381 = arith.addf %377, %380 : vector<8x16xf32>
    %382 = vector.extract_strided_slice %90 {offsets = [0, 75], sizes = [8, 1], strides = [1, 1]} : vector<8x81xf32> to vector<8x1xf32>
    %383 = vector.broadcast %382 : vector<8x1xf32> to vector<8x16xf32>
    %384 = arith.mulf %383, %84 : vector<8x16xf32>
    %385 = arith.addf %381, %384 : vector<8x16xf32>
    %386 = vector.extract_strided_slice %90 {offsets = [0, 76], sizes = [8, 1], strides = [1, 1]} : vector<8x81xf32> to vector<8x1xf32>
    %387 = vector.broadcast %386 : vector<8x1xf32> to vector<8x16xf32>
    %388 = arith.mulf %387, %85 : vector<8x16xf32>
    %389 = arith.addf %385, %388 : vector<8x16xf32>
    %390 = vector.extract_strided_slice %90 {offsets = [0, 77], sizes = [8, 1], strides = [1, 1]} : vector<8x81xf32> to vector<8x1xf32>
    %391 = vector.broadcast %390 : vector<8x1xf32> to vector<8x16xf32>
    %392 = arith.mulf %391, %86 : vector<8x16xf32>
    %393 = arith.addf %389, %392 : vector<8x16xf32>
    %394 = vector.extract_strided_slice %90 {offsets = [0, 78], sizes = [8, 1], strides = [1, 1]} : vector<8x81xf32> to vector<8x1xf32>
    %395 = vector.broadcast %394 : vector<8x1xf32> to vector<8x16xf32>
    %396 = arith.mulf %395, %87 : vector<8x16xf32>
    %397 = arith.addf %393, %396 : vector<8x16xf32>
    %398 = vector.extract_strided_slice %90 {offsets = [0, 79], sizes = [8, 1], strides = [1, 1]} : vector<8x81xf32> to vector<8x1xf32>
    %399 = vector.broadcast %398 : vector<8x1xf32> to vector<8x16xf32>
    %400 = arith.mulf %399, %88 : vector<8x16xf32>
    %401 = arith.addf %397, %400 : vector<8x16xf32>
    %402 = vector.extract_strided_slice %90 {offsets = [0, 80], sizes = [8, 1], strides = [1, 1]} : vector<8x81xf32> to vector<8x1xf32>
    %403 = vector.broadcast %402 : vector<8x1xf32> to vector<8x16xf32>
    %404 = arith.mulf %403, %89 : vector<8x16xf32>
    %405 = arith.addf %401, %404 : vector<8x16xf32>
    %c0_41 = arith.constant 0 : index
    %c0_42 = arith.constant 0 : index
    %406 = vector.load %arg15[%c0_41, %c0_42] : memref<48x40xf32, #tpu.memory_space<vmem>>, vector<48x40xf32>
    %c0_43 = arith.constant 0 : index
    %c0_44 = arith.constant 0 : index
    %407 = vector.load %arg17[%c0_43, %c0_44] : memref<32x32xf32, #tpu.memory_space<vmem>>, vector<32x32xf32>
    %c0_45 = arith.constant 0 : index
    %c0_46 = arith.constant 0 : index
    %408 = vector.load %arg18[%c0_45, %c0_46] : memref<16x16xf32, #tpu.memory_space<vmem>>, vector<16x16xf32>
    %c0_47 = arith.constant 0 : index
    %c0_48 = arith.constant 0 : index
    %409 = vector.load %arg16[%c0_47, %c0_48] : memref<1x40xf32, #tpu.memory_space<vmem>>, vector<1x40xf32>
    %410 = tpu.concatenate %125, %195, %335 in 1 : vector<8x16xf32>, vector<8x16xf32>, vector<8x16xf32> -> vector<8x48xf32>
    %411 = vector.extract_strided_slice %79 {offsets = [0, 0], sizes = [8, 48], strides = [1, 1]} : vector<8x96xf32> to vector<8x48xf32>
    %412 = arith.mulf %410, %411 : vector<8x48xf32>
    %cst_49 = arith.constant dense<0.000000e+00> : vector<8x40xf32>
    %413 = tpu.matmul %412, %406, %cst_49 {dimension_numbers = #tpu.dot_dimension_numbers<[1], [0], [0], [1], [0, 0, 1, 1], [], []>} : vector<8x48xf32>, vector<48x40xf32>, vector<8x40xf32> -> vector<8x40xf32>
    %414 = vector.broadcast %409 : vector<1x40xf32> to vector<8x40xf32>
    %415 = arith.addf %413, %414 : vector<8x40xf32>
    %416 = vector.extract_strided_slice %415 {offsets = [0, 0], sizes = [8, 16], strides = [1, 1]} : vector<8x40xf32> to vector<8x16xf32>
    %417 = vector.extract_strided_slice %415 {offsets = [0, 16], sizes = [8, 24], strides = [1, 1]} : vector<8x40xf32> to vector<8x24xf32>
    %418 = vector.extract_strided_slice %417 {offsets = [0, 0], sizes = [8, 8], strides = [1, 1]} : vector<8x24xf32> to vector<8x8xf32>
    %419 = vector.extract_strided_slice %417 {offsets = [0, 8], sizes = [8, 8], strides = [1, 1]} : vector<8x24xf32> to vector<8x8xf32>
    %420 = vector.extract_strided_slice %417 {offsets = [0, 16], sizes = [8, 8], strides = [1, 1]} : vector<8x24xf32> to vector<8x8xf32>
    %421 = tpu.concatenate %230, %370 in 1 : vector<8x16xf32>, vector<8x16xf32> -> vector<8x32xf32>
    %422 = tpu.concatenate %160, %300 in 1 : vector<8x16xf32>, vector<8x16xf32> -> vector<8x32xf32>
    %423 = vector.extract_strided_slice %79 {offsets = [0, 48], sizes = [8, 32], strides = [1, 1]} : vector<8x96xf32> to vector<8x32xf32>
    %424 = arith.mulf %421, %423 : vector<8x32xf32>
    %425 = arith.mulf %422, %423 : vector<8x32xf32>
    %cst_50 = arith.constant dense<0.000000e+00> : vector<8x32xf32>
    %426 = tpu.matmul %424, %407, %cst_50 {dimension_numbers = #tpu.dot_dimension_numbers<[1], [0], [0], [1], [0, 0, 1, 1], [], []>} : vector<8x32xf32>, vector<32x32xf32>, vector<8x32xf32> -> vector<8x32xf32>
    %cst_51 = arith.constant dense<0.000000e+00> : vector<8x32xf32>
    %427 = tpu.matmul %425, %407, %cst_51 {dimension_numbers = #tpu.dot_dimension_numbers<[1], [0], [0], [1], [0, 0, 1, 1], [], []>} : vector<8x32xf32>, vector<32x32xf32>, vector<8x32xf32> -> vector<8x32xf32>
    %428 = vector.extract_strided_slice %426 {offsets = [0, 0], sizes = [8, 16], strides = [1, 1]} : vector<8x32xf32> to vector<8x16xf32>
    %429 = vector.extract_strided_slice %427 {offsets = [0, 16], sizes = [8, 16], strides = [1, 1]} : vector<8x32xf32> to vector<8x16xf32>
    %430 = arith.subf %428, %429 : vector<8x16xf32>
    %431 = vector.extract_strided_slice %426 {offsets = [0, 16], sizes = [8, 16], strides = [1, 1]} : vector<8x32xf32> to vector<8x16xf32>
    %432 = vector.extract_strided_slice %427 {offsets = [0, 0], sizes = [8, 16], strides = [1, 1]} : vector<8x32xf32> to vector<8x16xf32>
    %433 = arith.addf %431, %432 : vector<8x16xf32>
    %434 = vector.extract_strided_slice %430 {offsets = [0, 0], sizes = [8, 8], strides = [1, 1]} : vector<8x16xf32> to vector<8x8xf32>
    %435 = vector.extract_strided_slice %430 {offsets = [0, 8], sizes = [8, 8], strides = [1, 1]} : vector<8x16xf32> to vector<8x8xf32>
    %436 = vector.extract_strided_slice %433 {offsets = [0, 0], sizes = [8, 8], strides = [1, 1]} : vector<8x16xf32> to vector<8x8xf32>
    %437 = vector.extract_strided_slice %433 {offsets = [0, 8], sizes = [8, 8], strides = [1, 1]} : vector<8x16xf32> to vector<8x8xf32>
    %438 = vector.extract_strided_slice %79 {offsets = [0, 80], sizes = [8, 16], strides = [1, 1]} : vector<8x96xf32> to vector<8x16xf32>
    %439 = arith.mulf %405, %438 : vector<8x16xf32>
    %440 = arith.mulf %265, %438 : vector<8x16xf32>
    %cst_52 = arith.constant dense<0.000000e+00> : vector<8x16xf32>
    %441 = tpu.matmul %439, %408, %cst_52 {dimension_numbers = #tpu.dot_dimension_numbers<[1], [0], [0], [1], [0, 0, 1, 1], [], []>} : vector<8x16xf32>, vector<16x16xf32>, vector<8x16xf32> -> vector<8x16xf32>
    %cst_53 = arith.constant dense<0.000000e+00> : vector<8x16xf32>
    %442 = tpu.matmul %440, %408, %cst_53 {dimension_numbers = #tpu.dot_dimension_numbers<[1], [0], [0], [1], [0, 0, 1, 1], [], []>} : vector<8x16xf32>, vector<16x16xf32>, vector<8x16xf32> -> vector<8x16xf32>
    %443 = vector.extract_strided_slice %441 {offsets = [0, 0], sizes = [8, 8], strides = [1, 1]} : vector<8x16xf32> to vector<8x8xf32>
    %444 = vector.extract_strided_slice %442 {offsets = [0, 8], sizes = [8, 8], strides = [1, 1]} : vector<8x16xf32> to vector<8x8xf32>
    %445 = arith.subf %443, %444 : vector<8x8xf32>
    %446 = vector.extract_strided_slice %441 {offsets = [0, 8], sizes = [8, 8], strides = [1, 1]} : vector<8x16xf32> to vector<8x8xf32>
    %447 = vector.extract_strided_slice %442 {offsets = [0, 0], sizes = [8, 8], strides = [1, 1]} : vector<8x16xf32> to vector<8x8xf32>
    %448 = arith.addf %446, %447 : vector<8x8xf32>
    %449 = vector.extract_strided_slice %416 {offsets = [0, 0], sizes = [8, 8], strides = [1, 1]} : vector<8x16xf32> to vector<8x8xf32>
    %450 = vector.extract_strided_slice %416 {offsets = [0, 8], sizes = [8, 8], strides = [1, 1]} : vector<8x16xf32> to vector<8x8xf32>
    %c0_54 = arith.constant 0 : index
    %c0_55 = arith.constant 0 : index
    %451 = vector.load %arg19[%c0_54, %c0_55] : memref<72x240xf32, #tpu.memory_space<vmem>>, vector<72x240xf32>
    %c0_56 = arith.constant 0 : index
    %c0_57 = arith.constant 0 : index
    %452 = vector.load %arg20[%c0_56, %c0_57] : memref<240x72xf32, #tpu.memory_space<vmem>>, vector<240x72xf32>
    %453 = tpu.concatenate %418, %436, %419, %434, %448, %437, %420, %435, %445 in 1 : vector<8x8xf32>, vector<8x8xf32>, vector<8x8xf32>, vector<8x8xf32>, vector<8x8xf32>, vector<8x8xf32>, vector<8x8xf32>, vector<8x8xf32>, vector<8x8xf32> -> vector<8x72xf32>
    %cst_58 = arith.constant dense<0.000000e+00> : vector<8x240xf32>
    %454 = tpu.matmul %453, %451, %cst_58 {dimension_numbers = #tpu.dot_dimension_numbers<[1], [0], [0], [1], [0, 0, 1, 1], [], []>} : vector<8x72xf32>, vector<72x240xf32>, vector<8x240xf32> -> vector<8x240xf32>
    %455 = arith.negf %454 : vector<8x240xf32>
    %456 = math.exp %455 : vector<8x240xf32>
    %cst_59 = arith.constant 1.000000e+00 : f32
    %457 = vector.broadcast %cst_59 : f32 to vector<8x240xf32>
    %458 = arith.addf %457, %456 : vector<8x240xf32>
    %459 = arith.divf %457, %458 : vector<8x240xf32>
    %460 = arith.mulf %454, %459 : vector<8x240xf32>
    %cst_60 = arith.constant 1.66666663 : f32
    %461 = vector.broadcast %cst_60 : f32 to vector<8x240xf32>
    %462 = arith.mulf %460, %461 : vector<8x240xf32>
    %cst_61 = arith.constant dense<0.000000e+00> : vector<8x72xf32>
    %463 = tpu.matmul %462, %452, %cst_61 {dimension_numbers = #tpu.dot_dimension_numbers<[1], [0], [0], [1], [0, 0, 1, 1], [], []>} : vector<8x240xf32>, vector<240x72xf32>, vector<8x72xf32> -> vector<8x72xf32>
    %464 = arith.negf %450 : vector<8x8xf32>
    %465 = math.exp %464 : vector<8x8xf32>
    %cst_62 = arith.constant 1.000000e+00 : f32
    %466 = vector.broadcast %cst_62 : f32 to vector<8x8xf32>
    %467 = arith.addf %466, %465 : vector<8x8xf32>
    %468 = arith.divf %466, %467 : vector<8x8xf32>
    %469 = arith.mulf %450, %468 : vector<8x8xf32>
    %cst_63 = arith.constant 1.66666663 : f32
    %470 = vector.broadcast %cst_63 : f32 to vector<8x8xf32>
    %471 = arith.mulf %469, %470 : vector<8x8xf32>
    %472 = vector.extract_strided_slice %463 {offsets = [0, 8], sizes = [8, 8], strides = [1, 1]} : vector<8x72xf32> to vector<8x8xf32>
    %473 = vector.extract_strided_slice %463 {offsets = [0, 16], sizes = [8, 8], strides = [1, 1]} : vector<8x72xf32> to vector<8x8xf32>
    %474 = vector.extract_strided_slice %463 {offsets = [0, 24], sizes = [8, 8], strides = [1, 1]} : vector<8x72xf32> to vector<8x8xf32>
    %475 = vector.extract_strided_slice %463 {offsets = [0, 32], sizes = [8, 8], strides = [1, 1]} : vector<8x72xf32> to vector<8x8xf32>
    %476 = vector.extract_strided_slice %463 {offsets = [0, 40], sizes = [8, 8], strides = [1, 1]} : vector<8x72xf32> to vector<8x8xf32>
    %477 = vector.extract_strided_slice %463 {offsets = [0, 48], sizes = [8, 8], strides = [1, 1]} : vector<8x72xf32> to vector<8x8xf32>
    %478 = vector.extract_strided_slice %463 {offsets = [0, 56], sizes = [8, 8], strides = [1, 1]} : vector<8x72xf32> to vector<8x8xf32>
    %479 = vector.extract_strided_slice %463 {offsets = [0, 64], sizes = [8, 8], strides = [1, 1]} : vector<8x72xf32> to vector<8x8xf32>
    %c0_64 = arith.constant 0 : index
    %c0_65 = arith.constant 0 : index
    %480 = vector.load %arg21[%c0_64, %c0_65] : memref<24x24xf32, #tpu.memory_space<vmem>>, vector<24x24xf32>
    %c0_66 = arith.constant 0 : index
    %c0_67 = arith.constant 0 : index
    %481 = vector.load %arg23[%c0_66, %c0_67] : memref<16x32xf32, #tpu.memory_space<vmem>>, vector<16x32xf32>
    %c0_68 = arith.constant 0 : index
    %c0_69 = arith.constant 0 : index
    %482 = vector.load %arg24[%c0_68, %c0_69] : memref<8x16xf32, #tpu.memory_space<vmem>>, vector<8x16xf32>
    %c0_70 = arith.constant 0 : index
    %c0_71 = arith.constant 0 : index
    %483 = vector.load %arg22[%c0_70, %c0_71] : memref<1x24xf32, #tpu.memory_space<vmem>>, vector<1x24xf32>
    %484 = tpu.concatenate %471, %473, %477 in 1 : vector<8x8xf32>, vector<8x8xf32>, vector<8x8xf32> -> vector<8x24xf32>
    %cst_72 = arith.constant dense<0.000000e+00> : vector<8x24xf32>
    %485 = tpu.matmul %484, %480, %cst_72 {dimension_numbers = #tpu.dot_dimension_numbers<[1], [0], [0], [1], [0, 0, 1, 1], [], []>} : vector<8x24xf32>, vector<24x24xf32>, vector<8x24xf32> -> vector<8x24xf32>
    %486 = vector.broadcast %483 : vector<1x24xf32> to vector<8x24xf32>
    %487 = arith.addf %485, %486 : vector<8x24xf32>
    %488 = vector.extract_strided_slice %487 {offsets = [0, 0], sizes = [8, 8], strides = [1, 1]} : vector<8x24xf32> to vector<8x8xf32>
    %489 = vector.extract_strided_slice %487 {offsets = [0, 8], sizes = [8, 8], strides = [1, 1]} : vector<8x24xf32> to vector<8x8xf32>
    %490 = vector.extract_strided_slice %487 {offsets = [0, 16], sizes = [8, 8], strides = [1, 1]} : vector<8x24xf32> to vector<8x8xf32>
    %491 = tpu.concatenate %474, %478 in 1 : vector<8x8xf32>, vector<8x8xf32> -> vector<8x16xf32>
    %492 = tpu.concatenate %472, %476 in 1 : vector<8x8xf32>, vector<8x8xf32> -> vector<8x16xf32>
    %cst_73 = arith.constant dense<0.000000e+00> : vector<8x32xf32>
    %493 = tpu.matmul %491, %481, %cst_73 {dimension_numbers = #tpu.dot_dimension_numbers<[1], [0], [0], [1], [0, 0, 1, 1], [], []>} : vector<8x16xf32>, vector<16x32xf32>, vector<8x32xf32> -> vector<8x32xf32>
    %cst_74 = arith.constant dense<0.000000e+00> : vector<8x32xf32>
    %494 = tpu.matmul %492, %481, %cst_74 {dimension_numbers = #tpu.dot_dimension_numbers<[1], [0], [0], [1], [0, 0, 1, 1], [], []>} : vector<8x16xf32>, vector<16x32xf32>, vector<8x32xf32> -> vector<8x32xf32>
    %495 = vector.extract_strided_slice %493 {offsets = [0, 0], sizes = [8, 16], strides = [1, 1]} : vector<8x32xf32> to vector<8x16xf32>
    %496 = vector.extract_strided_slice %494 {offsets = [0, 16], sizes = [8, 16], strides = [1, 1]} : vector<8x32xf32> to vector<8x16xf32>
    %497 = arith.subf %495, %496 : vector<8x16xf32>
    %498 = vector.extract_strided_slice %493 {offsets = [0, 16], sizes = [8, 16], strides = [1, 1]} : vector<8x32xf32> to vector<8x16xf32>
    %499 = vector.extract_strided_slice %494 {offsets = [0, 0], sizes = [8, 16], strides = [1, 1]} : vector<8x32xf32> to vector<8x16xf32>
    %500 = arith.addf %498, %499 : vector<8x16xf32>
    %501 = vector.extract_strided_slice %497 {offsets = [0, 0], sizes = [8, 8], strides = [1, 1]} : vector<8x16xf32> to vector<8x8xf32>
    %502 = vector.extract_strided_slice %497 {offsets = [0, 8], sizes = [8, 8], strides = [1, 1]} : vector<8x16xf32> to vector<8x8xf32>
    %503 = vector.extract_strided_slice %500 {offsets = [0, 0], sizes = [8, 8], strides = [1, 1]} : vector<8x16xf32> to vector<8x8xf32>
    %504 = vector.extract_strided_slice %500 {offsets = [0, 8], sizes = [8, 8], strides = [1, 1]} : vector<8x16xf32> to vector<8x8xf32>
    %cst_75 = arith.constant dense<0.000000e+00> : vector<8x16xf32>
    %505 = tpu.matmul %479, %482, %cst_75 {dimension_numbers = #tpu.dot_dimension_numbers<[1], [0], [0], [1], [0, 0, 1, 1], [], []>} : vector<8x8xf32>, vector<8x16xf32>, vector<8x16xf32> -> vector<8x16xf32>
    %cst_76 = arith.constant dense<0.000000e+00> : vector<8x16xf32>
    %506 = tpu.matmul %475, %482, %cst_76 {dimension_numbers = #tpu.dot_dimension_numbers<[1], [0], [0], [1], [0, 0, 1, 1], [], []>} : vector<8x8xf32>, vector<8x16xf32>, vector<8x16xf32> -> vector<8x16xf32>
    %507 = vector.extract_strided_slice %505 {offsets = [0, 0], sizes = [8, 8], strides = [1, 1]} : vector<8x16xf32> to vector<8x8xf32>
    %508 = vector.extract_strided_slice %506 {offsets = [0, 8], sizes = [8, 8], strides = [1, 1]} : vector<8x16xf32> to vector<8x8xf32>
    %509 = arith.subf %507, %508 : vector<8x8xf32>
    %510 = vector.extract_strided_slice %505 {offsets = [0, 8], sizes = [8, 8], strides = [1, 1]} : vector<8x16xf32> to vector<8x8xf32>
    %511 = vector.extract_strided_slice %506 {offsets = [0, 0], sizes = [8, 8], strides = [1, 1]} : vector<8x16xf32> to vector<8x8xf32>
    %512 = arith.addf %510, %511 : vector<8x8xf32>
    %c0_77 = arith.constant 0 : index
    %c0_78 = arith.constant 0 : index
    %513 = vector.load %arg27[%c0_77, %c0_78] : memref<2x4xf32, #tpu.memory_space<vmem>>, vector<2x4xf32>
    %514 = vector.extract_strided_slice %449 {offsets = [0, 0], sizes = [8, 4], strides = [1, 1]} : vector<8x8xf32> to vector<8x4xf32>
    %c0_79 = arith.constant 0 : index
    %c0_80 = arith.constant 0 : index
    %515 = vector.load %arg25[%c0_79, %c0_80] : memref<1x4xf32, #tpu.memory_space<vmem>>, vector<1x4xf32>
    %c0_81 = arith.constant 0 : index
    %c0_82 = arith.constant 0 : index
    %516 = vector.load %arg26[%c0_81, %c0_82] : memref<1x4xf32, #tpu.memory_space<vmem>>, vector<1x4xf32>
    %cst_83 = arith.constant dense<0.000000e+00> : vector<8xf32>
    %517 = vector.multi_reduction <add>, %514, %cst_83 [1] : vector<8x4xf32> to vector<8xf32>
    %518 = vector.shape_cast %517 : vector<8xf32> to vector<8x1xf32>
    %cst_84 = arith.constant 4.000000e+00 : f32
    %519 = vector.broadcast %cst_84 : f32 to vector<8x1xf32>
    %520 = arith.divf %518, %519 : vector<8x1xf32>
    %521 = vector.broadcast %520 : vector<8x1xf32> to vector<8x4xf32>
    %522 = arith.subf %514, %521 : vector<8x4xf32>
    %523 = arith.mulf %522, %522 : vector<8x4xf32>
    %cst_85 = arith.constant dense<0.000000e+00> : vector<8xf32>
    %524 = vector.multi_reduction <add>, %523, %cst_85 [1] : vector<8x4xf32> to vector<8xf32>
    %525 = vector.shape_cast %524 : vector<8xf32> to vector<8x1xf32>
    %cst_86 = arith.constant 4.000000e+00 : f32
    %526 = vector.broadcast %cst_86 : f32 to vector<8x1xf32>
    %527 = arith.divf %525, %526 : vector<8x1xf32>
    %528 = vector.broadcast %520 : vector<8x1xf32> to vector<8x4xf32>
    %529 = arith.subf %514, %528 : vector<8x4xf32>
    %cst_87 = arith.constant 9.99999974E-6 : f32
    %530 = vector.broadcast %cst_87 : f32 to vector<8x1xf32>
    %531 = arith.addf %527, %530 : vector<8x1xf32>
    %532 = math.rsqrt %531 : vector<8x1xf32>
    %533 = vector.broadcast %532 : vector<8x1xf32> to vector<8x4xf32>
    %534 = arith.mulf %529, %533 : vector<8x4xf32>
    %535 = vector.broadcast %515 : vector<1x4xf32> to vector<8x4xf32>
    %536 = arith.mulf %534, %535 : vector<8x4xf32>
    %537 = vector.broadcast %516 : vector<1x4xf32> to vector<8x4xf32>
    %538 = arith.addf %536, %537 : vector<8x4xf32>
    %cst_88 = arith.constant 6.000000e-01 : f32
    %539 = vector.broadcast %cst_88 : f32 to vector<8x4xf32>
    %540 = arith.mulf %539, %538 : vector<8x4xf32>
    %cst_89 = arith.constant 4.000000e-01 : f32
    %541 = vector.broadcast %cst_89 : f32 to vector<8x4xf32>
    %542 = arith.mulf %541, %538 : vector<8x4xf32>
    %543 = arith.negf %538 : vector<8x4xf32>
    %544 = math.exp %543 : vector<8x4xf32>
    %cst_90 = arith.constant 1.000000e+00 : f32
    %545 = vector.broadcast %cst_90 : f32 to vector<8x4xf32>
    %546 = arith.addf %545, %544 : vector<8x4xf32>
    %547 = arith.divf %545, %546 : vector<8x4xf32>
    %cst_91 = arith.constant 2.000000e+00 : f32
    %548 = vector.broadcast %cst_91 : f32 to vector<8x4xf32>
    %549 = arith.mulf %548, %547 : vector<8x4xf32>
    %cst_92 = arith.constant 1.000000e+00 : f32
    %550 = vector.broadcast %cst_92 : f32 to vector<8x4xf32>
    %551 = arith.subf %549, %550 : vector<8x4xf32>
    %552 = arith.mulf %542, %551 : vector<8x4xf32>
    %553 = arith.addf %540, %552 : vector<8x4xf32>
    %554 = vector.extract_strided_slice %513 {offsets = [0, 0], sizes = [1, 4], strides = [1, 1]} : vector<2x4xf32> to vector<1x4xf32>
    %555 = vector.broadcast %554 : vector<1x4xf32> to vector<8x4xf32>
    %556 = arith.mulf %553, %555 : vector<8x4xf32>
    %cst_93 = arith.constant dense<0.000000e+00> : vector<8xf32>
    %557 = vector.multi_reduction <add>, %556, %cst_93 [1] : vector<8x4xf32> to vector<8xf32>
    %558 = vector.shape_cast %557 : vector<8xf32> to vector<8x1xf32>
    %559 = vector.extract_strided_slice %449 {offsets = [0, 4], sizes = [8, 4], strides = [1, 1]} : vector<8x8xf32> to vector<8x4xf32>
    %c0_94 = arith.constant 0 : index
    %c0_95 = arith.constant 0 : index
    %560 = vector.load %arg25[%c0_94, %c0_95] : memref<1x4xf32, #tpu.memory_space<vmem>>, vector<1x4xf32>
    %c0_96 = arith.constant 0 : index
    %c0_97 = arith.constant 0 : index
    %561 = vector.load %arg26[%c0_96, %c0_97] : memref<1x4xf32, #tpu.memory_space<vmem>>, vector<1x4xf32>
    %cst_98 = arith.constant dense<0.000000e+00> : vector<8xf32>
    %562 = vector.multi_reduction <add>, %559, %cst_98 [1] : vector<8x4xf32> to vector<8xf32>
    %563 = vector.shape_cast %562 : vector<8xf32> to vector<8x1xf32>
    %cst_99 = arith.constant 4.000000e+00 : f32
    %564 = vector.broadcast %cst_99 : f32 to vector<8x1xf32>
    %565 = arith.divf %563, %564 : vector<8x1xf32>
    %566 = vector.broadcast %565 : vector<8x1xf32> to vector<8x4xf32>
    %567 = arith.subf %559, %566 : vector<8x4xf32>
    %568 = arith.mulf %567, %567 : vector<8x4xf32>
    %cst_100 = arith.constant dense<0.000000e+00> : vector<8xf32>
    %569 = vector.multi_reduction <add>, %568, %cst_100 [1] : vector<8x4xf32> to vector<8xf32>
    %570 = vector.shape_cast %569 : vector<8xf32> to vector<8x1xf32>
    %cst_101 = arith.constant 4.000000e+00 : f32
    %571 = vector.broadcast %cst_101 : f32 to vector<8x1xf32>
    %572 = arith.divf %570, %571 : vector<8x1xf32>
    %573 = vector.broadcast %565 : vector<8x1xf32> to vector<8x4xf32>
    %574 = arith.subf %559, %573 : vector<8x4xf32>
    %cst_102 = arith.constant 9.99999974E-6 : f32
    %575 = vector.broadcast %cst_102 : f32 to vector<8x1xf32>
    %576 = arith.addf %572, %575 : vector<8x1xf32>
    %577 = math.rsqrt %576 : vector<8x1xf32>
    %578 = vector.broadcast %577 : vector<8x1xf32> to vector<8x4xf32>
    %579 = arith.mulf %574, %578 : vector<8x4xf32>
    %580 = vector.broadcast %560 : vector<1x4xf32> to vector<8x4xf32>
    %581 = arith.mulf %579, %580 : vector<8x4xf32>
    %582 = vector.broadcast %561 : vector<1x4xf32> to vector<8x4xf32>
    %583 = arith.addf %581, %582 : vector<8x4xf32>
    %cst_103 = arith.constant 6.000000e-01 : f32
    %584 = vector.broadcast %cst_103 : f32 to vector<8x4xf32>
    %585 = arith.mulf %584, %583 : vector<8x4xf32>
    %cst_104 = arith.constant 4.000000e-01 : f32
    %586 = vector.broadcast %cst_104 : f32 to vector<8x4xf32>
    %587 = arith.mulf %586, %583 : vector<8x4xf32>
    %588 = arith.negf %583 : vector<8x4xf32>
    %589 = math.exp %588 : vector<8x4xf32>
    %cst_105 = arith.constant 1.000000e+00 : f32
    %590 = vector.broadcast %cst_105 : f32 to vector<8x4xf32>
    %591 = arith.addf %590, %589 : vector<8x4xf32>
    %592 = arith.divf %590, %591 : vector<8x4xf32>
    %cst_106 = arith.constant 2.000000e+00 : f32
    %593 = vector.broadcast %cst_106 : f32 to vector<8x4xf32>
    %594 = arith.mulf %593, %592 : vector<8x4xf32>
    %cst_107 = arith.constant 1.000000e+00 : f32
    %595 = vector.broadcast %cst_107 : f32 to vector<8x4xf32>
    %596 = arith.subf %594, %595 : vector<8x4xf32>
    %597 = arith.mulf %587, %596 : vector<8x4xf32>
    %598 = arith.addf %585, %597 : vector<8x4xf32>
    %599 = vector.extract_strided_slice %513 {offsets = [1, 0], sizes = [1, 4], strides = [1, 1]} : vector<2x4xf32> to vector<1x4xf32>
    %600 = vector.broadcast %599 : vector<1x4xf32> to vector<8x4xf32>
    %601 = arith.mulf %598, %600 : vector<8x4xf32>
    %cst_108 = arith.constant dense<0.000000e+00> : vector<8xf32>
    %602 = vector.multi_reduction <add>, %601, %cst_108 [1] : vector<8x4xf32> to vector<8xf32>
    %603 = vector.shape_cast %602 : vector<8xf32> to vector<8x1xf32>
    %604 = tpu.concatenate %558, %603 in 1 : vector<8x1xf32>, vector<8x1xf32> -> vector<8x2xf32>
    %c0_109 = arith.constant 0 : index
    %c0_110 = arith.constant 0 : index
    %605 = vector.load %arg4[%c0_109, %c0_110] : memref<8x81xf32, #tpu.memory_space<vmem>>, vector<8x81xf32>
    %606 = vector.extract_strided_slice %605 {offsets = [0, 0], sizes = [8, 1], strides = [1, 1]} : vector<8x81xf32> to vector<8x1xf32>
    %607 = vector.broadcast %606 : vector<8x1xf32> to vector<8x8xf32>
    %608 = arith.mulf %607, %488 : vector<8x8xf32>
    %609 = vector.extract_strided_slice %605 {offsets = [0, 1], sizes = [8, 1], strides = [1, 1]} : vector<8x81xf32> to vector<8x1xf32>
    %610 = vector.broadcast %609 : vector<8x1xf32> to vector<8x8xf32>
    %611 = arith.mulf %610, %503 : vector<8x8xf32>
    %612 = arith.addf %608, %611 : vector<8x8xf32>
    %613 = vector.extract_strided_slice %605 {offsets = [0, 2], sizes = [8, 1], strides = [1, 1]} : vector<8x81xf32> to vector<8x1xf32>
    %614 = vector.broadcast %613 : vector<8x1xf32> to vector<8x8xf32>
    %615 = arith.mulf %614, %489 : vector<8x8xf32>
    %616 = arith.addf %612, %615 : vector<8x8xf32>
    %617 = vector.extract_strided_slice %605 {offsets = [0, 3], sizes = [8, 1], strides = [1, 1]} : vector<8x81xf32> to vector<8x1xf32>
    %618 = vector.broadcast %617 : vector<8x1xf32> to vector<8x8xf32>
    %619 = arith.mulf %618, %501 : vector<8x8xf32>
    %620 = arith.addf %616, %619 : vector<8x8xf32>
    %621 = vector.extract_strided_slice %605 {offsets = [0, 4], sizes = [8, 1], strides = [1, 1]} : vector<8x81xf32> to vector<8x1xf32>
    %622 = vector.broadcast %621 : vector<8x1xf32> to vector<8x8xf32>
    %623 = arith.mulf %622, %512 : vector<8x8xf32>
    %624 = arith.addf %620, %623 : vector<8x8xf32>
    %625 = vector.extract_strided_slice %605 {offsets = [0, 5], sizes = [8, 1], strides = [1, 1]} : vector<8x81xf32> to vector<8x1xf32>
    %626 = vector.broadcast %625 : vector<8x1xf32> to vector<8x8xf32>
    %627 = arith.mulf %626, %504 : vector<8x8xf32>
    %628 = arith.addf %624, %627 : vector<8x8xf32>
    %629 = vector.extract_strided_slice %605 {offsets = [0, 6], sizes = [8, 1], strides = [1, 1]} : vector<8x81xf32> to vector<8x1xf32>
    %630 = vector.broadcast %629 : vector<8x1xf32> to vector<8x8xf32>
    %631 = arith.mulf %630, %490 : vector<8x8xf32>
    %632 = arith.addf %628, %631 : vector<8x8xf32>
    %633 = vector.extract_strided_slice %605 {offsets = [0, 7], sizes = [8, 1], strides = [1, 1]} : vector<8x81xf32> to vector<8x1xf32>
    %634 = vector.broadcast %633 : vector<8x1xf32> to vector<8x8xf32>
    %635 = arith.mulf %634, %502 : vector<8x8xf32>
    %636 = arith.addf %632, %635 : vector<8x8xf32>
    %637 = vector.extract_strided_slice %605 {offsets = [0, 8], sizes = [8, 1], strides = [1, 1]} : vector<8x81xf32> to vector<8x1xf32>
    %638 = vector.broadcast %637 : vector<8x1xf32> to vector<8x8xf32>
    %639 = arith.mulf %638, %509 : vector<8x8xf32>
    %640 = arith.addf %636, %639 : vector<8x8xf32>
    %641 = vector.extract_strided_slice %605 {offsets = [0, 9], sizes = [8, 1], strides = [1, 1]} : vector<8x81xf32> to vector<8x1xf32>
    %642 = vector.broadcast %641 : vector<8x1xf32> to vector<8x8xf32>
    %643 = arith.mulf %642, %488 : vector<8x8xf32>
    %644 = vector.extract_strided_slice %605 {offsets = [0, 10], sizes = [8, 1], strides = [1, 1]} : vector<8x81xf32> to vector<8x1xf32>
    %645 = vector.broadcast %644 : vector<8x1xf32> to vector<8x8xf32>
    %646 = arith.mulf %645, %503 : vector<8x8xf32>
    %647 = arith.addf %643, %646 : vector<8x8xf32>
    %648 = vector.extract_strided_slice %605 {offsets = [0, 11], sizes = [8, 1], strides = [1, 1]} : vector<8x81xf32> to vector<8x1xf32>
    %649 = vector.broadcast %648 : vector<8x1xf32> to vector<8x8xf32>
    %650 = arith.mulf %649, %489 : vector<8x8xf32>
    %651 = arith.addf %647, %650 : vector<8x8xf32>
    %652 = vector.extract_strided_slice %605 {offsets = [0, 12], sizes = [8, 1], strides = [1, 1]} : vector<8x81xf32> to vector<8x1xf32>
    %653 = vector.broadcast %652 : vector<8x1xf32> to vector<8x8xf32>
    %654 = arith.mulf %653, %501 : vector<8x8xf32>
    %655 = arith.addf %651, %654 : vector<8x8xf32>
    %656 = vector.extract_strided_slice %605 {offsets = [0, 13], sizes = [8, 1], strides = [1, 1]} : vector<8x81xf32> to vector<8x1xf32>
    %657 = vector.broadcast %656 : vector<8x1xf32> to vector<8x8xf32>
    %658 = arith.mulf %657, %512 : vector<8x8xf32>
    %659 = arith.addf %655, %658 : vector<8x8xf32>
    %660 = vector.extract_strided_slice %605 {offsets = [0, 14], sizes = [8, 1], strides = [1, 1]} : vector<8x81xf32> to vector<8x1xf32>
    %661 = vector.broadcast %660 : vector<8x1xf32> to vector<8x8xf32>
    %662 = arith.mulf %661, %504 : vector<8x8xf32>
    %663 = arith.addf %659, %662 : vector<8x8xf32>
    %664 = vector.extract_strided_slice %605 {offsets = [0, 15], sizes = [8, 1], strides = [1, 1]} : vector<8x81xf32> to vector<8x1xf32>
    %665 = vector.broadcast %664 : vector<8x1xf32> to vector<8x8xf32>
    %666 = arith.mulf %665, %490 : vector<8x8xf32>
    %667 = arith.addf %663, %666 : vector<8x8xf32>
    %668 = vector.extract_strided_slice %605 {offsets = [0, 16], sizes = [8, 1], strides = [1, 1]} : vector<8x81xf32> to vector<8x1xf32>
    %669 = vector.broadcast %668 : vector<8x1xf32> to vector<8x8xf32>
    %670 = arith.mulf %669, %502 : vector<8x8xf32>
    %671 = arith.addf %667, %670 : vector<8x8xf32>
    %672 = vector.extract_strided_slice %605 {offsets = [0, 17], sizes = [8, 1], strides = [1, 1]} : vector<8x81xf32> to vector<8x1xf32>
    %673 = vector.broadcast %672 : vector<8x1xf32> to vector<8x8xf32>
    %674 = arith.mulf %673, %509 : vector<8x8xf32>
    %675 = arith.addf %671, %674 : vector<8x8xf32>
    %676 = vector.extract_strided_slice %605 {offsets = [0, 18], sizes = [8, 1], strides = [1, 1]} : vector<8x81xf32> to vector<8x1xf32>
    %677 = vector.broadcast %676 : vector<8x1xf32> to vector<8x8xf32>
    %678 = arith.mulf %677, %488 : vector<8x8xf32>
    %679 = vector.extract_strided_slice %605 {offsets = [0, 19], sizes = [8, 1], strides = [1, 1]} : vector<8x81xf32> to vector<8x1xf32>
    %680 = vector.broadcast %679 : vector<8x1xf32> to vector<8x8xf32>
    %681 = arith.mulf %680, %503 : vector<8x8xf32>
    %682 = arith.addf %678, %681 : vector<8x8xf32>
    %683 = vector.extract_strided_slice %605 {offsets = [0, 20], sizes = [8, 1], strides = [1, 1]} : vector<8x81xf32> to vector<8x1xf32>
    %684 = vector.broadcast %683 : vector<8x1xf32> to vector<8x8xf32>
    %685 = arith.mulf %684, %489 : vector<8x8xf32>
    %686 = arith.addf %682, %685 : vector<8x8xf32>
    %687 = vector.extract_strided_slice %605 {offsets = [0, 21], sizes = [8, 1], strides = [1, 1]} : vector<8x81xf32> to vector<8x1xf32>
    %688 = vector.broadcast %687 : vector<8x1xf32> to vector<8x8xf32>
    %689 = arith.mulf %688, %501 : vector<8x8xf32>
    %690 = arith.addf %686, %689 : vector<8x8xf32>
    %691 = vector.extract_strided_slice %605 {offsets = [0, 22], sizes = [8, 1], strides = [1, 1]} : vector<8x81xf32> to vector<8x1xf32>
    %692 = vector.broadcast %691 : vector<8x1xf32> to vector<8x8xf32>
    %693 = arith.mulf %692, %512 : vector<8x8xf32>
    %694 = arith.addf %690, %693 : vector<8x8xf32>
    %695 = vector.extract_strided_slice %605 {offsets = [0, 23], sizes = [8, 1], strides = [1, 1]} : vector<8x81xf32> to vector<8x1xf32>
    %696 = vector.broadcast %695 : vector<8x1xf32> to vector<8x8xf32>
    %697 = arith.mulf %696, %504 : vector<8x8xf32>
    %698 = arith.addf %694, %697 : vector<8x8xf32>
    %699 = vector.extract_strided_slice %605 {offsets = [0, 24], sizes = [8, 1], strides = [1, 1]} : vector<8x81xf32> to vector<8x1xf32>
    %700 = vector.broadcast %699 : vector<8x1xf32> to vector<8x8xf32>
    %701 = arith.mulf %700, %490 : vector<8x8xf32>
    %702 = arith.addf %698, %701 : vector<8x8xf32>
    %703 = vector.extract_strided_slice %605 {offsets = [0, 25], sizes = [8, 1], strides = [1, 1]} : vector<8x81xf32> to vector<8x1xf32>
    %704 = vector.broadcast %703 : vector<8x1xf32> to vector<8x8xf32>
    %705 = arith.mulf %704, %502 : vector<8x8xf32>
    %706 = arith.addf %702, %705 : vector<8x8xf32>
    %707 = vector.extract_strided_slice %605 {offsets = [0, 26], sizes = [8, 1], strides = [1, 1]} : vector<8x81xf32> to vector<8x1xf32>
    %708 = vector.broadcast %707 : vector<8x1xf32> to vector<8x8xf32>
    %709 = arith.mulf %708, %509 : vector<8x8xf32>
    %710 = arith.addf %706, %709 : vector<8x8xf32>
    %711 = vector.extract_strided_slice %605 {offsets = [0, 27], sizes = [8, 1], strides = [1, 1]} : vector<8x81xf32> to vector<8x1xf32>
    %712 = vector.broadcast %711 : vector<8x1xf32> to vector<8x8xf32>
    %713 = arith.mulf %712, %488 : vector<8x8xf32>
    %714 = vector.extract_strided_slice %605 {offsets = [0, 28], sizes = [8, 1], strides = [1, 1]} : vector<8x81xf32> to vector<8x1xf32>
    %715 = vector.broadcast %714 : vector<8x1xf32> to vector<8x8xf32>
    %716 = arith.mulf %715, %503 : vector<8x8xf32>
    %717 = arith.addf %713, %716 : vector<8x8xf32>
    %718 = vector.extract_strided_slice %605 {offsets = [0, 29], sizes = [8, 1], strides = [1, 1]} : vector<8x81xf32> to vector<8x1xf32>
    %719 = vector.broadcast %718 : vector<8x1xf32> to vector<8x8xf32>
    %720 = arith.mulf %719, %489 : vector<8x8xf32>
    %721 = arith.addf %717, %720 : vector<8x8xf32>
    %722 = vector.extract_strided_slice %605 {offsets = [0, 30], sizes = [8, 1], strides = [1, 1]} : vector<8x81xf32> to vector<8x1xf32>
    %723 = vector.broadcast %722 : vector<8x1xf32> to vector<8x8xf32>
    %724 = arith.mulf %723, %501 : vector<8x8xf32>
    %725 = arith.addf %721, %724 : vector<8x8xf32>
    %726 = vector.extract_strided_slice %605 {offsets = [0, 31], sizes = [8, 1], strides = [1, 1]} : vector<8x81xf32> to vector<8x1xf32>
    %727 = vector.broadcast %726 : vector<8x1xf32> to vector<8x8xf32>
    %728 = arith.mulf %727, %512 : vector<8x8xf32>
    %729 = arith.addf %725, %728 : vector<8x8xf32>
    %730 = vector.extract_strided_slice %605 {offsets = [0, 32], sizes = [8, 1], strides = [1, 1]} : vector<8x81xf32> to vector<8x1xf32>
    %731 = vector.broadcast %730 : vector<8x1xf32> to vector<8x8xf32>
    %732 = arith.mulf %731, %504 : vector<8x8xf32>
    %733 = arith.addf %729, %732 : vector<8x8xf32>
    %734 = vector.extract_strided_slice %605 {offsets = [0, 33], sizes = [8, 1], strides = [1, 1]} : vector<8x81xf32> to vector<8x1xf32>
    %735 = vector.broadcast %734 : vector<8x1xf32> to vector<8x8xf32>
    %736 = arith.mulf %735, %490 : vector<8x8xf32>
    %737 = arith.addf %733, %736 : vector<8x8xf32>
    %738 = vector.extract_strided_slice %605 {offsets = [0, 34], sizes = [8, 1], strides = [1, 1]} : vector<8x81xf32> to vector<8x1xf32>
    %739 = vector.broadcast %738 : vector<8x1xf32> to vector<8x8xf32>
    %740 = arith.mulf %739, %502 : vector<8x8xf32>
    %741 = arith.addf %737, %740 : vector<8x8xf32>
    %742 = vector.extract_strided_slice %605 {offsets = [0, 35], sizes = [8, 1], strides = [1, 1]} : vector<8x81xf32> to vector<8x1xf32>
    %743 = vector.broadcast %742 : vector<8x1xf32> to vector<8x8xf32>
    %744 = arith.mulf %743, %509 : vector<8x8xf32>
    %745 = arith.addf %741, %744 : vector<8x8xf32>
    %746 = vector.extract_strided_slice %605 {offsets = [0, 36], sizes = [8, 1], strides = [1, 1]} : vector<8x81xf32> to vector<8x1xf32>
    %747 = vector.broadcast %746 : vector<8x1xf32> to vector<8x8xf32>
    %748 = arith.mulf %747, %488 : vector<8x8xf32>
    %749 = vector.extract_strided_slice %605 {offsets = [0, 37], sizes = [8, 1], strides = [1, 1]} : vector<8x81xf32> to vector<8x1xf32>
    %750 = vector.broadcast %749 : vector<8x1xf32> to vector<8x8xf32>
    %751 = arith.mulf %750, %503 : vector<8x8xf32>
    %752 = arith.addf %748, %751 : vector<8x8xf32>
    %753 = vector.extract_strided_slice %605 {offsets = [0, 38], sizes = [8, 1], strides = [1, 1]} : vector<8x81xf32> to vector<8x1xf32>
    %754 = vector.broadcast %753 : vector<8x1xf32> to vector<8x8xf32>
    %755 = arith.mulf %754, %489 : vector<8x8xf32>
    %756 = arith.addf %752, %755 : vector<8x8xf32>
    %757 = vector.extract_strided_slice %605 {offsets = [0, 39], sizes = [8, 1], strides = [1, 1]} : vector<8x81xf32> to vector<8x1xf32>
    %758 = vector.broadcast %757 : vector<8x1xf32> to vector<8x8xf32>
    %759 = arith.mulf %758, %501 : vector<8x8xf32>
    %760 = arith.addf %756, %759 : vector<8x8xf32>
    %761 = vector.extract_strided_slice %605 {offsets = [0, 40], sizes = [8, 1], strides = [1, 1]} : vector<8x81xf32> to vector<8x1xf32>
    %762 = vector.broadcast %761 : vector<8x1xf32> to vector<8x8xf32>
    %763 = arith.mulf %762, %512 : vector<8x8xf32>
    %764 = arith.addf %760, %763 : vector<8x8xf32>
    %765 = vector.extract_strided_slice %605 {offsets = [0, 41], sizes = [8, 1], strides = [1, 1]} : vector<8x81xf32> to vector<8x1xf32>
    %766 = vector.broadcast %765 : vector<8x1xf32> to vector<8x8xf32>
    %767 = arith.mulf %766, %504 : vector<8x8xf32>
    %768 = arith.addf %764, %767 : vector<8x8xf32>
    %769 = vector.extract_strided_slice %605 {offsets = [0, 42], sizes = [8, 1], strides = [1, 1]} : vector<8x81xf32> to vector<8x1xf32>
    %770 = vector.broadcast %769 : vector<8x1xf32> to vector<8x8xf32>
    %771 = arith.mulf %770, %490 : vector<8x8xf32>
    %772 = arith.addf %768, %771 : vector<8x8xf32>
    %773 = vector.extract_strided_slice %605 {offsets = [0, 43], sizes = [8, 1], strides = [1, 1]} : vector<8x81xf32> to vector<8x1xf32>
    %774 = vector.broadcast %773 : vector<8x1xf32> to vector<8x8xf32>
    %775 = arith.mulf %774, %502 : vector<8x8xf32>
    %776 = arith.addf %772, %775 : vector<8x8xf32>
    %777 = vector.extract_strided_slice %605 {offsets = [0, 44], sizes = [8, 1], strides = [1, 1]} : vector<8x81xf32> to vector<8x1xf32>
    %778 = vector.broadcast %777 : vector<8x1xf32> to vector<8x8xf32>
    %779 = arith.mulf %778, %509 : vector<8x8xf32>
    %780 = arith.addf %776, %779 : vector<8x8xf32>
    %781 = vector.extract_strided_slice %605 {offsets = [0, 45], sizes = [8, 1], strides = [1, 1]} : vector<8x81xf32> to vector<8x1xf32>
    %782 = vector.broadcast %781 : vector<8x1xf32> to vector<8x8xf32>
    %783 = arith.mulf %782, %488 : vector<8x8xf32>
    %784 = vector.extract_strided_slice %605 {offsets = [0, 46], sizes = [8, 1], strides = [1, 1]} : vector<8x81xf32> to vector<8x1xf32>
    %785 = vector.broadcast %784 : vector<8x1xf32> to vector<8x8xf32>
    %786 = arith.mulf %785, %503 : vector<8x8xf32>
    %787 = arith.addf %783, %786 : vector<8x8xf32>
    %788 = vector.extract_strided_slice %605 {offsets = [0, 47], sizes = [8, 1], strides = [1, 1]} : vector<8x81xf32> to vector<8x1xf32>
    %789 = vector.broadcast %788 : vector<8x1xf32> to vector<8x8xf32>
    %790 = arith.mulf %789, %489 : vector<8x8xf32>
    %791 = arith.addf %787, %790 : vector<8x8xf32>
    %792 = vector.extract_strided_slice %605 {offsets = [0, 48], sizes = [8, 1], strides = [1, 1]} : vector<8x81xf32> to vector<8x1xf32>
    %793 = vector.broadcast %792 : vector<8x1xf32> to vector<8x8xf32>
    %794 = arith.mulf %793, %501 : vector<8x8xf32>
    %795 = arith.addf %791, %794 : vector<8x8xf32>
    %796 = vector.extract_strided_slice %605 {offsets = [0, 49], sizes = [8, 1], strides = [1, 1]} : vector<8x81xf32> to vector<8x1xf32>
    %797 = vector.broadcast %796 : vector<8x1xf32> to vector<8x8xf32>
    %798 = arith.mulf %797, %512 : vector<8x8xf32>
    %799 = arith.addf %795, %798 : vector<8x8xf32>
    %800 = vector.extract_strided_slice %605 {offsets = [0, 50], sizes = [8, 1], strides = [1, 1]} : vector<8x81xf32> to vector<8x1xf32>
    %801 = vector.broadcast %800 : vector<8x1xf32> to vector<8x8xf32>
    %802 = arith.mulf %801, %504 : vector<8x8xf32>
    %803 = arith.addf %799, %802 : vector<8x8xf32>
    %804 = vector.extract_strided_slice %605 {offsets = [0, 51], sizes = [8, 1], strides = [1, 1]} : vector<8x81xf32> to vector<8x1xf32>
    %805 = vector.broadcast %804 : vector<8x1xf32> to vector<8x8xf32>
    %806 = arith.mulf %805, %490 : vector<8x8xf32>
    %807 = arith.addf %803, %806 : vector<8x8xf32>
    %808 = vector.extract_strided_slice %605 {offsets = [0, 52], sizes = [8, 1], strides = [1, 1]} : vector<8x81xf32> to vector<8x1xf32>
    %809 = vector.broadcast %808 : vector<8x1xf32> to vector<8x8xf32>
    %810 = arith.mulf %809, %502 : vector<8x8xf32>
    %811 = arith.addf %807, %810 : vector<8x8xf32>
    %812 = vector.extract_strided_slice %605 {offsets = [0, 53], sizes = [8, 1], strides = [1, 1]} : vector<8x81xf32> to vector<8x1xf32>
    %813 = vector.broadcast %812 : vector<8x1xf32> to vector<8x8xf32>
    %814 = arith.mulf %813, %509 : vector<8x8xf32>
    %815 = arith.addf %811, %814 : vector<8x8xf32>
    %816 = vector.extract_strided_slice %605 {offsets = [0, 54], sizes = [8, 1], strides = [1, 1]} : vector<8x81xf32> to vector<8x1xf32>
    %817 = vector.broadcast %816 : vector<8x1xf32> to vector<8x8xf32>
    %818 = arith.mulf %817, %488 : vector<8x8xf32>
    %819 = vector.extract_strided_slice %605 {offsets = [0, 55], sizes = [8, 1], strides = [1, 1]} : vector<8x81xf32> to vector<8x1xf32>
    %820 = vector.broadcast %819 : vector<8x1xf32> to vector<8x8xf32>
    %821 = arith.mulf %820, %503 : vector<8x8xf32>
    %822 = arith.addf %818, %821 : vector<8x8xf32>
    %823 = vector.extract_strided_slice %605 {offsets = [0, 56], sizes = [8, 1], strides = [1, 1]} : vector<8x81xf32> to vector<8x1xf32>
    %824 = vector.broadcast %823 : vector<8x1xf32> to vector<8x8xf32>
    %825 = arith.mulf %824, %489 : vector<8x8xf32>
    %826 = arith.addf %822, %825 : vector<8x8xf32>
    %827 = vector.extract_strided_slice %605 {offsets = [0, 57], sizes = [8, 1], strides = [1, 1]} : vector<8x81xf32> to vector<8x1xf32>
    %828 = vector.broadcast %827 : vector<8x1xf32> to vector<8x8xf32>
    %829 = arith.mulf %828, %501 : vector<8x8xf32>
    %830 = arith.addf %826, %829 : vector<8x8xf32>
    %831 = vector.extract_strided_slice %605 {offsets = [0, 58], sizes = [8, 1], strides = [1, 1]} : vector<8x81xf32> to vector<8x1xf32>
    %832 = vector.broadcast %831 : vector<8x1xf32> to vector<8x8xf32>
    %833 = arith.mulf %832, %512 : vector<8x8xf32>
    %834 = arith.addf %830, %833 : vector<8x8xf32>
    %835 = vector.extract_strided_slice %605 {offsets = [0, 59], sizes = [8, 1], strides = [1, 1]} : vector<8x81xf32> to vector<8x1xf32>
    %836 = vector.broadcast %835 : vector<8x1xf32> to vector<8x8xf32>
    %837 = arith.mulf %836, %504 : vector<8x8xf32>
    %838 = arith.addf %834, %837 : vector<8x8xf32>
    %839 = vector.extract_strided_slice %605 {offsets = [0, 60], sizes = [8, 1], strides = [1, 1]} : vector<8x81xf32> to vector<8x1xf32>
    %840 = vector.broadcast %839 : vector<8x1xf32> to vector<8x8xf32>
    %841 = arith.mulf %840, %490 : vector<8x8xf32>
    %842 = arith.addf %838, %841 : vector<8x8xf32>
    %843 = vector.extract_strided_slice %605 {offsets = [0, 61], sizes = [8, 1], strides = [1, 1]} : vector<8x81xf32> to vector<8x1xf32>
    %844 = vector.broadcast %843 : vector<8x1xf32> to vector<8x8xf32>
    %845 = arith.mulf %844, %502 : vector<8x8xf32>
    %846 = arith.addf %842, %845 : vector<8x8xf32>
    %847 = vector.extract_strided_slice %605 {offsets = [0, 62], sizes = [8, 1], strides = [1, 1]} : vector<8x81xf32> to vector<8x1xf32>
    %848 = vector.broadcast %847 : vector<8x1xf32> to vector<8x8xf32>
    %849 = arith.mulf %848, %509 : vector<8x8xf32>
    %850 = arith.addf %846, %849 : vector<8x8xf32>
    %851 = vector.extract_strided_slice %605 {offsets = [0, 63], sizes = [8, 1], strides = [1, 1]} : vector<8x81xf32> to vector<8x1xf32>
    %852 = vector.broadcast %851 : vector<8x1xf32> to vector<8x8xf32>
    %853 = arith.mulf %852, %488 : vector<8x8xf32>
    %854 = vector.extract_strided_slice %605 {offsets = [0, 64], sizes = [8, 1], strides = [1, 1]} : vector<8x81xf32> to vector<8x1xf32>
    %855 = vector.broadcast %854 : vector<8x1xf32> to vector<8x8xf32>
    %856 = arith.mulf %855, %503 : vector<8x8xf32>
    %857 = arith.addf %853, %856 : vector<8x8xf32>
    %858 = vector.extract_strided_slice %605 {offsets = [0, 65], sizes = [8, 1], strides = [1, 1]} : vector<8x81xf32> to vector<8x1xf32>
    %859 = vector.broadcast %858 : vector<8x1xf32> to vector<8x8xf32>
    %860 = arith.mulf %859, %489 : vector<8x8xf32>
    %861 = arith.addf %857, %860 : vector<8x8xf32>
    %862 = vector.extract_strided_slice %605 {offsets = [0, 66], sizes = [8, 1], strides = [1, 1]} : vector<8x81xf32> to vector<8x1xf32>
    %863 = vector.broadcast %862 : vector<8x1xf32> to vector<8x8xf32>
    %864 = arith.mulf %863, %501 : vector<8x8xf32>
    %865 = arith.addf %861, %864 : vector<8x8xf32>
    %866 = vector.extract_strided_slice %605 {offsets = [0, 67], sizes = [8, 1], strides = [1, 1]} : vector<8x81xf32> to vector<8x1xf32>
    %867 = vector.broadcast %866 : vector<8x1xf32> to vector<8x8xf32>
    %868 = arith.mulf %867, %512 : vector<8x8xf32>
    %869 = arith.addf %865, %868 : vector<8x8xf32>
    %870 = vector.extract_strided_slice %605 {offsets = [0, 68], sizes = [8, 1], strides = [1, 1]} : vector<8x81xf32> to vector<8x1xf32>
    %871 = vector.broadcast %870 : vector<8x1xf32> to vector<8x8xf32>
    %872 = arith.mulf %871, %504 : vector<8x8xf32>
    %873 = arith.addf %869, %872 : vector<8x8xf32>
    %874 = vector.extract_strided_slice %605 {offsets = [0, 69], sizes = [8, 1], strides = [1, 1]} : vector<8x81xf32> to vector<8x1xf32>
    %875 = vector.broadcast %874 : vector<8x1xf32> to vector<8x8xf32>
    %876 = arith.mulf %875, %490 : vector<8x8xf32>
    %877 = arith.addf %873, %876 : vector<8x8xf32>
    %878 = vector.extract_strided_slice %605 {offsets = [0, 70], sizes = [8, 1], strides = [1, 1]} : vector<8x81xf32> to vector<8x1xf32>
    %879 = vector.broadcast %878 : vector<8x1xf32> to vector<8x8xf32>
    %880 = arith.mulf %879, %502 : vector<8x8xf32>
    %881 = arith.addf %877, %880 : vector<8x8xf32>
    %882 = vector.extract_strided_slice %605 {offsets = [0, 71], sizes = [8, 1], strides = [1, 1]} : vector<8x81xf32> to vector<8x1xf32>
    %883 = vector.broadcast %882 : vector<8x1xf32> to vector<8x8xf32>
    %884 = arith.mulf %883, %509 : vector<8x8xf32>
    %885 = arith.addf %881, %884 : vector<8x8xf32>
    %886 = vector.extract_strided_slice %605 {offsets = [0, 72], sizes = [8, 1], strides = [1, 1]} : vector<8x81xf32> to vector<8x1xf32>
    %887 = vector.broadcast %886 : vector<8x1xf32> to vector<8x8xf32>
    %888 = arith.mulf %887, %488 : vector<8x8xf32>
    %889 = vector.extract_strided_slice %605 {offsets = [0, 73], sizes = [8, 1], strides = [1, 1]} : vector<8x81xf32> to vector<8x1xf32>
    %890 = vector.broadcast %889 : vector<8x1xf32> to vector<8x8xf32>
    %891 = arith.mulf %890, %503 : vector<8x8xf32>
    %892 = arith.addf %888, %891 : vector<8x8xf32>
    %893 = vector.extract_strided_slice %605 {offsets = [0, 74], sizes = [8, 1], strides = [1, 1]} : vector<8x81xf32> to vector<8x1xf32>
    %894 = vector.broadcast %893 : vector<8x1xf32> to vector<8x8xf32>
    %895 = arith.mulf %894, %489 : vector<8x8xf32>
    %896 = arith.addf %892, %895 : vector<8x8xf32>
    %897 = vector.extract_strided_slice %605 {offsets = [0, 75], sizes = [8, 1], strides = [1, 1]} : vector<8x81xf32> to vector<8x1xf32>
    %898 = vector.broadcast %897 : vector<8x1xf32> to vector<8x8xf32>
    %899 = arith.mulf %898, %501 : vector<8x8xf32>
    %900 = arith.addf %896, %899 : vector<8x8xf32>
    %901 = vector.extract_strided_slice %605 {offsets = [0, 76], sizes = [8, 1], strides = [1, 1]} : vector<8x81xf32> to vector<8x1xf32>
    %902 = vector.broadcast %901 : vector<8x1xf32> to vector<8x8xf32>
    %903 = arith.mulf %902, %512 : vector<8x8xf32>
    %904 = arith.addf %900, %903 : vector<8x8xf32>
    %905 = vector.extract_strided_slice %605 {offsets = [0, 77], sizes = [8, 1], strides = [1, 1]} : vector<8x81xf32> to vector<8x1xf32>
    %906 = vector.broadcast %905 : vector<8x1xf32> to vector<8x8xf32>
    %907 = arith.mulf %906, %504 : vector<8x8xf32>
    %908 = arith.addf %904, %907 : vector<8x8xf32>
    %909 = vector.extract_strided_slice %605 {offsets = [0, 78], sizes = [8, 1], strides = [1, 1]} : vector<8x81xf32> to vector<8x1xf32>
    %910 = vector.broadcast %909 : vector<8x1xf32> to vector<8x8xf32>
    %911 = arith.mulf %910, %490 : vector<8x8xf32>
    %912 = arith.addf %908, %911 : vector<8x8xf32>
    %913 = vector.extract_strided_slice %605 {offsets = [0, 79], sizes = [8, 1], strides = [1, 1]} : vector<8x81xf32> to vector<8x1xf32>
    %914 = vector.broadcast %913 : vector<8x1xf32> to vector<8x8xf32>
    %915 = arith.mulf %914, %502 : vector<8x8xf32>
    %916 = arith.addf %912, %915 : vector<8x8xf32>
    %917 = vector.extract_strided_slice %605 {offsets = [0, 80], sizes = [8, 1], strides = [1, 1]} : vector<8x81xf32> to vector<8x1xf32>
    %918 = vector.broadcast %917 : vector<8x1xf32> to vector<8x8xf32>
    %919 = arith.mulf %918, %509 : vector<8x8xf32>
    %920 = arith.addf %916, %919 : vector<8x8xf32>
    %921 = tpu.concatenate %640, %675, %710, %745, %780, %815, %850, %885, %920 in 1 : vector<8x8xf32>, vector<8x8xf32>, vector<8x8xf32>, vector<8x8xf32>, vector<8x8xf32>, vector<8x8xf32>, vector<8x8xf32>, vector<8x8xf32>, vector<8x8xf32> -> vector<8x72xf32>
    %cst_111 = arith.constant 0.000000e+00 : f32
    %922 = vector.broadcast %cst_111 : f32 to vector<8x54xf32>
    %923 = tpu.concatenate %921, %604, %922 in 1 : vector<8x72xf32>, vector<8x2xf32>, vector<8x54xf32> -> vector<8x128xf32>
    %c0_112 = arith.constant 0 : index
    %c0_113 = arith.constant 0 : index
    %924 = vector.load %arg28[%c0_112, %c0_113] : memref<8x128xf32, #tpu.memory_space<vmem>>, vector<8x128xf32>
    tpu.vector_store %arg28[%c0_112, %c0_113], %923 {strides = array<i32>} : memref<8x128xf32, #tpu.memory_space<vmem>>, vector<8x128xf32>,
    return
  }
  func.func @transform_0(%arg0: i32) -> (i32, i32) {
    %c0_i32 = arith.constant 0 : i32
    %c0_i32_0 = arith.constant 0 : i32
    return %arg0, %c0_i32 : i32, i32
  }
  func.func @transform_1(%arg0: i32) -> (i32, i32) {
    %c0_i32 = arith.constant 0 : i32
    %c0_i32_0 = arith.constant 0 : i32
    return %arg0, %c0_i32 : i32, i32
  }
  func.func @transform_2(%arg0: i32) -> (i32, i32) {
    %c0_i32 = arith.constant 0 : i32
    %c0_i32_0 = arith.constant 0 : i32
    return %arg0, %c0_i32 : i32, i32
  }
  func.func @transform_3(%arg0: i32) -> (i32, i32) {
    %c0_i32 = arith.constant 0 : i32
    %c0_i32_0 = arith.constant 0 : i32
    return %arg0, %c0_i32 : i32, i32
  }
  func.func @transform_4(%arg0: i32) -> (i32, i32) {
    %c0_i32 = arith.constant 0 : i32
    %c0_i32_0 = arith.constant 0 : i32
    %c0_i32_1 = arith.constant 0 : i32
    return %c0_i32, %c0_i32_0 : i32, i32
  }
  func.func @transform_5(%arg0: i32) -> (i32, i32) {
    %c0_i32 = arith.constant 0 : i32
    %c0_i32_0 = arith.constant 0 : i32
    %c0_i32_1 = arith.constant 0 : i32
    return %c0_i32, %c0_i32_0 : i32, i32
  }
  func.func @transform_6(%arg0: i32) -> (i32, i32) {
    %c0_i32 = arith.constant 0 : i32
    %c0_i32_0 = arith.constant 0 : i32
    %c0_i32_1 = arith.constant 0 : i32
    return %c0_i32, %c0_i32_0 : i32, i32
  }
  func.func @transform_7(%arg0: i32) -> (i32, i32) {
    %c0_i32 = arith.constant 0 : i32
    %c0_i32_0 = arith.constant 0 : i32
    %c0_i32_1 = arith.constant 0 : i32
    return %c0_i32, %c0_i32_0 : i32, i32
  }
  func.func @transform_8(%arg0: i32) -> (i32, i32) {
    %c0_i32 = arith.constant 0 : i32
    %c0_i32_0 = arith.constant 0 : i32
    %c0_i32_1 = arith.constant 0 : i32
    return %c0_i32, %c0_i32_0 : i32, i32
  }
  func.func @transform_9(%arg0: i32) -> (i32, i32) {
    %c0_i32 = arith.constant 0 : i32
    %c0_i32_0 = arith.constant 0 : i32
    %c0_i32_1 = arith.constant 0 : i32
    return %c0_i32, %c0_i32_0 : i32, i32
  }
  func.func @transform_10(%arg0: i32) -> (i32, i32) {
    %c0_i32 = arith.constant 0 : i32
    %c0_i32_0 = arith.constant 0 : i32
    %c0_i32_1 = arith.constant 0 : i32
    return %c0_i32, %c0_i32_0 : i32, i32
  }
  func.func @transform_11(%arg0: i32) -> (i32, i32) {
    %c0_i32 = arith.constant 0 : i32
    %c0_i32_0 = arith.constant 0 : i32
    %c0_i32_1 = arith.constant 0 : i32
    return %c0_i32, %c0_i32_0 : i32, i32
  }
  func.func @transform_12(%arg0: i32) -> (i32, i32) {
    %c0_i32 = arith.constant 0 : i32
    %c0_i32_0 = arith.constant 0 : i32
    %c0_i32_1 = arith.constant 0 : i32
    return %c0_i32, %c0_i32_0 : i32, i32
  }
  func.func @transform_13(%arg0: i32) -> (i32, i32) {
    %c0_i32 = arith.constant 0 : i32
    %c0_i32_0 = arith.constant 0 : i32
    %c0_i32_1 = arith.constant 0 : i32
    return %c0_i32, %c0_i32_0 : i32, i32
  }
  func.func @transform_14(%arg0: i32) -> (i32, i32) {
    %c0_i32 = arith.constant 0 : i32
    %c0_i32_0 = arith.constant 0 : i32
    %c0_i32_1 = arith.constant 0 : i32
    return %c0_i32, %c0_i32_0 : i32, i32
  }
  func.func @transform_15(%arg0: i32) -> (i32, i32) {
    %c0_i32 = arith.constant 0 : i32
    %c0_i32_0 = arith.constant 0 : i32
    %c0_i32_1 = arith.constant 0 : i32
    return %c0_i32, %c0_i32_0 : i32, i32
  }
  func.func @transform_16(%arg0: i32) -> (i32, i32) {
    %c0_i32 = arith.constant 0 : i32
    %c0_i32_0 = arith.constant 0 : i32
    %c0_i32_1 = arith.constant 0 : i32
    return %c0_i32, %c0_i32_0 : i32, i32
  }
  func.func @transform_17(%arg0: i32) -> (i32, i32) {
    %c0_i32 = arith.constant 0 : i32
    %c0_i32_0 = arith.constant 0 : i32
    %c0_i32_1 = arith.constant 0 : i32
    return %c0_i32, %c0_i32_0 : i32, i32
  }
  func.func @transform_18(%arg0: i32) -> (i32, i32) {
    %c0_i32 = arith.constant 0 : i32
    %c0_i32_0 = arith.constant 0 : i32
    %c0_i32_1 = arith.constant 0 : i32
    return %c0_i32, %c0_i32_0 : i32, i32
  }
  func.func @transform_19(%arg0: i32) -> (i32, i32) {
    %c0_i32 = arith.constant 0 : i32
    %c0_i32_0 = arith.constant 0 : i32
    %c0_i32_1 = arith.constant 0 : i32
    return %c0_i32, %c0_i32_0 : i32, i32
  }
  func.func @transform_20(%arg0: i32) -> (i32, i32) {
    %c0_i32 = arith.constant 0 : i32
    %c0_i32_0 = arith.constant 0 : i32
    %c0_i32_1 = arith.constant 0 : i32
    return %c0_i32, %c0_i32_0 : i32, i32
  }
  func.func @transform_21(%arg0: i32) -> (i32, i32) {
    %c0_i32 = arith.constant 0 : i32
    %c0_i32_0 = arith.constant 0 : i32
    %c0_i32_1 = arith.constant 0 : i32
    return %c0_i32, %c0_i32_0 : i32, i32
  }
  func.func @transform_22(%arg0: i32) -> (i32, i32) {
    %c0_i32 = arith.constant 0 : i32
    %c0_i32_0 = arith.constant 0 : i32
    %c0_i32_1 = arith.constant 0 : i32
    return %c0_i32, %c0_i32_0 : i32, i32
  }
  func.func @transform_23(%arg0: i32) -> (i32, i32) {
    %c0_i32 = arith.constant 0 : i32
    %c0_i32_0 = arith.constant 0 : i32
    %c0_i32_1 = arith.constant 0 : i32
    return %c0_i32, %c0_i32_0 : i32, i32
  }
  func.func @transform_24(%arg0: i32) -> (i32, i32) {
    %c0_i32 = arith.constant 0 : i32
    %c0_i32_0 = arith.constant 0 : i32
    %c0_i32_1 = arith.constant 0 : i32
    return %c0_i32, %c0_i32_0 : i32, i32
  }
  func.func @transform_25(%arg0: i32) -> (i32, i32) {
    %c0_i32 = arith.constant 0 : i32
    %c0_i32_0 = arith.constant 0 : i32
    %c0_i32_1 = arith.constant 0 : i32
    return %c0_i32, %c0_i32_0 : i32, i32
  }
  func.func @transform_26(%arg0: i32) -> (i32, i32) {
    %c0_i32 = arith.constant 0 : i32
    %c0_i32_0 = arith.constant 0 : i32
    %c0_i32_1 = arith.constant 0 : i32
    return %c0_i32, %c0_i32_0 : i32, i32
  }
  func.func @transform_27(%arg0: i32) -> (i32, i32) {
    %c0_i32 = arith.constant 0 : i32
    %c0_i32_0 = arith.constant 0 : i32
    return %arg0, %c0_i32 : i32, i32
  }
}

module attributes {stable_mosaic.version = 11 : i64} {
  func.func @_bias_matmul_kernel(%arg0: i32, %arg1: memref<8x72xf32, #tpu.memory_space<vmem>>, %arg2: memref<72x128xf32, #tpu.memory_space<vmem>>, %arg3: memref<1x128xf32, #tpu.memory_space<vmem>>, %arg4: memref<8x128xf32, #tpu.memory_space<vmem>>) attributes {dimension_semantics = [#tpu.dimension_semantics<arbitrary>], iteration_bounds = array<i64: 1>, scalar_prefetch = 0 : i64, scratch_operands = 0 : i64, tpu.core_type = #tpu.core_type<tc>, window_params = [{pipeline_mode = #tpu.pipeline_mode<synchronous>, transform_indices = @transform_0, window_bounds = array<i64: 8, 72>}, {pipeline_mode = #tpu.pipeline_mode<synchronous>, transform_indices = @transform_1, window_bounds = array<i64: 72, 128>}, {pipeline_mode = #tpu.pipeline_mode<synchronous>, transform_indices = @transform_2, window_bounds = array<i64: 1, 128>}, {pipeline_mode = #tpu.pipeline_mode<synchronous>, transform_indices = @transform_3, window_bounds = array<i64: 8, 128>}]} {
    %c0 = arith.constant 0 : index
    %c0_0 = arith.constant 0 : index
    %0 = vector.load %arg1[%c0, %c0_0] : memref<8x72xf32, #tpu.memory_space<vmem>>, vector<8x72xf32>
    %c0_1 = arith.constant 0 : index
    %c0_2 = arith.constant 0 : index
    %1 = vector.load %arg2[%c0_1, %c0_2] : memref<72x128xf32, #tpu.memory_space<vmem>>, vector<72x128xf32>
    %cst = arith.constant dense<0.000000e+00> : vector<8x128xf32>
    %2 = tpu.matmul %0, %1, %cst {dimension_numbers = #tpu.dot_dimension_numbers<[1], [0], [0], [1], [0, 0, 1, 1], [], []>} : vector<8x72xf32>, vector<72x128xf32>, vector<8x128xf32> -> vector<8x128xf32>
    %c0_3 = arith.constant 0 : index
    %c0_4 = arith.constant 0 : index
    %3 = vector.load %arg3[%c0_3, %c0_4] : memref<1x128xf32, #tpu.memory_space<vmem>>, vector<1x128xf32>
    %4 = vector.broadcast %3 : vector<1x128xf32> to vector<8x128xf32>
    %5 = arith.addf %2, %4 : vector<8x128xf32>
    %c0_5 = arith.constant 0 : index
    %c0_6 = arith.constant 0 : index
    %6 = vector.load %arg4[%c0_5, %c0_6] : memref<8x128xf32, #tpu.memory_space<vmem>>, vector<8x128xf32>
    tpu.vector_store %arg4[%c0_5, %c0_6], %5 {strides = array<i32>} : memref<8x128xf32, #tpu.memory_space<vmem>>, vector<8x128xf32>,
    return
  }
  func.func @transform_0(%arg0: i32) -> (i32, i32) {
    %c0_i32 = arith.constant 0 : i32
    %c0_i32_0 = arith.constant 0 : i32
    %c0_i32_1 = arith.constant 0 : i32
    return %c0_i32, %c0_i32_0 : i32, i32
  }
  func.func @transform_1(%arg0: i32) -> (i32, i32) {
    %c0_i32 = arith.constant 0 : i32
    %c0_i32_0 = arith.constant 0 : i32
    %c0_i32_1 = arith.constant 0 : i32
    return %c0_i32, %c0_i32_0 : i32, i32
  }
  func.func @transform_2(%arg0: i32) -> (i32, i32) {
    %c0_i32 = arith.constant 0 : i32
    %c0_i32_0 = arith.constant 0 : i32
    %c0_i32_1 = arith.constant 0 : i32
    return %c0_i32, %c0_i32_0 : i32, i32
  }
  func.func @transform_3(%arg0: i32) -> (i32, i32) {
    %c0_i32 = arith.constant 0 : i32
    %c0_i32_0 = arith.constant 0 : i32
    %c0_i32_1 = arith.constant 0 : i32
    return %c0_i32, %c0_i32_0 : i32, i32
  }
}

</mosaic_0001>

<llo_original>
// kernel: forward.2
$region0: #{forward.2}
  #allocation0 [shape = 'u32[]', space=smem, size = 0x4, offset = 0x4, fixed_abs, tag = 'smem constant byte address 0x4 - core index']
  #allocation1 [shape = 'u32[144,128]{1,0:T(1,128)}', space=vmem, size = 0x12000, scoped, tag = 'internal scratch']
  %s0 = inlined_call_operand.vmem [shape: f32[16,40], index: 0, kind: input, shape index: {}]
  %s1 = inlined_call_operand.vmem [shape: f32[16,144], index: 1, kind: input, shape index: {}]
  %s2 = inlined_call_operand.vmem [shape: f32[16,81], index: 2, kind: input, shape index: {}]
  %s3 = inlined_call_operand.vmem [shape: f32[16,81], index: 3, kind: input, shape index: {}]
  %s4 = inlined_call_operand.vmem [shape: f32[40,16], index: 4, kind: input, shape index: {}]
  %s5 = inlined_call_operand.vmem [shape: f32[1,16], index: 5, kind: input, shape index: {}]
  %s6 = inlined_call_operand.vmem [shape: f32[1,16], index: 6, kind: input, shape index: {}]
  %s7 = inlined_call_operand.vmem [shape: f32[1,16], index: 7, kind: input, shape index: {}]
  %s8 = inlined_call_operand.vmem [shape: f32[16,16], index: 8, kind: input, shape index: {}]
  %s9 = inlined_call_operand.vmem [shape: f32[1,16], index: 9, kind: input, shape index: {}]
  %s10 = inlined_call_operand.vmem [shape: f32[1,16], index: 10, kind: input, shape index: {}]
  %s11 = inlined_call_operand.vmem [shape: f32[1,16], index: 11, kind: input, shape index: {}]
  %s12 = inlined_call_operand.vmem [shape: f32[16,96], index: 12, kind: input, shape index: {}]
  %s13 = inlined_call_operand.vmem [shape: f32[1,96], index: 13, kind: input, shape index: {}]
  %s14 = inlined_call_operand.vmem [shape: f32[48,40], index: 14, kind: input, shape index: {}]
  %s15 = inlined_call_operand.vmem [shape: f32[1,40], index: 15, kind: input, shape index: {}]
  %s16 = inlined_call_operand.vmem [shape: f32[32,32], index: 16, kind: input, shape index: {}]
  %s17 = inlined_call_operand.vmem [shape: f32[16,16], index: 17, kind: input, shape index: {}]
  %s18 = inlined_call_operand.vmem [shape: f32[72,240], index: 18, kind: input, shape index: {}]
  %s19 = inlined_call_operand.vmem [shape: f32[240,72], index: 19, kind: input, shape index: {}]
  %s20 = inlined_call_operand.vmem [shape: f32[24,24], index: 20, kind: input, shape index: {}]
  %s21 = inlined_call_operand.vmem [shape: f32[1,24], index: 21, kind: input, shape index: {}]
  %s22 = inlined_call_operand.vmem [shape: f32[16,32], index: 22, kind: input, shape index: {}]
  %s23 = inlined_call_operand.vmem [shape: f32[8,16], index: 23, kind: input, shape index: {}]
  %s24 = inlined_call_operand.vmem [shape: f32[1,4], index: 24, kind: input, shape index: {}]
  %s25 = inlined_call_operand.vmem [shape: f32[1,4], index: 25, kind: input, shape index: {}]
  %s26 = inlined_call_operand.vmem [shape: f32[2,4], index: 26, kind: input, shape index: {}]
  %s27 = inlined_call_operand.vmem [shape: f32[16,128], index: 27, kind: output, shape index: {}]
  %s28 = sld [smem:[#allocation0]]
  $region141: #{forward.2} parent=0
    _
  %s30 = ssub.s32 1, %s28
  %s31 = scalar_select 0, %s30, %s28
  loop: start=0, step=1, limit=4
  $region2: #{forward.2} parent=0 // loop_pre_header
    _
  $region3: #{forward.2} parent=0 // loop_header
    %s33 = sphi 0, %s37
    %p34 = scmp.ge.s32.totalorder %s33, 4
    %s43 = sphi 0, %s45
    %s46 = sphi 0, %s43
    %s47 = sphi 0, %s46
    %s63 = sphi 0, %s47
    %s69 = sphi 0, %s71
    %s72 = sphi 0, %s69
    %s73 = sphi 0, %s72
    %s89 = sphi 0, %s73
    %s95 = sphi 0, %s97
    %s98 = sphi 0, %s95
    %s99 = sphi 0, %s98
    %s115 = sphi 0, %s99
    %s121 = sphi 0, %s123
    %s124 = sphi 0, %s121
    %s125 = sphi 0, %s124
    %s141 = sphi 0, %s125
    %s145 = sphi 0, %s145
    %s147 = sphi 0, %s145
    %s148 = sphi 0, %s147
    %s162 = sphi 0, %s148
    %s166 = sphi 0, %s166
    %s168 = sphi 0, %s166
    %s169 = sphi 0, %s168
    %s183 = sphi 0, %s169
    %s187 = sphi 0, %s187
    %s189 = sphi 0, %s187
    %s190 = sphi 0, %s189
    %s204 = sphi 0, %s190
    %s208 = sphi 0, %s208
    %s210 = sphi 0, %s208
    %s211 = sphi 0, %s210
    %s225 = sphi 0, %s211
    %s229 = sphi 0, %s229
    %s231 = sphi 0, %s229
    %s232 = sphi 0, %s231
    %s246 = sphi 0, %s232
    %s250 = sphi 0, %s250
    %s252 = sphi 0, %s250
    %s253 = sphi 0, %s252
    %s267 = sphi 0, %s253
    %s271 = sphi 0, %s271
    %s273 = sphi 0, %s271
    %s274 = sphi 0, %s273
    %s288 = sphi 0, %s274
    %s292 = sphi 0, %s292
    %s294 = sphi 0, %s292
    %s295 = sphi 0, %s294
    %s309 = sphi 0, %s295
    %s313 = sphi 0, %s313
    %s315 = sphi 0, %s313
    %s316 = sphi 0, %s315
    %s330 = sphi 0, %s316
    %s334 = sphi 0, %s334
    %s336 = sphi 0, %s334
    %s337 = sphi 0, %s336
    %s351 = sphi 0, %s337
    %s355 = sphi 0, %s355
    %s357 = sphi 0, %s355
    %s358 = sphi 0, %s357
    %s372 = sphi 0, %s358
    %s376 = sphi 0, %s376
    %s378 = sphi 0, %s376
    %s379 = sphi 0, %s378
    %s393 = sphi 0, %s379
    %s397 = sphi 0, %s397
    %s399 = sphi 0, %s397
    %s400 = sphi 0, %s399
    %s414 = sphi 0, %s400
    %s418 = sphi 0, %s418
    %s420 = sphi 0, %s418
    %s421 = sphi 0, %s420
    %s435 = sphi 0, %s421
    %s439 = sphi 0, %s439
    %s441 = sphi 0, %s439
    %s442 = sphi 0, %s441
    %s456 = sphi 0, %s442
    %s460 = sphi 0, %s460
    %s462 = sphi 0, %s460
    %s463 = sphi 0, %s462
    %s477 = sphi 0, %s463
    %s481 = sphi 0, %s481
    %s483 = sphi 0, %s481
    %s484 = sphi 0, %s483
    %s498 = sphi 0, %s484
    %s502 = sphi 0, %s502
    %s504 = sphi 0, %s502
    %s505 = sphi 0, %s504
    %s519 = sphi 0, %s505
    %s523 = sphi 0, %s523
    %s525 = sphi 0, %s523
    %s526 = sphi 0, %s525
    %s540 = sphi 0, %s526
    %s544 = sphi 0, %s544
    %s546 = sphi 0, %s544
    %s547 = sphi 0, %s546
    %s561 = sphi 0, %s547
    %s565 = sphi 0, %s565
    %s567 = sphi 0, %s565
    %s568 = sphi 0, %s567
    %s582 = sphi 0, %s568
    %s586 = sphi 0, %s586
    %s588 = sphi 0, %s586
    %s589 = sphi 0, %s588
    %s603 = sphi 0, %s589
    %s607 = sphi 0, %s607
    %s609 = sphi 0, %s607
    %s610 = sphi 0, %s609
    %s624 = sphi 0, %s610
    %s630 = sphi 0, %s632
    %s633 = sphi 0, %s630
    %s634 = sphi 0, %s633
    %s650 = sphi 0, %s634
  $region4: #{forward.2} parent=0 // loop_header_branch
    %36 = sbr.rel (%p34) target = $region8
  $region5: #{forward.2} parent=0 // loop_body
    %s38 = ssub.s32 %s33, 1
    %s39 = ssub.s32 %s33, 2
    %s40 = sadd.s32 %s33, 1
    %s41 = ssub.s32 %s33, %s40
    %p42 = scmp.eq.s32.totalorder %s41, 0
    %s44 = sadd.s32 %s43, 1
    %s45 = scalar_select %p42, %s43, %s44
    %p48 = pneg %p42
    %p49 = scmp.eq.s32.totalorder %s33, 1
    %p50 = por %p48, %p49
    %p51 = scmp.ne.s32.totalorder %s43, %s46
    %p52 = scmp.eq.s32.totalorder %s33, 0
    %p53 = por %p51, %p52
    %p54 = scmp.ne.s32.totalorder %s43, %s46
    %p55 = scmp.eq.s32.totalorder %s38, 1
    %p56 = por %p54, %p55
    %p57 = scmp.ne.s32.totalorder %s46, %s47
    %p58 = scmp.eq.s32.totalorder %s38, 0
    %p59 = por %p57, %p58
    %p60 = scmp.ne.s32.totalorder %s46, %s47
    %p61 = scmp.eq.s32.totalorder %s39, 1
    %p62 = por %p60, %p61
    %p64 = scmp.ne.s32.totalorder %s47, %s63
    %p65 = scmp.eq.s32.totalorder %s39, 0
    %p66 = por %p64, %p65
    %s67 = ssub.s32 %s33, %s40
    %p68 = scmp.eq.s32.totalorder %s67, 0
    %s70 = sadd.s32 %s69, 1
    %s71 = scalar_select %p68, %s69, %s70
    %p74 = pneg %p68
    %p75 = scmp.eq.s32.totalorder %s33, 1
    %p76 = por %p74, %p75
    %p77 = scmp.ne.s32.totalorder %s69, %s72
    %p78 = scmp.eq.s32.totalorder %s33, 0
    %p79 = por %p77, %p78
    %p80 = scmp.ne.s32.totalorder %s69, %s72
    %p81 = scmp.eq.s32.totalorder %s38, 1
    %p82 = por %p80, %p81
    %p83 = scmp.ne.s32.totalorder %s72, %s73
    %p84 = scmp.eq.s32.totalorder %s38, 0
    %p85 = por %p83, %p84
    %p86 = scmp.ne.s32.totalorder %s72, %s73
    %p87 = scmp.eq.s32.totalorder %s39, 1
    %p88 = por %p86, %p87
    %p90 = scmp.ne.s32.totalorder %s73, %s89
    %p91 = scmp.eq.s32.totalorder %s39, 0
    %p92 = por %p90, %p91
    %s93 = ssub.s32 %s33, %s40
    %p94 = scmp.eq.s32.totalorder %s93, 0
    %s96 = sadd.s32 %s95, 1
    %s97 = scalar_select %p94, %s95, %s96
    %p100 = pneg %p94
    %p101 = scmp.eq.s32.totalorder %s33, 1
    %p102 = por %p100, %p101
    %p103 = scmp.ne.s32.totalorder %s95, %s98
    %p104 = scmp.eq.s32.totalorder %s33, 0
    %p105 = por %p103, %p104
    %p106 = scmp.ne.s32.totalorder %s95, %s98
    %p107 = scmp.eq.s32.totalorder %s38, 1
    %p108 = por %p106, %p107
    %p109 = scmp.ne.s32.totalorder %s98, %s99
    %p110 = scmp.eq.s32.totalorder %s38, 0
    %p111 = por %p109, %p110
    %p112 = scmp.ne.s32.totalorder %s98, %s99
    %p113 = scmp.eq.s32.totalorder %s39, 1
    %p114 = por %p112, %p113
    %p116 = scmp.ne.s32.totalorder %s99, %s115
    %p117 = scmp.eq.s32.totalorder %s39, 0
    %p118 = por %p116, %p117
    %s119 = ssub.s32 %s33, %s40
    %p120 = scmp.eq.s32.totalorder %s119, 0
    %s122 = sadd.s32 %s121, 1
    %s123 = scalar_select %p120, %s121, %s122
    %p126 = pneg %p120
    %p127 = scmp.eq.s32.totalorder %s33, 1
    %p128 = por %p126, %p127
    %p129 = scmp.ne.s32.totalorder %s121, %s124
    %p130 = scmp.eq.s32.totalorder %s33, 0
    %p131 = por %p129, %p130
    %p132 = scmp.ne.s32.totalorder %s121, %s124
    %p133 = scmp.eq.s32.totalorder %s38, 1
    %p134 = por %p132, %p133
    %p135 = scmp.ne.s32.totalorder %s124, %s125
    %p136 = scmp.eq.s32.totalorder %s38, 0
    %p137 = por %p135, %p136
    %p138 = scmp.ne.s32.totalorder %s124, %s125
    %p139 = scmp.eq.s32.totalorder %s39, 1
    %p140 = por %p138, %p139
    %p142 = scmp.ne.s32.totalorder %s125, %s141
    %p143 = scmp.eq.s32.totalorder %s39, 0
    %p144 = por %p142, %p143
    %s146 = sadd.s32 %s145, 1
    %p149 = scmp.eq.s32.totalorder %s33, 1
    %p150 = scmp.ne.s32.totalorder %s145, %s147
    %p151 = scmp.eq.s32.totalorder %s33, 0
    %p152 = por %p150, %p151
    %p153 = scmp.ne.s32.totalorder %s145, %s147
    %p154 = scmp.eq.s32.totalorder %s38, 1
    %p155 = por %p153, %p154
    %p156 = scmp.ne.s32.totalorder %s147, %s148
    %p157 = scmp.eq.s32.totalorder %s38, 0
    %p158 = por %p156, %p157
    %p159 = scmp.ne.s32.totalorder %s147, %s148
    %p160 = scmp.eq.s32.totalorder %s39, 1
    %p161 = por %p159, %p160
    %p163 = scmp.ne.s32.totalorder %s148, %s162
    %p164 = scmp.eq.s32.totalorder %s39, 0
    %p165 = por %p163, %p164
    %s167 = sadd.s32 %s166, 1
    %p170 = scmp.eq.s32.totalorder %s33, 1
    %p171 = scmp.ne.s32.totalorder %s166, %s168
    %p172 = scmp.eq.s32.totalorder %s33, 0
    %p173 = por %p171, %p172
    %p174 = scmp.ne.s32.totalorder %s166, %s168
    %p175 = scmp.eq.s32.totalorder %s38, 1
    %p176 = por %p174, %p175
    %p177 = scmp.ne.s32.totalorder %s168, %s169
    %p178 = scmp.eq.s32.totalorder %s38, 0
    %p179 = por %p177, %p178
    %p180 = scmp.ne.s32.totalorder %s168, %s169
    %p181 = scmp.eq.s32.totalorder %s39, 1
    %p182 = por %p180, %p181
    %p184 = scmp.ne.s32.totalorder %s169, %s183
    %p185 = scmp.eq.s32.totalorder %s39, 0
    %p186 = por %p184, %p185
    %s188 = sadd.s32 %s187, 1
    %p191 = scmp.eq.s32.totalorder %s33, 1
    %p192 = scmp.ne.s32.totalorder %s187, %s189
    %p193 = scmp.eq.s32.totalorder %s33, 0
    %p194 = por %p192, %p193
    %p195 = scmp.ne.s32.totalorder %s187, %s189
    %p196 = scmp.eq.s32.totalorder %s38, 1
    %p197 = por %p195, %p196
    %p198 = scmp.ne.s32.totalorder %s189, %s190
    %p199 = scmp.eq.s32.totalorder %s38, 0
    %p200 = por %p198, %p199
    %p201 = scmp.ne.s32.totalorder %s189, %s190
    %p202 = scmp.eq.s32.totalorder %s39, 1
    %p203 = por %p201, %p202
    %p205 = scmp.ne.s32.totalorder %s190, %s204
    %p206 = scmp.eq.s32.totalorder %s39, 0
    %p207 = por %p205, %p206
    %s209 = sadd.s32 %s208, 1
    %p212 = scmp.eq.s32.totalorder %s33, 1
    %p213 = scmp.ne.s32.totalorder %s208, %s210
    %p214 = scmp.eq.s32.totalorder %s33, 0
    %p215 = por %p213, %p214
    %p216 = scmp.ne.s32.totalorder %s208, %s210
    %p217 = scmp.eq.s32.totalorder %s38, 1
    %p218 = por %p216, %p217
    %p219 = scmp.ne.s32.totalorder %s210, %s211
    %p220 = scmp.eq.s32.totalorder %s38, 0
    %p221 = por %p219, %p220
    %p222 = scmp.ne.s32.totalorder %s210, %s211
    %p223 = scmp.eq.s32.totalorder %s39, 1
    %p224 = por %p222, %p223
    %p226 = scmp.ne.s32.totalorder %s211, %s225
    %p227 = scmp.eq.s32.totalorder %s39, 0
    %p228 = por %p226, %p227
    %s230 = sadd.s32 %s229, 1
    %p233 = scmp.eq.s32.totalorder %s33, 1
    %p234 = scmp.ne.s32.totalorder %s229, %s231
    %p235 = scmp.eq.s32.totalorder %s33, 0
    %p236 = por %p234, %p235
    %p237 = scmp.ne.s32.totalorder %s229, %s231
    %p238 = scmp.eq.s32.totalorder %s38, 1
    %p239 = por %p237, %p238
    %p240 = scmp.ne.s32.totalorder %s231, %s232
    %p241 = scmp.eq.s32.totalorder %s38, 0
    %p242 = por %p240, %p241
    %p243 = scmp.ne.s32.totalorder %s231, %s232
    %p244 = scmp.eq.s32.totalorder %s39, 1
    %p245 = por %p243, %p244
    %p247 = scmp.ne.s32.totalorder %s232, %s246
    %p248 = scmp.eq.s32.totalorder %s39, 0
    %p249 = por %p247, %p248
    %s251 = sadd.s32 %s250, 1
    %p254 = scmp.eq.s32.totalorder %s33, 1
    %p255 = scmp.ne.s32.totalorder %s250, %s252
    %p256 = scmp.eq.s32.totalorder %s33, 0
    %p257 = por %p255, %p256
    %p258 = scmp.ne.s32.totalorder %s250, %s252
    %p259 = scmp.eq.s32.totalorder %s38, 1
    %p260 = por %p258, %p259
    %p261 = scmp.ne.s32.totalorder %s252, %s253
    %p262 = scmp.eq.s32.totalorder %s38, 0
    %p263 = por %p261, %p262
    %p264 = scmp.ne.s32.totalorder %s252, %s253
    %p265 = scmp.eq.s32.totalorder %s39, 1
    %p266 = por %p264, %p265
    %p268 = scmp.ne.s32.totalorder %s253, %s267
    %p269 = scmp.eq.s32.totalorder %s39, 0
    %p270 = por %p268, %p269
    %s272 = sadd.s32 %s271, 1
    %p275 = scmp.eq.s32.totalorder %s33, 1
    %p276 = scmp.ne.s32.totalorder %s271, %s273
    %p277 = scmp.eq.s32.totalorder %s33, 0
    %p278 = por %p276, %p277
    %p279 = scmp.ne.s32.totalorder %s271, %s273
    %p280 = scmp.eq.s32.totalorder %s38, 1
    %p281 = por %p279, %p280
    %p282 = scmp.ne.s32.totalorder %s273, %s274
    %p283 = scmp.eq.s32.totalorder %s38, 0
    %p284 = por %p282, %p283
    %p285 = scmp.ne.s32.totalorder %s273, %s274
    %p286 = scmp.eq.s32.totalorder %s39, 1
    %p287 = por %p285, %p286
    %p289 = scmp.ne.s32.totalorder %s274, %s288
    %p290 = scmp.eq.s32.totalorder %s39, 0
    %p291 = por %p289, %p290
    %s293 = sadd.s32 %s292, 1
    %p296 = scmp.eq.s32.totalorder %s33, 1
    %p297 = scmp.ne.s32.totalorder %s292, %s294
    %p298 = scmp.eq.s32.totalorder %s33, 0
    %p299 = por %p297, %p298
    %p300 = scmp.ne.s32.totalorder %s292, %s294
    %p301 = scmp.eq.s32.totalorder %s38, 1
    %p302 = por %p300, %p301
    %p303 = scmp.ne.s32.totalorder %s294, %s295
    %p304 = scmp.eq.s32.totalorder %s38, 0
    %p305 = por %p303, %p304
    %p306 = scmp.ne.s32.totalorder %s294, %s295
    %p307 = scmp.eq.s32.totalorder %s39, 1
    %p308 = por %p306, %p307
    %p310 = scmp.ne.s32.totalorder %s295, %s309
    %p311 = scmp.eq.s32.totalorder %s39, 0
    %p312 = por %p310, %p311
    %s314 = sadd.s32 %s313, 1
    %p317 = scmp.eq.s32.totalorder %s33, 1
    %p318 = scmp.ne.s32.totalorder %s313, %s315
    %p319 = scmp.eq.s32.totalorder %s33, 0
    %p320 = por %p318, %p319
    %p321 = scmp.ne.s32.totalorder %s313, %s315
    %p322 = scmp.eq.s32.totalorder %s38, 1
    %p323 = por %p321, %p322
    %p324 = scmp.ne.s32.totalorder %s315, %s316
    %p325 = scmp.eq.s32.totalorder %s38, 0
    %p326 = por %p324, %p325
    %p327 = scmp.ne.s32.totalorder %s315, %s316
    %p328 = scmp.eq.s32.totalorder %s39, 1
    %p329 = por %p327, %p328
    %p331 = scmp.ne.s32.totalorder %s316, %s330
    %p332 = scmp.eq.s32.totalorder %s39, 0
    %p333 = por %p331, %p332
    %s335 = sadd.s32 %s334, 1
    %p338 = scmp.eq.s32.totalorder %s33, 1
    %p339 = scmp.ne.s32.totalorder %s334, %s336
    %p340 = scmp.eq.s32.totalorder %s33, 0
    %p341 = por %p339, %p340
    %p342 = scmp.ne.s32.totalorder %s334, %s336
    %p343 = scmp.eq.s32.totalorder %s38, 1
    %p344 = por %p342, %p343
    %p345 = scmp.ne.s32.totalorder %s336, %s337
    %p346 = scmp.eq.s32.totalorder %s38, 0
    %p347 = por %p345, %p346
    %p348 = scmp.ne.s32.totalorder %s336, %s337
    %p349 = scmp.eq.s32.totalorder %s39, 1
    %p350 = por %p348, %p349
    %p352 = scmp.ne.s32.totalorder %s337, %s351
    %p353 = scmp.eq.s32.totalorder %s39, 0
    %p354 = por %p352, %p353
    %s356 = sadd.s32 %s355, 1
    %p359 = scmp.eq.s32.totalorder %s33, 1
    %p360 = scmp.ne.s32.totalorder %s355, %s357
    %p361 = scmp.eq.s32.totalorder %s33, 0
    %p362 = por %p360, %p361
    %p363 = scmp.ne.s32.totalorder %s355, %s357
    %p364 = scmp.eq.s32.totalorder %s38, 1
    %p365 = por %p363, %p364
    %p366 = scmp.ne.s32.totalorder %s357, %s358
    %p367 = scmp.eq.s32.totalorder %s38, 0
    %p368 = por %p366, %p367
    %p369 = scmp.ne.s32.totalorder %s357, %s358
    %p370 = scmp.eq.s32.totalorder %s39, 1
    %p371 = por %p369, %p370
    %p373 = scmp.ne.s32.totalorder %s358, %s372
    %p374 = scmp.eq.s32.totalorder %s39, 0
    %p375 = por %p373, %p374
    %s377 = sadd.s32 %s376, 1
    %p380 = scmp.eq.s32.totalorder %s33, 1
    %p381 = scmp.ne.s32.totalorder %s376, %s378
    %p382 = scmp.eq.s32.totalorder %s33, 0
    %p383 = por %p381, %p382
    %p384 = scmp.ne.s32.totalorder %s376, %s378
    %p385 = scmp.eq.s32.totalorder %s38, 1
    %p386 = por %p384, %p385
    %p387 = scmp.ne.s32.totalorder %s378, %s379
    %p388 = scmp.eq.s32.totalorder %s38, 0
    %p389 = por %p387, %p388
    %p390 = scmp.ne.s32.totalorder %s378, %s379
    %p391 = scmp.eq.s32.totalorder %s39, 1
    %p392 = por %p390, %p391
    %p394 = scmp.ne.s32.totalorder %s379, %s393
    %p395 = scmp.eq.s32.totalorder %s39, 0
    %p396 = por %p394, %p395
    %s398 = sadd.s32 %s397, 1
    %p401 = scmp.eq.s32.totalorder %s33, 1
    %p402 = scmp.ne.s32.totalorder %s397, %s399
    %p403 = scmp.eq.s32.totalorder %s33, 0
    %p404 = por %p402, %p403
    %p405 = scmp.ne.s32.totalorder %s397, %s399
    %p406 = scmp.eq.s32.totalorder %s38, 1
    %p407 = por %p405, %p406
    %p408 = scmp.ne.s32.totalorder %s399, %s400
    %p409 = scmp.eq.s32.totalorder %s38, 0
    %p410 = por %p408, %p409
    %p411 = scmp.ne.s32.totalorder %s399, %s400
    %p412 = scmp.eq.s32.totalorder %s39, 1
    %p413 = por %p411, %p412
    %p415 = scmp.ne.s32.totalorder %s400, %s414
    %p416 = scmp.eq.s32.totalorder %s39, 0
    %p417 = por %p415, %p416
    %s419 = sadd.s32 %s418, 1
    %p422 = scmp.eq.s32.totalorder %s33, 1
    %p423 = scmp.ne.s32.totalorder %s418, %s420
    %p424 = scmp.eq.s32.totalorder %s33, 0
    %p425 = por %p423, %p424
    %p426 = scmp.ne.s32.totalorder %s418, %s420
    %p427 = scmp.eq.s32.totalorder %s38, 1
    %p428 = por %p426, %p427
    %p429 = scmp.ne.s32.totalorder %s420, %s421
    %p430 = scmp.eq.s32.totalorder %s38, 0
    %p431 = por %p429, %p430
    %p432 = scmp.ne.s32.totalorder %s420, %s421
    %p433 = scmp.eq.s32.totalorder %s39, 1
    %p434 = por %p432, %p433
    %p436 = scmp.ne.s32.totalorder %s421, %s435
    %p437 = scmp.eq.s32.totalorder %s39, 0
    %p438 = por %p436, %p437
    %s440 = sadd.s32 %s439, 1
    %p443 = scmp.eq.s32.totalorder %s33, 1
    %p444 = scmp.ne.s32.totalorder %s439, %s441
    %p445 = scmp.eq.s32.totalorder %s33, 0
    %p446 = por %p444, %p445
    %p447 = scmp.ne.s32.totalorder %s439, %s441
    %p448 = scmp.eq.s32.totalorder %s38, 1
    %p449 = por %p447, %p448
    %p450 = scmp.ne.s32.totalorder %s441, %s442
    %p451 = scmp.eq.s32.totalorder %s38, 0
    %p452 = por %p450, %p451
    %p453 = scmp.ne.s32.totalorder %s441, %s442
    %p454 = scmp.eq.s32.totalorder %s39, 1
    %p455 = por %p453, %p454
    %p457 = scmp.ne.s32.totalorder %s442, %s456
    %p458 = scmp.eq.s32.totalorder %s39, 0
    %p459 = por %p457, %p458
    %s461 = sadd.s32 %s460, 1
    %p464 = scmp.eq.s32.totalorder %s33, 1
    %p465 = scmp.ne.s32.totalorder %s460, %s462
    %p466 = scmp.eq.s32.totalorder %s33, 0
    %p467 = por %p465, %p466
    %p468 = scmp.ne.s32.totalorder %s460, %s462
    %p469 = scmp.eq.s32.totalorder %s38, 1
    %p470 = por %p468, %p469
    %p471 = scmp.ne.s32.totalorder %s462, %s463
    %p472 = scmp.eq.s32.totalorder %s38, 0
    %p473 = por %p471, %p472
    %p474 = scmp.ne.s32.totalorder %s462, %s463
    %p475 = scmp.eq.s32.totalorder %s39, 1
    %p476 = por %p474, %p475
    %p478 = scmp.ne.s32.totalorder %s463, %s477
    %p479 = scmp.eq.s32.totalorder %s39, 0
    %p480 = por %p478, %p479
    %s482 = sadd.s32 %s481, 1
    %p485 = scmp.eq.s32.totalorder %s33, 1
    %p486 = scmp.ne.s32.totalorder %s481, %s483
    %p487 = scmp.eq.s32.totalorder %s33, 0
    %p488 = por %p486, %p487
    %p489 = scmp.ne.s32.totalorder %s481, %s483
    %p490 = scmp.eq.s32.totalorder %s38, 1
    %p491 = por %p489, %p490
    %p492 = scmp.ne.s32.totalorder %s483, %s484
    %p493 = scmp.eq.s32.totalorder %s38, 0
    %p494 = por %p492, %p493
    %p495 = scmp.ne.s32.totalorder %s483, %s484
    %p496 = scmp.eq.s32.totalorder %s39, 1
    %p497 = por %p495, %p496
    %p499 = scmp.ne.s32.totalorder %s484, %s498
    %p500 = scmp.eq.s32.totalorder %s39, 0
    %p501 = por %p499, %p500
    %s503 = sadd.s32 %s502, 1
    %p506 = scmp.eq.s32.totalorder %s33, 1
    %p507 = scmp.ne.s32.totalorder %s502, %s504
    %p508 = scmp.eq.s32.totalorder %s33, 0
    %p509 = por %p507, %p508
    %p510 = scmp.ne.s32.totalorder %s502, %s504
    %p511 = scmp.eq.s32.totalorder %s38, 1
    %p512 = por %p510, %p511
    %p513 = scmp.ne.s32.totalorder %s504, %s505
    %p514 = scmp.eq.s32.totalorder %s38, 0
    %p515 = por %p513, %p514
    %p516 = scmp.ne.s32.totalorder %s504, %s505
    %p517 = scmp.eq.s32.totalorder %s39, 1
    %p518 = por %p516, %p517
    %p520 = scmp.ne.s32.totalorder %s505, %s519
    %p521 = scmp.eq.s32.totalorder %s39, 0
    %p522 = por %p520, %p521
    %s524 = sadd.s32 %s523, 1
    %p527 = scmp.eq.s32.totalorder %s33, 1
    %p528 = scmp.ne.s32.totalorder %s523, %s525
    %p529 = scmp.eq.s32.totalorder %s33, 0
    %p530 = por %p528, %p529
    %p531 = scmp.ne.s32.totalorder %s523, %s525
    %p532 = scmp.eq.s32.totalorder %s38, 1
    %p533 = por %p531, %p532
    %p534 = scmp.ne.s32.totalorder %s525, %s526
    %p535 = scmp.eq.s32.totalorder %s38, 0
    %p536 = por %p534, %p535
    %p537 = scmp.ne.s32.totalorder %s525, %s526
    %p538 = scmp.eq.s32.totalorder %s39, 1
    %p539 = por %p537, %p538
    %p541 = scmp.ne.s32.totalorder %s526, %s540
    %p542 = scmp.eq.s32.totalorder %s39, 0
    %p543 = por %p541, %p542
    %s545 = sadd.s32 %s544, 1
    %p548 = scmp.eq.s32.totalorder %s33, 1
    %p549 = scmp.ne.s32.totalorder %s544, %s546
    %p550 = scmp.eq.s32.totalorder %s33, 0
    %p551 = por %p549, %p550
    %p552 = scmp.ne.s32.totalorder %s544, %s546
    %p553 = scmp.eq.s32.totalorder %s38, 1
    %p554 = por %p552, %p553
    %p555 = scmp.ne.s32.totalorder %s546, %s547
    %p556 = scmp.eq.s32.totalorder %s38, 0
    %p557 = por %p555, %p556
    %p558 = scmp.ne.s32.totalorder %s546, %s547
    %p559 = scmp.eq.s32.totalorder %s39, 1
    %p560 = por %p558, %p559
    %p562 = scmp.ne.s32.totalorder %s547, %s561
    %p563 = scmp.eq.s32.totalorder %s39, 0
    %p564 = por %p562, %p563
    %s566 = sadd.s32 %s565, 1
    %p569 = scmp.eq.s32.totalorder %s33, 1
    %p570 = scmp.ne.s32.totalorder %s565, %s567
    %p571 = scmp.eq.s32.totalorder %s33, 0
    %p572 = por %p570, %p571
    %p573 = scmp.ne.s32.totalorder %s565, %s567
    %p574 = scmp.eq.s32.totalorder %s38, 1
    %p575 = por %p573, %p574
    %p576 = scmp.ne.s32.totalorder %s567, %s568
    %p577 = scmp.eq.s32.totalorder %s38, 0
    %p578 = por %p576, %p577
    %p579 = scmp.ne.s32.totalorder %s567, %s568
    %p580 = scmp.eq.s32.totalorder %s39, 1
    %p581 = por %p579, %p580
    %p583 = scmp.ne.s32.totalorder %s568, %s582
    %p584 = scmp.eq.s32.totalorder %s39, 0
    %p585 = por %p583, %p584
    %s587 = sadd.s32 %s586, 1
    %p590 = scmp.eq.s32.totalorder %s33, 1
    %p591 = scmp.ne.s32.totalorder %s586, %s588
    %p592 = scmp.eq.s32.totalorder %s33, 0
    %p593 = por %p591, %p592
    %p594 = scmp.ne.s32.totalorder %s586, %s588
    %p595 = scmp.eq.s32.totalorder %s38, 1
    %p596 = por %p594, %p595
    %p597 = scmp.ne.s32.totalorder %s588, %s589
    %p598 = scmp.eq.s32.totalorder %s38, 0
    %p599 = por %p597, %p598
    %p600 = scmp.ne.s32.totalorder %s588, %s589
    %p601 = scmp.eq.s32.totalorder %s39, 1
    %p602 = por %p600, %p601
    %p604 = scmp.ne.s32.totalorder %s589, %s603
    %p605 = scmp.eq.s32.totalorder %s39, 0
    %p606 = por %p604, %p605
    %s608 = sadd.s32 %s607, 1
    %p611 = scmp.eq.s32.totalorder %s33, 1
    %p612 = scmp.ne.s32.totalorder %s607, %s609
    %p613 = scmp.eq.s32.totalorder %s33, 0
    %p614 = por %p612, %p613
    %p615 = scmp.ne.s32.totalorder %s607, %s609
    %p616 = scmp.eq.s32.totalorder %s38, 1
    %p617 = por %p615, %p616
    %p618 = scmp.ne.s32.totalorder %s609, %s610
    %p619 = scmp.eq.s32.totalorder %s38, 0
    %p620 = por %p618, %p619
    %p621 = scmp.ne.s32.totalorder %s609, %s610
    %p622 = scmp.eq.s32.totalorder %s39, 1
    %p623 = por %p621, %p622
    %p625 = scmp.ne.s32.totalorder %s610, %s624
    %p626 = scmp.eq.s32.totalorder %s39, 0
    %p627 = por %p625, %p626
    %s628 = ssub.s32 %s33, %s40
    %p629 = scmp.eq.s32.totalorder %s628, 0
    %s631 = sadd.s32 %s630, 1
    %s632 = scalar_select %p629, %s630, %s631
    %p635 = pneg %p629
    %p636 = scmp.eq.s32.totalorder %s33, 1
    %p637 = por %p635, %p636
    %p638 = scmp.ne.s32.totalorder %s630, %s633
    %p639 = scmp.eq.s32.totalorder %s33, 0
    %p640 = por %p638, %p639
    %p641 = scmp.ne.s32.totalorder %s630, %s633
    %p642 = scmp.eq.s32.totalorder %s38, 1
    %p643 = por %p641, %p642
    %p644 = scmp.ne.s32.totalorder %s633, %s634
    %p645 = scmp.eq.s32.totalorder %s38, 0
    %p646 = por %p644, %p645
    %p647 = scmp.ne.s32.totalorder %s633, %s634
    %p648 = scmp.eq.s32.totalorder %s39, 1
    %p649 = por %p647, %p648
    %p651 = scmp.ne.s32.totalorder %s634, %s650
    %p652 = scmp.eq.s32.totalorder %s39, 0
    %p653 = por %p651, %p652
    %p654 = scmp.le.s32.totalorder 1, %s33
    %p655 = scmp.lt.s32.totalorder %s33, 3
    %p656 = pnand %p654, %p655
    %p657 = pneg %p656
    // Predicated region
    $region9: #{forward.2} parent=5 // pred_check
      _
    $region10: #{forward.2} parent=5 // pred_check_branch
      %659 = sbr.rel (%p656) target = $region12
    $region11: #{forward.2} parent=5 // pred_region
      %s660 = ssub.s32 %s33, 1
      // Predicated region
      $region13: #{forward.2} parent=11 // pred_check
        %p661 = pneg %p158
      $region14: #{forward.2} parent=11 // pred_check_branch
        %663 = sbr.rel (%p661) target = $region16
      $region15: #{forward.2} parent=11 // pred_region
        _
      $region16: #{forward.2} parent=11 // pred_fallthru
        _
      // Predicated region
      $region17: #{forward.2} parent=11 // pred_check
        %p664 = pneg %p179
      $region18: #{forward.2} parent=11 // pred_check_branch
        %666 = sbr.rel (%p664) target = $region20
      $region19: #{forward.2} parent=11 // pred_region
        _
      $region20: #{forward.2} parent=11 // pred_fallthru
        _
      // Predicated region
      $region21: #{forward.2} parent=11 // pred_check
        %p667 = pneg %p200
      $region22: #{forward.2} parent=11 // pred_check_branch
        %669 = sbr.rel (%p667) target = $region24
      $region23: #{forward.2} parent=11 // pred_region
        _
      $region24: #{forward.2} parent=11 // pred_fallthru
        _
      // Predicated region
      $region25: #{forward.2} parent=11 // pred_check
        %p670 = pneg %p221
      $region26: #{forward.2} parent=11 // pred_check_branch
        %672 = sbr.rel (%p670) target = $region28
      $region27: #{forward.2} parent=11 // pred_region
        _
      $region28: #{forward.2} parent=11 // pred_fallthru
        _
      // Predicated region
      $region29: #{forward.2} parent=11 // pred_check
        %p673 = pneg %p242
      $region30: #{forward.2} parent=11 // pred_check_branch
        %675 = sbr.rel (%p673) target = $region32
      $region31: #{forward.2} parent=11 // pred_region
        _
      $region32: #{forward.2} parent=11 // pred_fallthru
        _
      // Predicated region
      $region33: #{forward.2} parent=11 // pred_check
        %p676 = pneg %p263
      $region34: #{forward.2} parent=11 // pred_check_branch
        %678 = sbr.rel (%p676) target = $region36
      $region35: #{forward.2} parent=11 // pred_region
        _
      $region36: #{forward.2} parent=11 // pred_fallthru
        _
      // Predicated region
      $region37: #{forward.2} parent=11 // pred_check
        %p679 = pneg %p284
      $region38: #{forward.2} parent=11 // pred_check_branch
        %681 = sbr.rel (%p679) target = $region40
      $region39: #{forward.2} parent=11 // pred_region
        _
      $region40: #{forward.2} parent=11 // pred_fallthru
        _
      // Predicated region
      $region41: #{forward.2} parent=11 // pred_check
        %p682 = pneg %p305
      $region42: #{forward.2} parent=11 // pred_check_branch
        %684 = sbr.rel (%p682) target = $region44
      $region43: #{forward.2} parent=11 // pred_region
        _
      $region44: #{forward.2} parent=11 // pred_fallthru
        _
      // Predicated region
      $region45: #{forward.2} parent=11 // pred_check
        %p685 = pneg %p326
      $region46: #{forward.2} parent=11 // pred_check_branch
        %687 = sbr.rel (%p685) target = $region48
      $region47: #{forward.2} parent=11 // pred_region
        _
      $region48: #{forward.2} parent=11 // pred_fallthru
        _
      // Predicated region
      $region49: #{forward.2} parent=11 // pred_check
        %p688 = pneg %p347
      $region50: #{forward.2} parent=11 // pred_check_branch
        %690 = sbr.rel (%p688) target = $region52
      $region51: #{forward.2} parent=11 // pred_region
        _
      $region52: #{forward.2} parent=11 // pred_fallthru
        _
      // Predicated region
      $region53: #{forward.2} parent=11 // pred_check
        %p691 = pneg %p368
      $region54: #{forward.2} parent=11 // pred_check_branch
        %693 = sbr.rel (%p691) target = $region56
      $region55: #{forward.2} parent=11 // pred_region
        _
      $region56: #{forward.2} parent=11 // pred_fallthru
        _
      // Predicated region
      $region57: #{forward.2} parent=11 // pred_check
        %p694 = pneg %p389
      $region58: #{forward.2} parent=11 // pred_check_branch
        %696 = sbr.rel (%p694) target = $region60
      $region59: #{forward.2} parent=11 // pred_region
        _
      $region60: #{forward.2} parent=11 // pred_fallthru
        _
      // Predicated region
      $region61: #{forward.2} parent=11 // pred_check
        %p697 = pneg %p410
      $region62: #{forward.2} parent=11 // pred_check_branch
        %699 = sbr.rel (%p697) target = $region64
      $region63: #{forward.2} parent=11 // pred_region
        _
      $region64: #{forward.2} parent=11 // pred_fallthru
        _
      // Predicated region
      $region65: #{forward.2} parent=11 // pred_check
        %p700 = pneg %p431
      $region66: #{forward.2} parent=11 // pred_check_branch
        %702 = sbr.rel (%p700) target = $region68
      $region67: #{forward.2} parent=11 // pred_region
        _
      $region68: #{forward.2} parent=11 // pred_fallthru
        _
      // Predicated region
      $region69: #{forward.2} parent=11 // pred_check
        %p703 = pneg %p452
      $region70: #{forward.2} parent=11 // pred_check_branch
        %705 = sbr.rel (%p703) target = $region72
      $region71: #{forward.2} parent=11 // pred_region
        _
      $region72: #{forward.2} parent=11 // pred_fallthru
        _
      // Predicated region
      $region73: #{forward.2} parent=11 // pred_check
        %p706 = pneg %p473
      $region74: #{forward.2} parent=11 // pred_check_branch
        %708 = sbr.rel (%p706) target = $region76
      $region75: #{forward.2} parent=11 // pred_region
        _
      $region76: #{forward.2} parent=11 // pred_fallthru
        _
      // Predicated region
      $region77: #{forward.2} parent=11 // pred_check
        %p709 = pneg %p494
      $region78: #{forward.2} parent=11 // pred_check_branch
        %711 = sbr.rel (%p709) target = $region80
      $region79: #{forward.2} parent=11 // pred_region
        _
      $region80: #{forward.2} parent=11 // pred_fallthru
        _
      // Predicated region
      $region81: #{forward.2} parent=11 // pred_check
        %p712 = pneg %p515
      $region82: #{forward.2} parent=11 // pred_check_branch
        %714 = sbr.rel (%p712) target = $region84
      $region83: #{forward.2} parent=11 // pred_region
        _
      $region84: #{forward.2} parent=11 // pred_fallthru
        _
      // Predicated region
      $region85: #{forward.2} parent=11 // pred_check
        %p715 = pneg %p536
      $region86: #{forward.2} parent=11 // pred_check_branch
        %717 = sbr.rel (%p715) target = $region88
      $region87: #{forward.2} parent=11 // pred_region
        _
      $region88: #{forward.2} parent=11 // pred_fallthru
        _
      // Predicated region
      $region89: #{forward.2} parent=11 // pred_check
        %p718 = pneg %p557
      $region90: #{forward.2} parent=11 // pred_check_branch
        %720 = sbr.rel (%p718) target = $region92
      $region91: #{forward.2} parent=11 // pred_region
        _
      $region92: #{forward.2} parent=11 // pred_fallthru
        _
      // Predicated region
      $region93: #{forward.2} parent=11 // pred_check
        %p721 = pneg %p578
      $region94: #{forward.2} parent=11 // pred_check_branch
        %723 = sbr.rel (%p721) target = $region96
      $region95: #{forward.2} parent=11 // pred_region
        _
      $region96: #{forward.2} parent=11 // pred_fallthru
        _
      // Predicated region
      $region97: #{forward.2} parent=11 // pred_check
        %p724 = pneg %p599
      $region98: #{forward.2} parent=11 // pred_check_branch
        %726 = sbr.rel (%p724) target = $region100
      $region99: #{forward.2} parent=11 // pred_region
        _
      $region100: #{forward.2} parent=11 // pred_fallthru
        _
      // Predicated region
      $region101: #{forward.2} parent=11 // pred_check
        %p727 = pneg %p620
      $region102: #{forward.2} parent=11 // pred_check_branch
        %729 = sbr.rel (%p727) target = $region104
      $region103: #{forward.2} parent=11 // pred_region
        _
      $region104: #{forward.2} parent=11 // pred_fallthru
        _
    $region12: #{forward.2} parent=5 // pred_fallthru
      _
    %p730 = scmp.lt.s32.totalorder %s33, 2
    // Predicated region
    $region105: #{forward.2} parent=5 // pred_check
      %p731 = pneg %p730
    $region106: #{forward.2} parent=5 // pred_check_branch
      %733 = sbr.rel (%p731) target = $region108
    $region107: #{forward.2} parent=5 // pred_region
      // Predicated region
      $region109: #{forward.2} parent=107 // pred_check
        %p734 = pneg %p53
      $region110: #{forward.2} parent=107 // pred_check_branch
        %736 = sbr.rel (%p734) target = $region112
      $region111: #{forward.2} parent=107 // pred_region
        %p737 = scmp.lt.s32.totalorder %s33, 1
        %s738 = scalar_select %p737, %s33, 1
        %s739 = smul.addr %s738, 8
        %s740 = scalar_lea.vmem %s0, %s739
      $region112: #{forward.2} parent=107 // pred_fallthru
        _
      // Predicated region
      $region113: #{forward.2} parent=107 // pred_check
        %p741 = pneg %p79
      $region114: #{forward.2} parent=107 // pred_check_branch
        %743 = sbr.rel (%p741) target = $region116
      $region115: #{forward.2} parent=107 // pred_region
        %p744 = scmp.lt.s32.totalorder %s33, 1
        %s745 = scalar_select %p744, %s33, 1
        %s746 = smul.addr %s745, 2
        %s747 = smul.addr %s746, 8
        %s748 = scalar_lea.vmem %s1, %s747
      $region116: #{forward.2} parent=107 // pred_fallthru
        _
      // Predicated region
      $region117: #{forward.2} parent=107 // pred_check
        %p749 = pneg %p105
      $region118: #{forward.2} parent=107 // pred_check_branch
        %751 = sbr.rel (%p749) target = $region120
      $region119: #{forward.2} parent=107 // pred_region
        %p752 = scmp.lt.s32.totalorder %s33, 1
        %s753 = scalar_select %p752, %s33, 1
        %s754 = smul.addr %s753, 8
        %s755 = scalar_lea.vmem %s2, %s754
      $region120: #{forward.2} parent=107 // pred_fallthru
        _
      // Predicated region
      $region121: #{forward.2} parent=107 // pred_check
        %p756 = pneg %p131
      $region122: #{forward.2} parent=107 // pred_check_branch
        %758 = sbr.rel (%p756) target = $region124
      $region123: #{forward.2} parent=107 // pred_region
        %p759 = scmp.lt.s32.totalorder %s33, 1
        %s760 = scalar_select %p759, %s33, 1
        %s761 = smul.addr %s760, 8
        %s762 = scalar_lea.vmem %s3, %s761
      $region124: #{forward.2} parent=107 // pred_fallthru
        _
    $region108: #{forward.2} parent=5 // pred_fallthru
      _
    %p763 = scmp.le.s32.totalorder 1, %s33
    %p764 = scmp.lt.s32.totalorder %s33, 3
    %p765 = pnand %p763, %p764
    %p766 = pneg %p765
    // Predicated region
    $region125: #{forward.2} parent=5 // pred_check
      _
    $region126: #{forward.2} parent=5 // pred_check_branch
      %768 = sbr.rel (%p765) target = $region128
    $region127: #{forward.2} parent=5 // pred_region
      %s769 = ssub.s32 %s33, 1
      %p770 = scmp.lt.s32.totalorder %s38, 1
      %s771 = scalar_select %p770, %s38, 1
      %s772 = smul.addr %s771, 8
      %s773 = scalar_lea.vmem %s0, %s772
      %p774 = pneg %p59
      %p775 = pneg %p56
      %p776 = scmp.lt.s32.totalorder %s38, 1
      %s777 = scalar_select %p776, %s38, 1
      %s778 = smul.addr %s777, 2
      %s779 = smul.addr %s778, 8
      %s780 = scalar_lea.vmem %s1, %s779
      %p781 = pneg %p85
      %p782 = pneg %p82
      %p783 = scmp.lt.s32.totalorder %s38, 1
      %s784 = scalar_select %p783, %s38, 1
      %s785 = smul.addr %s784, 8
      %s786 = scalar_lea.vmem %s2, %s785
      %p787 = pneg %p111
      %p788 = pneg %p108
      %p789 = scmp.lt.s32.totalorder %s38, 1
      %s790 = scalar_select %p789, %s38, 1
      %s791 = smul.addr %s790, 8
      %s792 = scalar_lea.vmem %s3, %s791
      %p793 = pneg %p137
      %p794 = pneg %p134
      %p795 = pneg %p158
      %p796 = pneg %p155
      %p797 = pneg %p179
      %p798 = pneg %p176
      %p799 = pneg %p200
      %p800 = pneg %p197
      %p801 = pneg %p221
      %p802 = pneg %p218
      %p803 = pneg %p242
      %p804 = pneg %p239
      %p805 = pneg %p263
      %p806 = pneg %p260
      %p807 = pneg %p284
      %p808 = pneg %p281
      %p809 = pneg %p305
      %p810 = pneg %p302
      %p811 = pneg %p326
      %p812 = pneg %p323
      %p813 = pneg %p347
      %p814 = pneg %p344
      %p815 = pneg %p368
      %p816 = pneg %p365
      %p817 = pneg %p389
      %p818 = pneg %p386
      %p819 = pneg %p410
      %p820 = pneg %p407
      %p821 = pneg %p431
      %p822 = pneg %p428
      %p823 = pneg %p452
      %p824 = pneg %p449
      %p825 = pneg %p473
      %p826 = pneg %p470
      %p827 = pneg %p494
      %p828 = pneg %p491
      %p829 = pneg %p515
      %p830 = pneg %p512
      %p831 = pneg %p536
      %p832 = pneg %p533
      %p833 = pneg %p557
      %p834 = pneg %p554
      %p835 = pneg %p578
      %p836 = pneg %p575
      %p837 = pneg %p599
      %p838 = pneg %p596
      %p839 = pneg %p620
      %p840 = pneg %p617
      %p841 = pneg %p646
      %p842 = pneg %p643
      %p843 = scmp.lt.s32.totalorder %s38, 1
      %s844 = scalar_select %p843, %s38, 1
      %s845 = smul.addr %s844, 8
      %s846 = scalar_lea.vmem %s27, %s845
      %p847 = scmp.lt.s32.totalorder %s38, 1
      %s848 = scalar_select %p847, %s38, 1
      %s849 = smul.addr %s848, 8
      %s850 = scalar_lea.vmem %s0, %s849
      %p851 = scmp.lt.s32.totalorder %s38, 1
      %s852 = scalar_select %p851, %s38, 1
      %s853 = smul.addr %s852, 2
      %s854 = smul.addr %s853, 8
      %s855 = scalar_lea.vmem %s1, %s854
      %p856 = scmp.lt.s32.totalorder %s38, 1
      %s857 = scalar_select %p856, %s38, 1
      %s858 = smul.addr %s857, 8
      %s859 = scalar_lea.vmem %s2, %s858
      %p860 = scmp.lt.s32.totalorder %s38, 1
      %s861 = scalar_select %p860, %s38, 1
      %s862 = smul.addr %s861, 8
      %s863 = scalar_lea.vmem %s3, %s862
      %p864 = scmp.lt.s32.totalorder %s38, 1
      %s865 = scalar_select %p864, %s38, 1
      %s866 = smul.addr %s865, 8
      %s867 = scalar_lea.vmem %s27, %s866
      %v868 = vld [vmem:[%s850] sm:$0xff]
      %v869 = vld [vmem:[%s4] sm:$0xff]
      %v870 = vld [vmem:[%s4 + $0x8] sm:$0xff]
      %v871 = vld [vmem:[%s4 + $0x10] sm:$0xff]
      %v872 = vld [vmem:[%s4 + $0x18] sm:$0xff]
      %v873 = vld [vmem:[%s4 + $0x20] sm:$0xff]
      %v874 = vld [vmem:[%s5] sm:$0x1]
      %v876 = vlaneseq
      %v877 = vshrl.u32 %v876, 7
      %v878 = vsub.s32 0, %v877
      %v879 = vrot.slane %v874, %v878
      %vm881 = vcmask 326656
      %v883 = vsel %vm881, %v868, 0
      %885 = vmatprep.subr.mxu0 0.0
      %886 = vmatpush1.msra.mxu0 %v869
      %887 = vmatprep.subr.mxu0 0.0
      %888 = vmatpush1.msra.mxu0 %v870
      %889 = vmatprep.subr.mxu0 0.0
      %890 = vmatpush1.msra.mxu0 %v871
      %891 = vmatprep.subr.mxu0 0.0
      %892 = vmatpush1.msra.mxu0 %v872
      %893 = vmatprep.subr.mxu0 0.0
      %894 = vmatpush1.msra.mxu0 %v873
      %895 = vmatprep.subr.mxu0 0.0
      %896 = vmatpush1.msra.mxu0 0.0
      %897 = vmatprep.subr.mxu0 0.0
      %898 = vmatpush1.msra.mxu0 0.0
      %899 = vmatprep.subr.mxu0 0.0
      %900 = vmatpush1.msra.mxu0 0.0
      %901 = vmatprep.subr.mxu0 0.0
      %902 = vmatpush1.msra.mxu0 0.0
      %903 = vmatprep.subr.mxu0 0.0
      %904 = vmatpush1.msra.mxu0 0.0
      %905 = vmatprep.subr.mxu0 0.0
      %906 = vmatpush1.msra.mxu0 0.0
      %907 = vmatprep.subr.mxu0 0.0
      %908 = vmatpush1.msra.mxu0 0.0
      %909 = vmatprep.subr.mxu0 0.0
      %910 = vmatpush1.msra.mxu0 0.0
      %911 = vmatprep.subr.mxu0 0.0
      %912 = vmatpush1.msra.mxu0 0.0
      %913 = vmatprep.subr.mxu0 0.0
      %914 = vmatpush1.msra.mxu0 0.0
      %915 = vmatprep.subr.mxu0 0.0
      %916 = vmatpush1.msra.mxu0 0.0
      %917 = vmatprep.subr.mxu0 0.0
      %918 = vmatpush1.msra.mxu0 0.0
      %919 = vmatprep.subr.mxu0 0.0
      %920 = vmatpush1.msra.mxu0 0.0
      %921 = vmatprep.subr.mxu0 0.0
      %922 = vmatpush1.msra.mxu0 0.0
      %923 = vmatprep.subr.mxu0 0.0
      %924 = vmatpush1.msra.mxu0 0.0
      %925 = vmatprep.subr.mxu0 0.0
      %926 = vmatpush1.msra.mxu0 0.0
      %927 = vmatprep.subr.mxu0 0.0
      %928 = vmatpush1.msra.mxu0 0.0
      %929 = vmatprep.subr.mxu0 0.0
      %930 = vmatpush1.msra.mxu0 0.0
      %931 = vmatprep.subr.mxu0 0.0
      %932 = vmatpush1.msra.mxu0 0.0
      %933 = vmatprep.subr.mxu0 0.0
      %934 = vmatpush1.msra.mxu0 0.0
      %935 = vmatprep.subr.mxu0 0.0
      %936 = vmatpush1.msra.mxu0 0.0
      %937 = vmatprep.subr.mxu0 0.0
      %938 = vmatpush1.msra.mxu0 0.0
      %939 = vmatprep.subr.mxu0 0.0
      %940 = vmatpush1.msra.mxu0 0.0
      %941 = vmatprep.subr.mxu0 0.0
      %942 = vmatpush1.msra.mxu0 0.0
      %943 = vmatprep.subr.mxu0 0.0
      %944 = vmatpush1.msra.mxu0 0.0
      %945 = vmatprep.subr.mxu0 0.0
      %946 = vmatpush1.msra.mxu0 0.0
      %947 = vmatprep.subr.mxu0 0.0
      %948 = vmatpush1.msra.mxu0 0.0
      %949 = vmatprep.mubr.f32.mxu0 0.0
      %950 = vmatmul.mubr.f32.gmra.mrb[0].mxu0 %v883
      %v951 = vpop.f32.mrb[0].mxu0
      %v952 = vadd.f32 %v879, %v951
      %v953 = vpop.f32.mrb[0].mxu0
      %954 = vdwg.mxu0
      %v955 = vld [vmem:[%s6] sm:$0x1]
      %v956 = vld [vmem:[%s7] sm:$0x1]
      %vm957 = vcmask 130048
      %v958 = vsel %vm957, %v952, 0.0
      %959 = vadd.xlane.f32.xlu0 %v958
      %v960 = vpop.xlane.xlu0 %959
      %v961 = vrcp.pop 16.0
      %v962 = vmul.f32 %v960, %v961
      %v963 = vsub.f32 %v952, %v962
      %v964 = vmul.f32 %v963, %v963
      %v965 = vsel %vm957, %v964, 0.0
      %966 = vadd.xlane.f32.xlu0 %v965
      %v967 = vpop.xlane.xlu0 %966
      %v968 = vmul.f32 %v967, %v961
      %v969 = vadd.f32 %v968, 1e-05
      %v970 = vrsqrt.pop %v969
      %v971 = vmul.f32 %v963, %v970
      %v973 = vlaneseq
      %v974 = vshrl.u32 %v973, 7
      %v975 = vsub.s32 0, %v974
      %v976 = vrot.slane %v955, %v975
      %v978 = vmul.f32 %v971, %v976
      %v980 = vlaneseq
      %v981 = vshrl.u32 %v980, 7
      %v982 = vsub.s32 0, %v981
      %v983 = vrot.slane %v956, %v982
      %v985 = vadd.f32 %v978, %v983
      %v986 = vxor.u32 %v985, 2147483648
      %v987 = vmul.f32 %v986, 1.442695
      %v988 = vpow.pop %v987
      %v989 = vadd.f32 %v988, 1.0
      %v990 = vrcp.pop %v989
      %v991 = vmul.f32 1.0, %v990
      %v992 = vmul.f32 %v985, %v991
      %v993 = vmul.f32 %v992, 1.6666666
      %v994 = vld [vmem:[%s8] sm:$0xff]
      %v995 = vld [vmem:[%s8 + $0x8] sm:$0xff]
      %v996 = vld [vmem:[%s9] sm:$0x1]
      %v998 = vlaneseq
      %v999 = vshrl.u32 %v998, 7
      %v1000 = vsub.s32 0, %v999
      %v1001 = vrot.slane %v996, %v1000
      %v1004 = vsel %vm957, %v993, 0
      %1006 = vmatprep.subr.mxu0 0.0
      %1007 = vmatpush1.msra.mxu0 %v994
      %1008 = vmatprep.subr.mxu0 0.0
      %1009 = vmatpush1.msra.mxu0 %v995
      %1010 = vmatprep.subr.mxu0 0.0
      %1011 = vmatpush1.msra.mxu0 0.0
      %1012 = vmatprep.subr.mxu0 0.0
      %1013 = vmatpush1.msra.mxu0 0.0
      %1014 = vmatprep.subr.mxu0 0.0
      %1015 = vmatpush1.msra.mxu0 0.0
      %1016 = vmatprep.subr.mxu0 0.0
      %1017 = vmatpush1.msra.mxu0 0.0
      %1018 = vmatprep.subr.mxu0 0.0
      %1019 = vmatpush1.msra.mxu0 0.0
      %1020 = vmatprep.subr.mxu0 0.0
      %1021 = vmatpush1.msra.mxu0 0.0
      %1022 = vmatprep.subr.mxu0 0.0
      %1023 = vmatpush1.msra.mxu0 0.0
      %1024 = vmatprep.subr.mxu0 0.0
      %1025 = vmatpush1.msra.mxu0 0.0
      %1026 = vmatprep.subr.mxu0 0.0
      %1027 = vmatpush1.msra.mxu0 0.0
      %1028 = vmatprep.subr.mxu0 0.0
      %1029 = vmatpush1.msra.mxu0 0.0
      %1030 = vmatprep.subr.mxu0 0.0
      %1031 = vmatpush1.msra.mxu0 0.0
      %1032 = vmatprep.subr.mxu0 0.0
      %1033 = vmatpush1.msra.mxu0 0.0
      %1034 = vmatprep.subr.mxu0 0.0
      %1035 = vmatpush1.msra.mxu0 0.0
      %1036 = vmatprep.subr.mxu0 0.0
      %1037 = vmatpush1.msra.mxu0 0.0
      %1038 = vmatprep.subr.mxu0 0.0
      %1039 = vmatpush1.msra.mxu0 0.0
      %1040 = vmatprep.subr.mxu0 0.0
      %1041 = vmatpush1.msra.mxu0 0.0
      %1042 = vmatprep.subr.mxu0 0.0
      %1043 = vmatpush1.msra.mxu0 0.0
      %1044 = vmatprep.subr.mxu0 0.0
      %1045 = vmatpush1.msra.mxu0 0.0
      %1046 = vmatprep.subr.mxu0 0.0
      %1047 = vmatpush1.msra.mxu0 0.0
      %1048 = vmatprep.subr.mxu0 0.0
      %1049 = vmatpush1.msra.mxu0 0.0
      %1050 = vmatprep.subr.mxu0 0.0
      %1051 = vmatpush1.msra.mxu0 0.0
      %1052 = vmatprep.subr.mxu0 0.0
      %1053 = vmatpush1.msra.mxu0 0.0
      %1054 = vmatprep.subr.mxu0 0.0
      %1055 = vmatpush1.msra.mxu0 0.0
      %1056 = vmatprep.subr.mxu0 0.0
      %1057 = vmatpush1.msra.mxu0 0.0
      %1058 = vmatprep.subr.mxu0 0.0
      %1059 = vmatpush1.msra.mxu0 0.0
      %1060 = vmatprep.subr.mxu0 0.0
      %1061 = vmatpush1.msra.mxu0 0.0
      %1062 = vmatprep.subr.mxu0 0.0
      %1063 = vmatpush1.msra.mxu0 0.0
      %1064 = vmatprep.subr.mxu0 0.0
      %1065 = vmatpush1.msra.mxu0 0.0
      %1066 = vmatprep.subr.mxu0 0.0
      %1067 = vmatpush1.msra.mxu0 0.0
      %1068 = vmatprep.subr.mxu0 0.0
      %1069 = vmatpush1.msra.mxu0 0.0
      %1070 = vmatprep.mubr.f32.mxu0 0.0
      %1071 = vmatmul.mubr.f32.gmra.mrb[0].mxu0 %v1004
      %v1072 = vpop.f32.mrb[0].mxu0
      %v1073 = vadd.f32 %v1001, %v1072
      %v1074 = vpop.f32.mrb[0].mxu0
      %1075 = vdwg.mxu0
      %v1076 = vld [vmem:[%s10] sm:$0x1]
      %v1077 = vld [vmem:[%s11] sm:$0x1]
      %v1078 = vsel %vm957, %v1073, 0.0
      %1079 = vadd.xlane.f32.xlu0 %v1078
      %v1080 = vpop.xlane.xlu0 %1079
      %v1081 = vmul.f32 %v1080, %v961
      %v1082 = vsub.f32 %v1073, %v1081
      %v1083 = vmul.f32 %v1082, %v1082
      %v1084 = vsel %vm957, %v1083, 0.0
      %1085 = vadd.xlane.f32.xlu0 %v1084
      %v1086 = vpop.xlane.xlu0 %1085
      %v1087 = vmul.f32 %v1086, %v961
      %v1088 = vadd.f32 %v1087, 1e-05
      %v1089 = vrsqrt.pop %v1088
      %v1090 = vmul.f32 %v1082, %v1089
      %v1092 = vlaneseq
      %v1093 = vshrl.u32 %v1092, 7
      %v1094 = vsub.s32 0, %v1093
      %v1095 = vrot.slane %v1076, %v1094
      %v1097 = vmul.f32 %v1090, %v1095
      %v1099 = vlaneseq
      %v1100 = vshrl.u32 %v1099, 7
      %v1101 = vsub.s32 0, %v1100
      %v1102 = vrot.slane %v1077, %v1101
      %v1104 = vadd.f32 %v1097, %v1102
      %v1105 = vxor.u32 %v1104, 2147483648
      %v1106 = vmul.f32 %v1105, 1.442695
      %v1107 = vpow.pop %v1106
      %v1108 = vadd.f32 %v1107, 1.0
      %v1109 = vrcp.pop %v1108
      %v1110 = vmul.f32 1.0, %v1109
      %v1111 = vmul.f32 %v1104, %v1110
      %v1112 = vmul.f32 %v1111, 1.6666666
      %v1113 = vld [vmem:[%s12] sm:$0xff]
      %v1114 = vld [vmem:[%s12 + $0x8] sm:$0xff]
      %v1115 = vld [vmem:[%s13] sm:$0x1]
      %v1117 = vlaneseq
      %v1118 = vshrl.u32 %v1117, 7
      %v1119 = vsub.s32 0, %v1118
      %v1120 = vrot.slane %v1115, %v1119
      %v1123 = vsel %vm957, %v1112, 0
      %1125 = vmatprep.subr.mxu0 0.0
      %1126 = vmatpush1.msra.mxu0 %v1113
      %1127 = vmatprep.subr.mxu0 0.0
      %1128 = vmatpush1.msra.mxu0 %v1114
      %1129 = vmatprep.subr.mxu0 0.0
      %1130 = vmatpush1.msra.mxu0 0.0
      %1131 = vmatprep.subr.mxu0 0.0
      %1132 = vmatpush1.msra.mxu0 0.0
      %1133 = vmatprep.subr.mxu0 0.0
      %1134 = vmatpush1.msra.mxu0 0.0
      %1135 = vmatprep.subr.mxu0 0.0
      %1136 = vmatpush1.msra.mxu0 0.0
      %1137 = vmatprep.subr.mxu0 0.0
      %1138 = vmatpush1.msra.mxu0 0.0
      %1139 = vmatprep.subr.mxu0 0.0
      %1140 = vmatpush1.msra.mxu0 0.0
      %1141 = vmatprep.subr.mxu0 0.0
      %1142 = vmatpush1.msra.mxu0 0.0
      %1143 = vmatprep.subr.mxu0 0.0
      %1144 = vmatpush1.msra.mxu0 0.0
      %1145 = vmatprep.subr.mxu0 0.0
      %1146 = vmatpush1.msra.mxu0 0.0
      %1147 = vmatprep.subr.mxu0 0.0
      %1148 = vmatpush1.msra.mxu0 0.0
      %1149 = vmatprep.subr.mxu0 0.0
      %1150 = vmatpush1.msra.mxu0 0.0
      %1151 = vmatprep.subr.mxu0 0.0
      %1152 = vmatpush1.msra.mxu0 0.0
      %1153 = vmatprep.subr.mxu0 0.0
      %1154 = vmatpush1.msra.mxu0 0.0
      %1155 = vmatprep.subr.mxu0 0.0
      %1156 = vmatpush1.msra.mxu0 0.0
      %1157 = vmatprep.subr.mxu0 0.0
      %1158 = vmatpush1.msra.mxu0 0.0
      %1159 = vmatprep.subr.mxu0 0.0
      %1160 = vmatpush1.msra.mxu0 0.0
      %1161 = vmatprep.subr.mxu0 0.0
      %1162 = vmatpush1.msra.mxu0 0.0
      %1163 = vmatprep.subr.mxu0 0.0
      %1164 = vmatpush1.msra.mxu0 0.0
      %1165 = vmatprep.subr.mxu0 0.0
      %1166 = vmatpush1.msra.mxu0 0.0
      %1167 = vmatprep.subr.mxu0 0.0
      %1168 = vmatpush1.msra.mxu0 0.0
      %1169 = vmatprep.subr.mxu0 0.0
      %1170 = vmatpush1.msra.mxu0 0.0
      %1171 = vmatprep.subr.mxu0 0.0
      %1172 = vmatpush1.msra.mxu0 0.0
      %1173 = vmatprep.subr.mxu0 0.0
      %1174 = vmatpush1.msra.mxu0 0.0
      %1175 = vmatprep.subr.mxu0 0.0
      %1176 = vmatpush1.msra.mxu0 0.0
      %1177 = vmatprep.subr.mxu0 0.0
      %1178 = vmatpush1.msra.mxu0 0.0
      %1179 = vmatprep.subr.mxu0 0.0
      %1180 = vmatpush1.msra.mxu0 0.0
      %1181 = vmatprep.subr.mxu0 0.0
      %1182 = vmatpush1.msra.mxu0 0.0
      %1183 = vmatprep.subr.mxu0 0.0
      %1184 = vmatpush1.msra.mxu0 0.0
      %1185 = vmatprep.subr.mxu0 0.0
      %1186 = vmatpush1.msra.mxu0 0.0
      %1187 = vmatprep.subr.mxu0 0.0
      %1188 = vmatpush1.msra.mxu0 0.0
      %1189 = vmatprep.mubr.f32.mxu0 0.0
      %1190 = vmatmul.mubr.f32.gmra.mrb[0].mxu0 %v1123
      %v1191 = vpop.f32.mrb[0].mxu0
      %v1192 = vadd.f32 %v1120, %v1191
      %v1193 = vpop.f32.mrb[0].mxu0
      %1194 = vdwg.mxu0
      %v1195 = vld [vmem:[%s855] sm:$0xff]
      %v1196 = vld [vmem:[%s855 + $0x8] sm:$0xff]
      %v1197 = vld [vmem:[%s859] sm:$0xff]
      %1199 = vset.pattern.permute.xlu0 0
      %1200 = vperm.xlu0 %1199, %v1197
      %v1201 = vpop.permute.xlu0 %1200
      %v1203 = vmul.f32 %v1201, %v1195
      %1204 = vset.pattern.permute.xlu0 1
      %1205 = vperm.xlu0 %1204, %v1197
      %v1206 = vpop.permute.xlu0 %1205
      %v1208 = vmul.f32 %v1206, %v1195
      %1210 = vrot.lane.b32.xlu0 %v1208, 112
      %v1211 = vpop.permute.xlu0 %1210
      %v1213 = vadd.f32 %v1203, %v1211
      %1214 = vset.pattern.permute.xlu0 2
      %1215 = vperm.xlu0 %1214, %v1197
      %v1216 = vpop.permute.xlu0 %1215
      %v1218 = vmul.f32 %v1216, %v1195
      %1220 = vrot.lane.b32.xlu0 %v1218, 96
      %v1221 = vpop.permute.xlu0 %1220
      %v1223 = vadd.f32 %v1213, %v1221
      %1224 = vset.pattern.permute.xlu0 3
      %1225 = vperm.xlu0 %1224, %v1197
      %v1226 = vpop.permute.xlu0 %1225
      %v1228 = vmul.f32 %v1226, %v1195
      %1230 = vrot.lane.b32.xlu0 %v1228, 80
      %v1231 = vpop.permute.xlu0 %1230
      %v1233 = vadd.f32 %v1223, %v1231
      %1234 = vset.pattern.permute.xlu0 4
      %1235 = vperm.xlu0 %1234, %v1197
      %v1236 = vpop.permute.xlu0 %1235
      %v1238 = vmul.f32 %v1236, %v1195
      %1240 = vrot.lane.b32.xlu0 %v1238, 64
      %v1241 = vpop.permute.xlu0 %1240
      %v1243 = vadd.f32 %v1233, %v1241
      %1244 = vset.pattern.permute.xlu0 5
      %1245 = vperm.xlu0 %1244, %v1197
      %v1246 = vpop.permute.xlu0 %1245
      %v1248 = vmul.f32 %v1246, %v1195
      %1250 = vrot.lane.b32.xlu0 %v1248, 48
      %v1251 = vpop.permute.xlu0 %1250
      %v1253 = vadd.f32 %v1243, %v1251
      %1254 = vset.pattern.permute.xlu0 6
      %1255 = vperm.xlu0 %1254, %v1197
      %v1256 = vpop.permute.xlu0 %1255
      %v1258 = vmul.f32 %v1256, %v1195
      %1260 = vrot.lane.b32.xlu0 %v1258, 32
      %v1261 = vpop.permute.xlu0 %1260
      %v1263 = vadd.f32 %v1253, %v1261
      %1264 = vset.pattern.permute.xlu0 7
      %1265 = vperm.xlu0 %1264, %v1197
      %v1266 = vpop.permute.xlu0 %1265
      %v1268 = vmul.f32 %v1266, %v1195
      %1270 = vrot.lane.b32.xlu0 %v1268, 16
      %v1271 = vpop.permute.xlu0 %1270
      %v1273 = vadd.f32 %v1263, %v1271
      %1274 = vset.pattern.permute.xlu0 8
      %1275 = vperm.xlu0 %1274, %v1197
      %v1276 = vpop.permute.xlu0 %1275
      %v1278 = vmul.f32 %v1276, %v1196
      %v1279 = vadd.f32 %v1273, %v1278
      %1280 = vset.pattern.permute.xlu0 9
      %1281 = vperm.xlu0 %1280, %v1197
      %v1282 = vpop.permute.xlu0 %1281
      %v1284 = vmul.f32 %v1282, %v1195
      %1285 = vset.pattern.permute.xlu0 10
      %1286 = vperm.xlu0 %1285, %v1197
      %v1287 = vpop.permute.xlu0 %1286
      %v1289 = vmul.f32 %v1287, %v1195
      %1291 = vrot.lane.b32.xlu0 %v1289, 112
      %v1292 = vpop.permute.xlu0 %1291
      %v1294 = vadd.f32 %v1284, %v1292
      %1295 = vset.pattern.permute.xlu0 11
      %1296 = vperm.xlu0 %1295, %v1197
      %v1297 = vpop.permute.xlu0 %1296
      %v1299 = vmul.f32 %v1297, %v1195
      %1301 = vrot.lane.b32.xlu0 %v1299, 96
      %v1302 = vpop.permute.xlu0 %1301
      %v1304 = vadd.f32 %v1294, %v1302
      %1305 = vset.pattern.permute.xlu0 12
      %1306 = vperm.xlu0 %1305, %v1197
      %v1307 = vpop.permute.xlu0 %1306
      %v1309 = vmul.f32 %v1307, %v1195
      %1311 = vrot.lane.b32.xlu0 %v1309, 80
      %v1312 = vpop.permute.xlu0 %1311
      %v1314 = vadd.f32 %v1304, %v1312
      %1315 = vset.pattern.permute.xlu0 13
      %1316 = vperm.xlu0 %1315, %v1197
      %v1317 = vpop.permute.xlu0 %1316
      %v1319 = vmul.f32 %v1317, %v1195
      %1321 = vrot.lane.b32.xlu0 %v1319, 64
      %v1322 = vpop.permute.xlu0 %1321
      %v1324 = vadd.f32 %v1314, %v1322
      %1325 = vset.pattern.permute.xlu0 14
      %1326 = vperm.xlu0 %1325, %v1197
      %v1327 = vpop.permute.xlu0 %1326
      %v1329 = vmul.f32 %v1327, %v1195
      %1331 = vrot.lane.b32.xlu0 %v1329, 48
      %v1332 = vpop.permute.xlu0 %1331
      %v1334 = vadd.f32 %v1324, %v1332
      %1335 = vset.pattern.permute.xlu0 15
      %1336 = vperm.xlu0 %1335, %v1197
      %v1337 = vpop.permute.xlu0 %1336
      %v1339 = vmul.f32 %v1337, %v1195
      %1341 = vrot.lane.b32.xlu0 %v1339, 32
      %v1342 = vpop.permute.xlu0 %1341
      %v1344 = vadd.f32 %v1334, %v1342
      %1345 = vset.pattern.permute.xlu0 16
      %1346 = vperm.xlu0 %1345, %v1197
      %v1347 = vpop.permute.xlu0 %1346
      %v1349 = vmul.f32 %v1347, %v1195
      %1351 = vrot.lane.b32.xlu0 %v1349, 16
      %v1352 = vpop.permute.xlu0 %1351
      %v1354 = vadd.f32 %v1344, %v1352
      %1355 = vset.pattern.permute.xlu0 17
      %1356 = vperm.xlu0 %1355, %v1197
      %v1357 = vpop.permute.xlu0 %1356
      %v1359 = vmul.f32 %v1357, %v1196
      %v1360 = vadd.f32 %v1354, %v1359
      %1361 = vset.pattern.permute.xlu0 18
      %1362 = vperm.xlu0 %1361, %v1197
      %v1363 = vpop.permute.xlu0 %1362
      %v1365 = vmul.f32 %v1363, %v1195
      %1366 = vset.pattern.permute.xlu0 19
      %1367 = vperm.xlu0 %1366, %v1197
      %v1368 = vpop.permute.xlu0 %1367
      %v1370 = vmul.f32 %v1368, %v1195
      %1372 = vrot.lane.b32.xlu0 %v1370, 112
      %v1373 = vpop.permute.xlu0 %1372
      %v1375 = vadd.f32 %v1365, %v1373
      %1376 = vset.pattern.permute.xlu0 20
      %1377 = vperm.xlu0 %1376, %v1197
      %v1378 = vpop.permute.xlu0 %1377
      %v1380 = vmul.f32 %v1378, %v1195
      %1382 = vrot.lane.b32.xlu0 %v1380, 96
      %v1383 = vpop.permute.xlu0 %1382
      %v1385 = vadd.f32 %v1375, %v1383
      %1386 = vset.pattern.permute.xlu0 21
      %1387 = vperm.xlu0 %1386, %v1197
      %v1388 = vpop.permute.xlu0 %1387
      %v1390 = vmul.f32 %v1388, %v1195
      %1392 = vrot.lane.b32.xlu0 %v1390, 80
      %v1393 = vpop.permute.xlu0 %1392
      %v1395 = vadd.f32 %v1385, %v1393
      %1396 = vset.pattern.permute.xlu0 22
      %1397 = vperm.xlu0 %1396, %v1197
      %v1398 = vpop.permute.xlu0 %1397
      %v1400 = vmul.f32 %v1398, %v1195
      %1402 = vrot.lane.b32.xlu0 %v1400, 64
      %v1403 = vpop.permute.xlu0 %1402
      %v1405 = vadd.f32 %v1395, %v1403
      %1406 = vset.pattern.permute.xlu0 23
      %1407 = vperm.xlu0 %1406, %v1197
      %v1408 = vpop.permute.xlu0 %1407
      %v1410 = vmul.f32 %v1408, %v1195
      %1412 = vrot.lane.b32.xlu0 %v1410, 48
      %v1413 = vpop.permute.xlu0 %1412
      %v1415 = vadd.f32 %v1405, %v1413
      %1416 = vset.pattern.permute.xlu0 24
      %1417 = vperm.xlu0 %1416, %v1197
      %v1418 = vpop.permute.xlu0 %1417
      %v1420 = vmul.f32 %v1418, %v1195
      %1422 = vrot.lane.b32.xlu0 %v1420, 32
      %v1423 = vpop.permute.xlu0 %1422
      %v1425 = vadd.f32 %v1415, %v1423
      %1426 = vset.pattern.permute.xlu0 25
      %1427 = vperm.xlu0 %1426, %v1197
      %v1428 = vpop.permute.xlu0 %1427
      %v1430 = vmul.f32 %v1428, %v1195
      %1432 = vrot.lane.b32.xlu0 %v1430, 16
      %v1433 = vpop.permute.xlu0 %1432
      %v1435 = vadd.f32 %v1425, %v1433
      %1436 = vset.pattern.permute.xlu0 26
      %1437 = vperm.xlu0 %1436, %v1197
      %v1438 = vpop.permute.xlu0 %1437
      %v1440 = vmul.f32 %v1438, %v1196
      %v1441 = vadd.f32 %v1435, %v1440
      %1442 = vset.pattern.permute.xlu0 27
      %1443 = vperm.xlu0 %1442, %v1197
      %v1444 = vpop.permute.xlu0 %1443
      %v1446 = vmul.f32 %v1444, %v1195
      %1447 = vset.pattern.permute.xlu0 28
      %1448 = vperm.xlu0 %1447, %v1197
      %v1449 = vpop.permute.xlu0 %1448
      %v1451 = vmul.f32 %v1449, %v1195
      %1453 = vrot.lane.b32.xlu0 %v1451, 112
      %v1454 = vpop.permute.xlu0 %1453
      %v1456 = vadd.f32 %v1446, %v1454
      %1457 = vset.pattern.permute.xlu0 29
      %1458 = vperm.xlu0 %1457, %v1197
      %v1459 = vpop.permute.xlu0 %1458
      %v1461 = vmul.f32 %v1459, %v1195
      %1463 = vrot.lane.b32.xlu0 %v1461, 96
      %v1464 = vpop.permute.xlu0 %1463
      %v1466 = vadd.f32 %v1456, %v1464
      %1467 = vset.pattern.permute.xlu0 30
      %1468 = vperm.xlu0 %1467, %v1197
      %v1469 = vpop.permute.xlu0 %1468
      %v1471 = vmul.f32 %v1469, %v1195
      %1473 = vrot.lane.b32.xlu0 %v1471, 80
      %v1474 = vpop.permute.xlu0 %1473
      %v1476 = vadd.f32 %v1466, %v1474
      %1477 = vset.pattern.permute.xlu0 31
      %1478 = vperm.xlu0 %1477, %v1197
      %v1479 = vpop.permute.xlu0 %1478
      %v1481 = vmul.f32 %v1479, %v1195
      %1483 = vrot.lane.b32.xlu0 %v1481, 64
      %v1484 = vpop.permute.xlu0 %1483
      %v1486 = vadd.f32 %v1476, %v1484
      %1487 = vset.pattern.permute.xlu0 32
      %1488 = vperm.xlu0 %1487, %v1197
      %v1489 = vpop.permute.xlu0 %1488
      %v1491 = vmul.f32 %v1489, %v1195
      %1493 = vrot.lane.b32.xlu0 %v1491, 48
      %v1494 = vpop.permute.xlu0 %1493
      %v1496 = vadd.f32 %v1486, %v1494
      %1497 = vset.pattern.permute.xlu0 33
      %1498 = vperm.xlu0 %1497, %v1197
      %v1499 = vpop.permute.xlu0 %1498
      %v1501 = vmul.f32 %v1499, %v1195
      %1503 = vrot.lane.b32.xlu0 %v1501, 32
      %v1504 = vpop.permute.xlu0 %1503
      %v1506 = vadd.f32 %v1496, %v1504
      %1507 = vset.pattern.permute.xlu0 34
      %1508 = vperm.xlu0 %1507, %v1197
      %v1509 = vpop.permute.xlu0 %1508
      %v1511 = vmul.f32 %v1509, %v1195
      %1513 = vrot.lane.b32.xlu0 %v1511, 16
      %v1514 = vpop.permute.xlu0 %1513
      %v1516 = vadd.f32 %v1506, %v1514
      %1517 = vset.pattern.permute.xlu0 35
      %1518 = vperm.xlu0 %1517, %v1197
      %v1519 = vpop.permute.xlu0 %1518
      %v1521 = vmul.f32 %v1519, %v1196
      %v1522 = vadd.f32 %v1516, %v1521
      %1523 = vset.pattern.permute.xlu0 36
      %1524 = vperm.xlu0 %1523, %v1197
      %v1525 = vpop.permute.xlu0 %1524
      %v1527 = vmul.f32 %v1525, %v1195
      %1528 = vset.pattern.permute.xlu0 37
      %1529 = vperm.xlu0 %1528, %v1197
      %v1530 = vpop.permute.xlu0 %1529
      %v1532 = vmul.f32 %v1530, %v1195
      %1534 = vrot.lane.b32.xlu0 %v1532, 112
      %v1535 = vpop.permute.xlu0 %1534
      %v1537 = vadd.f32 %v1527, %v1535
      %1538 = vset.pattern.permute.xlu0 38
      %1539 = vperm.xlu0 %1538, %v1197
      %v1540 = vpop.permute.xlu0 %1539
      %v1542 = vmul.f32 %v1540, %v1195
      %1544 = vrot.lane.b32.xlu0 %v1542, 96
      %v1545 = vpop.permute.xlu0 %1544
      %v1547 = vadd.f32 %v1537, %v1545
      %1548 = vset.pattern.permute.xlu0 39
      %1549 = vperm.xlu0 %1548, %v1197
      %v1550 = vpop.permute.xlu0 %1549
      %v1552 = vmul.f32 %v1550, %v1195
      %1554 = vrot.lane.b32.xlu0 %v1552, 80
      %v1555 = vpop.permute.xlu0 %1554
      %v1557 = vadd.f32 %v1547, %v1555
      %1558 = vset.pattern.permute.xlu0 40
      %1559 = vperm.xlu0 %1558, %v1197
      %v1560 = vpop.permute.xlu0 %1559
      %v1562 = vmul.f32 %v1560, %v1195
      %1564 = vrot.lane.b32.xlu0 %v1562, 64
      %v1565 = vpop.permute.xlu0 %1564
      %v1567 = vadd.f32 %v1557, %v1565
      %1568 = vset.pattern.permute.xlu0 41
      %1569 = vperm.xlu0 %1568, %v1197
      %v1570 = vpop.permute.xlu0 %1569
      %v1572 = vmul.f32 %v1570, %v1195
      %1574 = vrot.lane.b32.xlu0 %v1572, 48
      %v1575 = vpop.permute.xlu0 %1574
      %v1577 = vadd.f32 %v1567, %v1575
      %1578 = vset.pattern.permute.xlu0 42
      %1579 = vperm.xlu0 %1578, %v1197
      %v1580 = vpop.permute.xlu0 %1579
      %v1582 = vmul.f32 %v1580, %v1195
      %1584 = vrot.lane.b32.xlu0 %v1582, 32
      %v1585 = vpop.permute.xlu0 %1584
      %v1587 = vadd.f32 %v1577, %v1585
      %1588 = vset.pattern.permute.xlu0 43
      %1589 = vperm.xlu0 %1588, %v1197
      %v1590 = vpop.permute.xlu0 %1589
      %v1592 = vmul.f32 %v1590, %v1195
      %1594 = vrot.lane.b32.xlu0 %v1592, 16
      %v1595 = vpop.permute.xlu0 %1594
      %v1597 = vadd.f32 %v1587, %v1595
      %1598 = vset.pattern.permute.xlu0 44
      %1599 = vperm.xlu0 %1598, %v1197
      %v1600 = vpop.permute.xlu0 %1599
      %v1602 = vmul.f32 %v1600, %v1196
      %v1603 = vadd.f32 %v1597, %v1602
      %1604 = vset.pattern.permute.xlu0 45
      %1605 = vperm.xlu0 %1604, %v1197
      %v1606 = vpop.permute.xlu0 %1605
      %v1608 = vmul.f32 %v1606, %v1195
      %1609 = vset.pattern.permute.xlu0 46
      %1610 = vperm.xlu0 %1609, %v1197
      %v1611 = vpop.permute.xlu0 %1610
      %v1613 = vmul.f32 %v1611, %v1195
      %1615 = vrot.lane.b32.xlu0 %v1613, 112
      %v1616 = vpop.permute.xlu0 %1615
      %v1618 = vadd.f32 %v1608, %v1616
      %1619 = vset.pattern.permute.xlu0 47
      %1620 = vperm.xlu0 %1619, %v1197
      %v1621 = vpop.permute.xlu0 %1620
      %v1623 = vmul.f32 %v1621, %v1195
      %1625 = vrot.lane.b32.xlu0 %v1623, 96
      %v1626 = vpop.permute.xlu0 %1625
      %v1628 = vadd.f32 %v1618, %v1626
      %1629 = vset.pattern.permute.xlu0 48
      %1630 = vperm.xlu0 %1629, %v1197
      %v1631 = vpop.permute.xlu0 %1630
      %v1633 = vmul.f32 %v1631, %v1195
      %1635 = vrot.lane.b32.xlu0 %v1633, 80
      %v1636 = vpop.permute.xlu0 %1635
      %v1638 = vadd.f32 %v1628, %v1636
      %1639 = vset.pattern.permute.xlu0 49
      %1640 = vperm.xlu0 %1639, %v1197
      %v1641 = vpop.permute.xlu0 %1640
      %v1643 = vmul.f32 %v1641, %v1195
      %1645 = vrot.lane.b32.xlu0 %v1643, 64
      %v1646 = vpop.permute.xlu0 %1645
      %v1648 = vadd.f32 %v1638, %v1646
      %1649 = vset.pattern.permute.xlu0 50
      %1650 = vperm.xlu0 %1649, %v1197
      %v1651 = vpop.permute.xlu0 %1650
      %v1653 = vmul.f32 %v1651, %v1195
      %1655 = vrot.lane.b32.xlu0 %v1653, 48
      %v1656 = vpop.permute.xlu0 %1655
      %v1658 = vadd.f32 %v1648, %v1656
      %1659 = vset.pattern.permute.xlu0 51
      %1660 = vperm.xlu0 %1659, %v1197
      %v1661 = vpop.permute.xlu0 %1660
      %v1663 = vmul.f32 %v1661, %v1195
      %1665 = vrot.lane.b32.xlu0 %v1663, 32
      %v1666 = vpop.permute.xlu0 %1665
      %v1668 = vadd.f32 %v1658, %v1666
      %1669 = vset.pattern.permute.xlu0 52
      %1670 = vperm.xlu0 %1669, %v1197
      %v1671 = vpop.permute.xlu0 %1670
      %v1673 = vmul.f32 %v1671, %v1195
      %1675 = vrot.lane.b32.xlu0 %v1673, 16
      %v1676 = vpop.permute.xlu0 %1675
      %v1678 = vadd.f32 %v1668, %v1676
      %1679 = vset.pattern.permute.xlu0 53
      %1680 = vperm.xlu0 %1679, %v1197
      %v1681 = vpop.permute.xlu0 %1680
      %v1683 = vmul.f32 %v1681, %v1196
      %v1684 = vadd.f32 %v1678, %v1683
      %1685 = vset.pattern.permute.xlu0 54
      %1686 = vperm.xlu0 %1685, %v1197
      %v1687 = vpop.permute.xlu0 %1686
      %v1689 = vmul.f32 %v1687, %v1195
      %1690 = vset.pattern.permute.xlu0 55
      %1691 = vperm.xlu0 %1690, %v1197
      %v1692 = vpop.permute.xlu0 %1691
      %v1694 = vmul.f32 %v1692, %v1195
      %1696 = vrot.lane.b32.xlu0 %v1694, 112
      %v1697 = vpop.permute.xlu0 %1696
      %v1699 = vadd.f32 %v1689, %v1697
      %1700 = vset.pattern.permute.xlu0 56
      %1701 = vperm.xlu0 %1700, %v1197
      %v1702 = vpop.permute.xlu0 %1701
      %v1704 = vmul.f32 %v1702, %v1195
      %1706 = vrot.lane.b32.xlu0 %v1704, 96
      %v1707 = vpop.permute.xlu0 %1706
      %v1709 = vadd.f32 %v1699, %v1707
      %1710 = vset.pattern.permute.xlu0 57
      %1711 = vperm.xlu0 %1710, %v1197
      %v1712 = vpop.permute.xlu0 %1711
      %v1714 = vmul.f32 %v1712, %v1195
      %1716 = vrot.lane.b32.xlu0 %v1714, 80
      %v1717 = vpop.permute.xlu0 %1716
      %v1719 = vadd.f32 %v1709, %v1717
      %1720 = vset.pattern.permute.xlu0 58
      %1721 = vperm.xlu0 %1720, %v1197
      %v1722 = vpop.permute.xlu0 %1721
      %v1724 = vmul.f32 %v1722, %v1195
      %1726 = vrot.lane.b32.xlu0 %v1724, 64
      %v1727 = vpop.permute.xlu0 %1726
      %v1729 = vadd.f32 %v1719, %v1727
      %1730 = vset.pattern.permute.xlu0 59
      %1731 = vperm.xlu0 %1730, %v1197
      %v1732 = vpop.permute.xlu0 %1731
      %v1734 = vmul.f32 %v1732, %v1195
      %1736 = vrot.lane.b32.xlu0 %v1734, 48
      %v1737 = vpop.permute.xlu0 %1736
      %v1739 = vadd.f32 %v1729, %v1737
      %1740 = vset.pattern.permute.xlu0 60
      %1741 = vperm.xlu0 %1740, %v1197
      %v1742 = vpop.permute.xlu0 %1741
      %v1744 = vmul.f32 %v1742, %v1195
      %1746 = vrot.lane.b32.xlu0 %v1744, 32
      %v1747 = vpop.permute.xlu0 %1746
      %v1749 = vadd.f32 %v1739, %v1747
      %1750 = vset.pattern.permute.xlu0 61
      %1751 = vperm.xlu0 %1750, %v1197
      %v1752 = vpop.permute.xlu0 %1751
      %v1754 = vmul.f32 %v1752, %v1195
      %1756 = vrot.lane.b32.xlu0 %v1754, 16
      %v1757 = vpop.permute.xlu0 %1756
      %v1759 = vadd.f32 %v1749, %v1757
      %1760 = vset.pattern.permute.xlu0 62
      %1761 = vperm.xlu0 %1760, %v1197
      %v1762 = vpop.permute.xlu0 %1761
      %v1764 = vmul.f32 %v1762, %v1196
      %v1765 = vadd.f32 %v1759, %v1764
      %1766 = vset.pattern.permute.xlu0 63
      %1767 = vperm.xlu0 %1766, %v1197
      %v1768 = vpop.permute.xlu0 %1767
      %v1770 = vmul.f32 %v1768, %v1195
      %1771 = vset.pattern.permute.xlu0 64
      %1772 = vperm.xlu0 %1771, %v1197
      %v1773 = vpop.permute.xlu0 %1772
      %v1775 = vmul.f32 %v1773, %v1195
      %1777 = vrot.lane.b32.xlu0 %v1775, 112
      %v1778 = vpop.permute.xlu0 %1777
      %v1780 = vadd.f32 %v1770, %v1778
      %1781 = vset.pattern.permute.xlu0 65
      %1782 = vperm.xlu0 %1781, %v1197
      %v1783 = vpop.permute.xlu0 %1782
      %v1785 = vmul.f32 %v1783, %v1195
      %1787 = vrot.lane.b32.xlu0 %v1785, 96
      %v1788 = vpop.permute.xlu0 %1787
      %v1790 = vadd.f32 %v1780, %v1788
      %1791 = vset.pattern.permute.xlu0 66
      %1792 = vperm.xlu0 %1791, %v1197
      %v1793 = vpop.permute.xlu0 %1792
      %v1795 = vmul.f32 %v1793, %v1195
      %1797 = vrot.lane.b32.xlu0 %v1795, 80
      %v1798 = vpop.permute.xlu0 %1797
      %v1800 = vadd.f32 %v1790, %v1798
      %1801 = vset.pattern.permute.xlu0 67
      %1802 = vperm.xlu0 %1801, %v1197
      %v1803 = vpop.permute.xlu0 %1802
      %v1805 = vmul.f32 %v1803, %v1195
      %1807 = vrot.lane.b32.xlu0 %v1805, 64
      %v1808 = vpop.permute.xlu0 %1807
      %v1810 = vadd.f32 %v1800, %v1808
      %1811 = vset.pattern.permute.xlu0 68
      %1812 = vperm.xlu0 %1811, %v1197
      %v1813 = vpop.permute.xlu0 %1812
      %v1815 = vmul.f32 %v1813, %v1195
      %1817 = vrot.lane.b32.xlu0 %v1815, 48
      %v1818 = vpop.permute.xlu0 %1817
      %v1820 = vadd.f32 %v1810, %v1818
      %1821 = vset.pattern.permute.xlu0 69
      %1822 = vperm.xlu0 %1821, %v1197
      %v1823 = vpop.permute.xlu0 %1822
      %v1825 = vmul.f32 %v1823, %v1195
      %1827 = vrot.lane.b32.xlu0 %v1825, 32
      %v1828 = vpop.permute.xlu0 %1827
      %v1830 = vadd.f32 %v1820, %v1828
      %1831 = vset.pattern.permute.xlu0 70
      %1832 = vperm.xlu0 %1831, %v1197
      %v1833 = vpop.permute.xlu0 %1832
      %v1835 = vmul.f32 %v1833, %v1195
      %1837 = vrot.lane.b32.xlu0 %v1835, 16
      %v1838 = vpop.permute.xlu0 %1837
      %v1840 = vadd.f32 %v1830, %v1838
      %1841 = vset.pattern.permute.xlu0 71
      %1842 = vperm.xlu0 %1841, %v1197
      %v1843 = vpop.permute.xlu0 %1842
      %v1845 = vmul.f32 %v1843, %v1196
      %v1846 = vadd.f32 %v1840, %v1845
      %1847 = vset.pattern.permute.xlu0 72
      %1848 = vperm.xlu0 %1847, %v1197
      %v1849 = vpop.permute.xlu0 %1848
      %v1851 = vmul.f32 %v1849, %v1195
      %1852 = vset.pattern.permute.xlu0 73
      %1853 = vperm.xlu0 %1852, %v1197
      %v1854 = vpop.permute.xlu0 %1853
      %v1856 = vmul.f32 %v1854, %v1195
      %1858 = vrot.lane.b32.xlu0 %v1856, 112
      %v1859 = vpop.permute.xlu0 %1858
      %v1861 = vadd.f32 %v1851, %v1859
      %1862 = vset.pattern.permute.xlu0 74
      %1863 = vperm.xlu0 %1862, %v1197
      %v1864 = vpop.permute.xlu0 %1863
      %v1866 = vmul.f32 %v1864, %v1195
      %1868 = vrot.lane.b32.xlu0 %v1866, 96
      %v1869 = vpop.permute.xlu0 %1868
      %v1871 = vadd.f32 %v1861, %v1869
      %1872 = vset.pattern.permute.xlu0 75
      %1873 = vperm.xlu0 %1872, %v1197
      %v1874 = vpop.permute.xlu0 %1873
      %v1876 = vmul.f32 %v1874, %v1195
      %1878 = vrot.lane.b32.xlu0 %v1876, 80
      %v1879 = vpop.permute.xlu0 %1878
      %v1881 = vadd.f32 %v1871, %v1879
      %1882 = vset.pattern.permute.xlu0 76
      %1883 = vperm.xlu0 %1882, %v1197
      %v1884 = vpop.permute.xlu0 %1883
      %v1886 = vmul.f32 %v1884, %v1195
      %1888 = vrot.lane.b32.xlu0 %v1886, 64
      %v1889 = vpop.permute.xlu0 %1888
      %v1891 = vadd.f32 %v1881, %v1889
      %1892 = vset.pattern.permute.xlu0 77
      %1893 = vperm.xlu0 %1892, %v1197
      %v1894 = vpop.permute.xlu0 %1893
      %v1896 = vmul.f32 %v1894, %v1195
      %1898 = vrot.lane.b32.xlu0 %v1896, 48
      %v1899 = vpop.permute.xlu0 %1898
      %v1901 = vadd.f32 %v1891, %v1899
      %1902 = vset.pattern.permute.xlu0 78
      %1903 = vperm.xlu0 %1902, %v1197
      %v1904 = vpop.permute.xlu0 %1903
      %v1906 = vmul.f32 %v1904, %v1195
      %1908 = vrot.lane.b32.xlu0 %v1906, 32
      %v1909 = vpop.permute.xlu0 %1908
      %v1911 = vadd.f32 %v1901, %v1909
      %1912 = vset.pattern.permute.xlu0 79
      %1913 = vperm.xlu0 %1912, %v1197
      %v1914 = vpop.permute.xlu0 %1913
      %v1916 = vmul.f32 %v1914, %v1195
      %1918 = vrot.lane.b32.xlu0 %v1916, 16
      %v1919 = vpop.permute.xlu0 %1918
      %v1921 = vadd.f32 %v1911, %v1919
      %1922 = vset.pattern.permute.xlu0 80
      %1923 = vperm.xlu0 %1922, %v1197
      %v1924 = vpop.permute.xlu0 %1923
      %v1926 = vmul.f32 %v1924, %v1196
      %v1927 = vadd.f32 %v1921, %v1926
      %v1928 = vld [vmem:[%s14] sm:$0xff]
      %v1929 = vld [vmem:[%s14 + $0x8] sm:$0xff]
      %v1930 = vld [vmem:[%s14 + $0x10] sm:$0xff]
      %v1931 = vld [vmem:[%s14 + $0x18] sm:$0xff]
      %v1932 = vld [vmem:[%s14 + $0x20] sm:$0xff]
      %v1933 = vld [vmem:[%s14 + $0x28] sm:$0xff]
      %v1934 = vld [vmem:[%s16] sm:$0xff]
      %v1935 = vld [vmem:[%s16 + $0x8] sm:$0xff]
      %v1936 = vld [vmem:[%s16 + $0x10] sm:$0xff]
      %v1937 = vld [vmem:[%s16 + $0x18] sm:$0xff]
      %v1938 = vld [vmem:[%s17] sm:$0xff]
      %v1939 = vld [vmem:[%s17 + $0x8] sm:$0xff]
      %v1940 = vld [vmem:[%s15] sm:$0x1]
      %1942 = vrot.lane.b32.xlu0 %v1441, 16
      %v1943 = vpop.permute.xlu0 %1942
      %1946 = vrot.lane.b32.xlu0 %v1765, 32
      %v1947 = vpop.permute.xlu0 %1946
      %v1949 = vsel %vm957, %v1279, %v1943
      %vm1950 = vcmask 261120
      %v1951 = vsel %vm1950, %v1949, %v1947
      %v1952 = vmul.f32 %v1951, %v1192
      %v1954 = vlaneseq
      %v1955 = vshrl.u32 %v1954, 7
      %v1956 = vsub.s32 0, %v1955
      %v1957 = vrot.slane %v1940, %v1956
      %vm1959 = vcmask 392192
      %v1961 = vsel %vm1959, %v1952, 0
      %1963 = vmatprep.subr.mxu0 0.0
      %1964 = vmatpush1.msra.mxu0 %v1928
      %1965 = vmatprep.subr.mxu0 0.0
      %1966 = vmatpush1.msra.mxu0 %v1929
      %1967 = vmatprep.subr.mxu0 0.0
      %1968 = vmatpush1.msra.mxu0 %v1930
      %1969 = vmatprep.subr.mxu0 0.0
      %1970 = vmatpush1.msra.mxu0 %v1931
      %1971 = vmatprep.subr.mxu0 0.0
      %1972 = vmatpush1.msra.mxu0 %v1932
      %1973 = vmatprep.subr.mxu0 0.0
      %1974 = vmatpush1.msra.mxu0 %v1933
      %1975 = vmatprep.subr.mxu0 0.0
      %1976 = vmatpush1.msra.mxu0 0.0
      %1977 = vmatprep.subr.mxu0 0.0
      %1978 = vmatpush1.msra.mxu0 0.0
      %1979 = vmatprep.subr.mxu0 0.0
      %1980 = vmatpush1.msra.mxu0 0.0
      %1981 = vmatprep.subr.mxu0 0.0
      %1982 = vmatpush1.msra.mxu0 0.0
      %1983 = vmatprep.subr.mxu0 0.0
      %1984 = vmatpush1.msra.mxu0 0.0
      %1985 = vmatprep.subr.mxu0 0.0
      %1986 = vmatpush1.msra.mxu0 0.0
      %1987 = vmatprep.subr.mxu0 0.0
      %1988 = vmatpush1.msra.mxu0 0.0
      %1989 = vmatprep.subr.mxu0 0.0
      %1990 = vmatpush1.msra.mxu0 0.0
      %1991 = vmatprep.subr.mxu0 0.0
      %1992 = vmatpush1.msra.mxu0 0.0
      %1993 = vmatprep.subr.mxu0 0.0
      %1994 = vmatpush1.msra.mxu0 0.0
      %1995 = vmatprep.subr.mxu0 0.0
      %1996 = vmatpush1.msra.mxu0 0.0
      %1997 = vmatprep.subr.mxu0 0.0
      %1998 = vmatpush1.msra.mxu0 0.0
      %1999 = vmatprep.subr.mxu0 0.0
      %2000 = vmatpush1.msra.mxu0 0.0
      %2001 = vmatprep.subr.mxu0 0.0
      %2002 = vmatpush1.msra.mxu0 0.0
      %2003 = vmatprep.subr.mxu0 0.0
      %2004 = vmatpush1.msra.mxu0 0.0
      %2005 = vmatprep.subr.mxu0 0.0
      %2006 = vmatpush1.msra.mxu0 0.0
      %2007 = vmatprep.subr.mxu0 0.0
      %2008 = vmatpush1.msra.mxu0 0.0
      %2009 = vmatprep.subr.mxu0 0.0
      %2010 = vmatpush1.msra.mxu0 0.0
      %2011 = vmatprep.subr.mxu0 0.0
      %2012 = vmatpush1.msra.mxu0 0.0
      %2013 = vmatprep.subr.mxu0 0.0
      %2014 = vmatpush1.msra.mxu0 0.0
      %2015 = vmatprep.subr.mxu0 0.0
      %2016 = vmatpush1.msra.mxu0 0.0
      %2017 = vmatprep.subr.mxu0 0.0
      %2018 = vmatpush1.msra.mxu0 0.0
      %2019 = vmatprep.subr.mxu0 0.0
      %2020 = vmatpush1.msra.mxu0 0.0
      %2021 = vmatprep.subr.mxu0 0.0
      %2022 = vmatpush1.msra.mxu0 0.0
      %2023 = vmatprep.subr.mxu0 0.0
      %2024 = vmatpush1.msra.mxu0 0.0
      %2025 = vmatprep.subr.mxu0 0.0
      %2026 = vmatpush1.msra.mxu0 0.0
      %2027 = vmatprep.mubr.f32.mxu0 0.0
      %2028 = vmatmul.mubr.f32.gmra.mrb[0].mxu0 %v1961
      %v2029 = vpop.f32.mrb[0].mxu0
      %v2030 = vadd.f32 %v1957, %v2029
      %v2031 = vpop.f32.mrb[0].mxu0
      %2032 = vdwg.mxu0
      %2034 = vrot.lane.b32.xlu0 %v1846, 16
      %v2035 = vpop.permute.xlu0 %2034
      %v2037 = vsel %vm957, %v1522, %v2035
      %2039 = vrot.lane.b32.xlu0 %v1684, 16
      %v2040 = vpop.permute.xlu0 %2039
      %v2042 = vsel %vm957, %v1360, %v2040
      %2044 = vrot.lane.b32.xlu0 %v1192, 80
      %v2045 = vpop.permute.xlu0 %2044
      %v2047 = vmul.f32 %v2037, %v2045
      %v2048 = vmul.f32 %v2042, %v2045
      %v2050 = vsel %vm1950, %v2047, 0
      %2052 = vmatprep.subr.mxu0 0.0
      %2053 = vmatpush1.msra.mxu0 %v1934
      %2054 = vmatprep.subr.mxu0 0.0
      %2055 = vmatpush1.msra.mxu0 %v1935
      %2056 = vmatprep.subr.mxu0 0.0
      %2057 = vmatpush1.msra.mxu0 %v1936
      %2058 = vmatprep.subr.mxu0 0.0
      %2059 = vmatpush1.msra.mxu0 %v1937
      %2060 = vmatprep.subr.mxu0 0.0
      %2061 = vmatpush1.msra.mxu0 0.0
      %2062 = vmatprep.subr.mxu0 0.0
      %2063 = vmatpush1.msra.mxu0 0.0
      %2064 = vmatprep.subr.mxu0 0.0
      %2065 = vmatpush1.msra.mxu0 0.0
      %2066 = vmatprep.subr.mxu0 0.0
      %2067 = vmatpush1.msra.mxu0 0.0
      %2068 = vmatprep.subr.mxu0 0.0
      %2069 = vmatpush1.msra.mxu0 0.0
      %2070 = vmatprep.subr.mxu0 0.0
      %2071 = vmatpush1.msra.mxu0 0.0
      %2072 = vmatprep.subr.mxu0 0.0
      %2073 = vmatpush1.msra.mxu0 0.0
      %2074 = vmatprep.subr.mxu0 0.0
      %2075 = vmatpush1.msra.mxu0 0.0
      %2076 = vmatprep.subr.mxu0 0.0
      %2077 = vmatpush1.msra.mxu0 0.0
      %2078 = vmatprep.subr.mxu0 0.0
      %2079 = vmatpush1.msra.mxu0 0.0
      %2080 = vmatprep.subr.mxu0 0.0
      %2081 = vmatpush1.msra.mxu0 0.0
      %2082 = vmatprep.subr.mxu0 0.0
      %2083 = vmatpush1.msra.mxu0 0.0
      %2084 = vmatprep.subr.mxu0 0.0
      %2085 = vmatpush1.msra.mxu0 0.0
      %2086 = vmatprep.subr.mxu0 0.0
      %2087 = vmatpush1.msra.mxu0 0.0
      %2088 = vmatprep.subr.mxu0 0.0
      %2089 = vmatpush1.msra.mxu0 0.0
      %2090 = vmatprep.subr.mxu0 0.0
      %2091 = vmatpush1.msra.mxu0 0.0
      %2092 = vmatprep.subr.mxu0 0.0
      %2093 = vmatpush1.msra.mxu0 0.0
      %2094 = vmatprep.subr.mxu0 0.0
      %2095 = vmatpush1.msra.mxu0 0.0
      %2096 = vmatprep.subr.mxu0 0.0
      %2097 = vmatpush1.msra.mxu0 0.0
      %2098 = vmatprep.subr.mxu0 0.0
      %2099 = vmatpush1.msra.mxu0 0.0
      %2100 = vmatprep.subr.mxu0 0.0
      %2101 = vmatpush1.msra.mxu0 0.0
      %2102 = vmatprep.subr.mxu0 0.0
      %2103 = vmatpush1.msra.mxu0 0.0
      %2104 = vmatprep.subr.mxu0 0.0
      %2105 = vmatpush1.msra.mxu0 0.0
      %2106 = vmatprep.subr.mxu0 0.0
      %2107 = vmatpush1.msra.mxu0 0.0
      %2108 = vmatprep.subr.mxu0 0.0
      %2109 = vmatpush1.msra.mxu0 0.0
      %2110 = vmatprep.subr.mxu0 0.0
      %2111 = vmatpush1.msra.mxu0 0.0
      %2112 = vmatprep.subr.mxu0 0.0
      %2113 = vmatpush1.msra.mxu0 0.0
      %2114 = vmatprep.subr.mxu0 0.0
      %2115 = vmatpush1.msra.mxu0 0.0
      %2116 = vmatprep.mubr.f32.mxu0 0.0
      %2117 = vmatmul.mubr.f32.gmra.mrb[0].mxu0 %v2050
      %v2118 = vpop.f32.mrb[0].mxu0
      %v2119 = vadd.f32 0.0, %v2118
      %v2120 = vpop.f32.mrb[0].mxu0
      %2121 = vdwg.mxu0
      %v2123 = vsel %vm1950, %v2048, 0
      %2125 = vmatprep.subr.mxu0 0.0
      %2126 = vmatpush1.msra.mxu0 %v1934
      %2127 = vmatprep.subr.mxu0 0.0
      %2128 = vmatpush1.msra.mxu0 %v1935
      %2129 = vmatprep.subr.mxu0 0.0
      %2130 = vmatpush1.msra.mxu0 %v1936
      %2131 = vmatprep.subr.mxu0 0.0
      %2132 = vmatpush1.msra.mxu0 %v1937
      %2133 = vmatprep.subr.mxu0 0.0
      %2134 = vmatpush1.msra.mxu0 0.0
      %2135 = vmatprep.subr.mxu0 0.0
      %2136 = vmatpush1.msra.mxu0 0.0
      %2137 = vmatprep.subr.mxu0 0.0
      %2138 = vmatpush1.msra.mxu0 0.0
      %2139 = vmatprep.subr.mxu0 0.0
      %2140 = vmatpush1.msra.mxu0 0.0
      %2141 = vmatprep.subr.mxu0 0.0
      %2142 = vmatpush1.msra.mxu0 0.0
      %2143 = vmatprep.subr.mxu0 0.0
      %2144 = vmatpush1.msra.mxu0 0.0
      %2145 = vmatprep.subr.mxu0 0.0
      %2146 = vmatpush1.msra.mxu0 0.0
      %2147 = vmatprep.subr.mxu0 0.0
      %2148 = vmatpush1.msra.mxu0 0.0
      %2149 = vmatprep.subr.mxu0 0.0
      %2150 = vmatpush1.msra.mxu0 0.0
      %2151 = vmatprep.subr.mxu0 0.0
      %2152 = vmatpush1.msra.mxu0 0.0
      %2153 = vmatprep.subr.mxu0 0.0
      %2154 = vmatpush1.msra.mxu0 0.0
      %2155 = vmatprep.subr.mxu0 0.0
      %2156 = vmatpush1.msra.mxu0 0.0
      %2157 = vmatprep.subr.mxu0 0.0
      %2158 = vmatpush1.msra.mxu0 0.0
      %2159 = vmatprep.subr.mxu0 0.0
      %2160 = vmatpush1.msra.mxu0 0.0
      %2161 = vmatprep.subr.mxu0 0.0
      %2162 = vmatpush1.msra.mxu0 0.0
      %2163 = vmatprep.subr.mxu0 0.0
      %2164 = vmatpush1.msra.mxu0 0.0
      %2165 = vmatprep.subr.mxu0 0.0
      %2166 = vmatpush1.msra.mxu0 0.0
      %2167 = vmatprep.subr.mxu0 0.0
      %2168 = vmatpush1.msra.mxu0 0.0
      %2169 = vmatprep.subr.mxu0 0.0
      %2170 = vmatpush1.msra.mxu0 0.0
      %2171 = vmatprep.subr.mxu0 0.0
      %2172 = vmatpush1.msra.mxu0 0.0
      %2173 = vmatprep.subr.mxu0 0.0
      %2174 = vmatpush1.msra.mxu0 0.0
      %2175 = vmatprep.subr.mxu0 0.0
      %2176 = vmatpush1.msra.mxu0 0.0
      %2177 = vmatprep.subr.mxu0 0.0
      %2178 = vmatpush1.msra.mxu0 0.0
      %2179 = vmatprep.subr.mxu0 0.0
      %2180 = vmatpush1.msra.mxu0 0.0
      %2181 = vmatprep.subr.mxu0 0.0
      %2182 = vmatpush1.msra.mxu0 0.0
      %2183 = vmatprep.subr.mxu0 0.0
      %2184 = vmatpush1.msra.mxu0 0.0
      %2185 = vmatprep.subr.mxu0 0.0
      %2186 = vmatpush1.msra.mxu0 0.0
      %2187 = vmatprep.subr.mxu0 0.0
      %2188 = vmatpush1.msra.mxu0 0.0
      %2189 = vmatprep.mubr.f32.mxu0 0.0
      %2190 = vmatmul.mubr.f32.gmra.mrb[0].mxu0 %v2123
      %v2191 = vpop.f32.mrb[0].mxu0
      %v2192 = vadd.f32 0.0, %v2191
      %v2193 = vpop.f32.mrb[0].mxu0
      %2194 = vdwg.mxu0
      %2196 = vrot.lane.b32.xlu0 %v2192, 112
      %v2197 = vpop.permute.xlu0 %2196
      %v2199 = vsub.f32 %v2119, %v2197
      %2200 = vrot.lane.b32.xlu0 %v2192, 16
      %v2201 = vpop.permute.xlu0 %2200
      %v2203 = vadd.f32 %v2119, %v2201
      %2204 = vrot.lane.b32.xlu0 %v1192, 48
      %v2205 = vpop.permute.xlu0 %2204
      %v2207 = vmul.f32 %v1927, %v2205
      %v2208 = vmul.f32 %v1603, %v2205
      %v2210 = vsel %vm957, %v2207, 0
      %2212 = vmatprep.subr.mxu0 0.0
      %2213 = vmatpush1.msra.mxu0 %v1938
      %2214 = vmatprep.subr.mxu0 0.0
      %2215 = vmatpush1.msra.mxu0 %v1939
      %2216 = vmatprep.subr.mxu0 0.0
      %2217 = vmatpush1.msra.mxu0 0.0
      %2218 = vmatprep.subr.mxu0 0.0
      %2219 = vmatpush1.msra.mxu0 0.0
      %2220 = vmatprep.subr.mxu0 0.0
      %2221 = vmatpush1.msra.mxu0 0.0
      %2222 = vmatprep.subr.mxu0 0.0
      %2223 = vmatpush1.msra.mxu0 0.0
      %2224 = vmatprep.subr.mxu0 0.0
      %2225 = vmatpush1.msra.mxu0 0.0
      %2226 = vmatprep.subr.mxu0 0.0
      %2227 = vmatpush1.msra.mxu0 0.0
      %2228 = vmatprep.subr.mxu0 0.0
      %2229 = vmatpush1.msra.mxu0 0.0
      %2230 = vmatprep.subr.mxu0 0.0
      %2231 = vmatpush1.msra.mxu0 0.0
      %2232 = vmatprep.subr.mxu0 0.0
      %2233 = vmatpush1.msra.mxu0 0.0
      %2234 = vmatprep.subr.mxu0 0.0
      %2235 = vmatpush1.msra.mxu0 0.0
      %2236 = vmatprep.subr.mxu0 0.0
      %2237 = vmatpush1.msra.mxu0 0.0
      %2238 = vmatprep.subr.mxu0 0.0
      %2239 = vmatpush1.msra.mxu0 0.0
      %2240 = vmatprep.subr.mxu0 0.0
      %2241 = vmatpush1.msra.mxu0 0.0
      %2242 = vmatprep.subr.mxu0 0.0
      %2243 = vmatpush1.msra.mxu0 0.0
      %2244 = vmatprep.subr.mxu0 0.0
      %2245 = vmatpush1.msra.mxu0 0.0
      %2246 = vmatprep.subr.mxu0 0.0
      %2247 = vmatpush1.msra.mxu0 0.0
      %2248 = vmatprep.subr.mxu0 0.0
      %2249 = vmatpush1.msra.mxu0 0.0
      %2250 = vmatprep.subr.mxu0 0.0
      %2251 = vmatpush1.msra.mxu0 0.0
      %2252 = vmatprep.subr.mxu0 0.0
      %2253 = vmatpush1.msra.mxu0 0.0
      %2254 = vmatprep.subr.mxu0 0.0
      %2255 = vmatpush1.msra.mxu0 0.0
      %2256 = vmatprep.subr.mxu0 0.0
      %2257 = vmatpush1.msra.mxu0 0.0
      %2258 = vmatprep.subr.mxu0 0.0
      %2259 = vmatpush1.msra.mxu0 0.0
      %2260 = vmatprep.subr.mxu0 0.0
      %2261 = vmatpush1.msra.mxu0 0.0
      %2262 = vmatprep.subr.mxu0 0.0
      %2263 = vmatpush1.msra.mxu0 0.0
      %2264 = vmatprep.subr.mxu0 0.0
      %2265 = vmatpush1.msra.mxu0 0.0
      %2266 = vmatprep.subr.mxu0 0.0
      %2267 = vmatpush1.msra.mxu0 0.0
      %2268 = vmatprep.subr.mxu0 0.0
      %2269 = vmatpush1.msra.mxu0 0.0
      %2270 = vmatprep.subr.mxu0 0.0
      %2271 = vmatpush1.msra.mxu0 0.0
      %2272 = vmatprep.subr.mxu0 0.0
      %2273 = vmatpush1.msra.mxu0 0.0
      %2274 = vmatprep.subr.mxu0 0.0
      %2275 = vmatpush1.msra.mxu0 0.0
      %2276 = vmatprep.mubr.f32.mxu0 0.0
      %2277 = vmatmul.mubr.f32.gmra.mrb[0].mxu0 %v2210
      %v2278 = vpop.f32.mrb[0].mxu0
      %v2279 = vadd.f32 0.0, %v2278
      %v2280 = vpop.f32.mrb[0].mxu0
      %2281 = vdwg.mxu0
      %v2283 = vsel %vm957, %v2208, 0
      %2285 = vmatprep.subr.mxu0 0.0
      %2286 = vmatpush1.msra.mxu0 %v1938
      %2287 = vmatprep.subr.mxu0 0.0
      %2288 = vmatpush1.msra.mxu0 %v1939
      %2289 = vmatprep.subr.mxu0 0.0
      %2290 = vmatpush1.msra.mxu0 0.0
      %2291 = vmatprep.subr.mxu0 0.0
      %2292 = vmatpush1.msra.mxu0 0.0
      %2293 = vmatprep.subr.mxu0 0.0
      %2294 = vmatpush1.msra.mxu0 0.0
      %2295 = vmatprep.subr.mxu0 0.0
      %2296 = vmatpush1.msra.mxu0 0.0
      %2297 = vmatprep.subr.mxu0 0.0
      %2298 = vmatpush1.msra.mxu0 0.0
      %2299 = vmatprep.subr.mxu0 0.0
      %2300 = vmatpush1.msra.mxu0 0.0
      %2301 = vmatprep.subr.mxu0 0.0
      %2302 = vmatpush1.msra.mxu0 0.0
      %2303 = vmatprep.subr.mxu0 0.0
      %2304 = vmatpush1.msra.mxu0 0.0
      %2305 = vmatprep.subr.mxu0 0.0
      %2306 = vmatpush1.msra.mxu0 0.0
      %2307 = vmatprep.subr.mxu0 0.0
      %2308 = vmatpush1.msra.mxu0 0.0
      %2309 = vmatprep.subr.mxu0 0.0
      %2310 = vmatpush1.msra.mxu0 0.0
      %2311 = vmatprep.subr.mxu0 0.0
      %2312 = vmatpush1.msra.mxu0 0.0
      %2313 = vmatprep.subr.mxu0 0.0
      %2314 = vmatpush1.msra.mxu0 0.0
      %2315 = vmatprep.subr.mxu0 0.0
      %2316 = vmatpush1.msra.mxu0 0.0
      %2317 = vmatprep.subr.mxu0 0.0
      %2318 = vmatpush1.msra.mxu0 0.0
      %2319 = vmatprep.subr.mxu0 0.0
      %2320 = vmatpush1.msra.mxu0 0.0
      %2321 = vmatprep.subr.mxu0 0.0
      %2322 = vmatpush1.msra.mxu0 0.0
      %2323 = vmatprep.subr.mxu0 0.0
      %2324 = vmatpush1.msra.mxu0 0.0
      %2325 = vmatprep.subr.mxu0 0.0
      %2326 = vmatpush1.msra.mxu0 0.0
      %2327 = vmatprep.subr.mxu0 0.0
      %2328 = vmatpush1.msra.mxu0 0.0
      %2329 = vmatprep.subr.mxu0 0.0
      %2330 = vmatpush1.msra.mxu0 0.0
      %2331 = vmatprep.subr.mxu0 0.0
      %2332 = vmatpush1.msra.mxu0 0.0
      %2333 = vmatprep.subr.mxu0 0.0
      %2334 = vmatpush1.msra.mxu0 0.0
      %2335 = vmatprep.subr.mxu0 0.0
      %2336 = vmatpush1.msra.mxu0 0.0
      %2337 = vmatprep.subr.mxu0 0.0
      %2338 = vmatpush1.msra.mxu0 0.0
      %2339 = vmatprep.subr.mxu0 0.0
      %2340 = vmatpush1.msra.mxu0 0.0
      %2341 = vmatprep.subr.mxu0 0.0
      %2342 = vmatpush1.msra.mxu0 0.0
      %2343 = vmatprep.subr.mxu0 0.0
      %2344 = vmatpush1.msra.mxu0 0.0
      %2345 = vmatprep.subr.mxu0 0.0
      %2346 = vmatpush1.msra.mxu0 0.0
      %2347 = vmatprep.subr.mxu0 0.0
      %2348 = vmatpush1.msra.mxu0 0.0
      %2349 = vmatprep.mubr.f32.mxu0 0.0
      %2350 = vmatmul.mubr.f32.gmra.mrb[0].mxu0 %v2283
      %v2351 = vpop.f32.mrb[0].mxu0
      %v2352 = vadd.f32 0.0, %v2351
      %v2353 = vpop.f32.mrb[0].mxu0
      %2354 = vdwg.mxu0
      %2356 = vrot.lane.b32.xlu0 %v2352, 120
      %v2357 = vpop.permute.xlu0 %2356
      %v2359 = vsub.f32 %v2279, %v2357
      %2360 = vrot.lane.b32.xlu0 %v2352, 8
      %v2361 = vpop.permute.xlu0 %2360
      %v2363 = vadd.f32 %v2279, %v2361
      %v2364 = vld [vmem:[%s18] sm:$0xff]
      %v2365 = vld [vmem:[%s18 + $0x8] sm:$0xff]
      %v2366 = vld [vmem:[%s18 + $0x10] sm:$0xff]
      %v2367 = vld [vmem:[%s18 + $0x18] sm:$0xff]
      %v2368 = vld [vmem:[%s18 + $0x20] sm:$0xff]
      %v2369 = vld [vmem:[%s18 + $0x28] sm:$0xff]
      %v2370 = vld [vmem:[%s18 + $0x30] sm:$0xff]
      %v2371 = vld [vmem:[%s18 + $0x38] sm:$0xff]
      %v2372 = vld [vmem:[%s18 + $0x40] sm:$0xff]
      %v2373 = vld [vmem:[%s18 + $0x48] sm:$0xff]
      %v2374 = vld [vmem:[%s18 + $0x50] sm:$0xff]
      %v2375 = vld [vmem:[%s18 + $0x58] sm:$0xff]
      %v2376 = vld [vmem:[%s18 + $0x60] sm:$0xff]
      %v2377 = vld [vmem:[%s18 + $0x68] sm:$0xff]
      %v2378 = vld [vmem:[%s18 + $0x70] sm:$0xff]
      %v2379 = vld [vmem:[%s18 + $0x78] sm:$0xff]
      %v2380 = vld [vmem:[%s18 + $0x80] sm:$0xff]
      %v2381 = vld [vmem:[%s18 + $0x88] sm:$0xff]
      %v2382 = vld [vmem:[%s19] sm:$0xff]
      %v2383 = vld [vmem:[%s19 + $0x8] sm:$0xff]
      %v2384 = vld [vmem:[%s19 + $0x10] sm:$0xff]
      %v2385 = vld [vmem:[%s19 + $0x18] sm:$0xff]
      %v2386 = vld [vmem:[%s19 + $0x20] sm:$0xff]
      %v2387 = vld [vmem:[%s19 + $0x28] sm:$0xff]
      %v2388 = vld [vmem:[%s19 + $0x30] sm:$0xff]
      %v2389 = vld [vmem:[%s19 + $0x38] sm:$0xff]
      %v2390 = vld [vmem:[%s19 + $0x40] sm:$0xff]
      %v2391 = vld [vmem:[%s19 + $0x48] sm:$0xff]
      %v2392 = vld [vmem:[%s19 + $0x50] sm:$0xff]
      %v2393 = vld [vmem:[%s19 + $0x58] sm:$0xff]
      %v2394 = vld [vmem:[%s19 + $0x60] sm:$0xff]
      %v2395 = vld [vmem:[%s19 + $0x68] sm:$0xff]
      %v2396 = vld [vmem:[%s19 + $0x70] sm:$0xff]
      %v2397 = vld [vmem:[%s19 + $0x78] sm:$0xff]
      %v2398 = vld [vmem:[%s19 + $0x80] sm:$0xff]
      %v2399 = vld [vmem:[%s19 + $0x88] sm:$0xff]
      %v2400 = vld [vmem:[%s19 + $0x90] sm:$0xff]
      %v2401 = vld [vmem:[%s19 + $0x98] sm:$0xff]
      %v2402 = vld [vmem:[%s19 + $0xa0] sm:$0xff]
      %v2403 = vld [vmem:[%s19 + $0xa8] sm:$0xff]
      %v2404 = vld [vmem:[%s19 + $0xb0] sm:$0xff]
      %v2405 = vld [vmem:[%s19 + $0xb8] sm:$0xff]
      %v2406 = vld [vmem:[%s19 + $0xc0] sm:$0xff]
      %v2407 = vld [vmem:[%s19 + $0xc8] sm:$0xff]
      %v2408 = vld [vmem:[%s19 + $0xd0] sm:$0xff]
      %v2409 = vld [vmem:[%s19 + $0xd8] sm:$0xff]
      %v2410 = vld [vmem:[%s19 + $0xe0] sm:$0xff]
      %v2411 = vld [vmem:[%s19 + $0xe8] sm:$0xff]
      %2413 = vrot.lane.b32.xlu0 %v2030, 112
      %v2414 = vpop.permute.xlu0 %2413
      %2417 = vrot.lane.b32.xlu0 %v2203, 120
      %v2418 = vpop.permute.xlu0 %2417
      %2420 = vrot.lane.b32.xlu0 %v2030, 120
      %v2421 = vpop.permute.xlu0 %2420
      %2424 = vrot.lane.b32.xlu0 %v2199, 24
      %v2425 = vpop.permute.xlu0 %2424
      %2428 = vrot.lane.b32.xlu0 %v2363, 24
      %v2429 = vpop.permute.xlu0 %2428
      %2431 = vrot.lane.b32.xlu0 %v2203, 16
      %v2432 = vpop.permute.xlu0 %2431
      %2434 = vrot.lane.b32.xlu0 %v2030, 16
      %v2435 = vpop.permute.xlu0 %2434
      %2437 = vrot.lane.b32.xlu0 %v2199, 48
      %v2438 = vpop.permute.xlu0 %2437
      %2441 = vrot.lane.b32.xlu0 %v2359, 64
      %v2442 = vpop.permute.xlu0 %2441
      %vm2444 = vcmask 64512
      %v2445 = vsel %vm2444, %v2414, %v2418
      %v2446 = vsel %vm957, %v2445, %v2421
      %vm2447 = vcmask 195584
      %v2448 = vsel %vm2447, %v2446, %v2425
      %v2449 = vsel %vm1950, %v2448, %v2429
      %v2450 = vsel %vm881, %v2449, %v2432
      %v2451 = vsel %vm1959, %v2450, %v2435
      %vm2452 = vcmask 457728
      %v2453 = vsel %vm2452, %v2451, %v2438
      %vm2454 = vcmask 523264
      %v2455 = vsel %vm2454, %v2453, %v2442
      %vm2456 = vcmask 588800
      %v2458 = vsel %vm2456, %v2455, 0
      %2460 = vmatprep.subr.mxu0 %v2365
      %2461 = vmatpush1.msra.mxu0 %v2364
      %2462 = vmatprep.subr.mxu0 %v2367
      %2463 = vmatpush1.msra.mxu0 %v2366
      %2464 = vmatprep.subr.mxu0 %v2369
      %2465 = vmatpush1.msra.mxu0 %v2368
      %2466 = vmatprep.subr.mxu0 %v2371
      %2467 = vmatpush1.msra.mxu0 %v2370
      %2468 = vmatprep.subr.mxu0 %v2373
      %2469 = vmatpush1.msra.mxu0 %v2372
      %2470 = vmatprep.subr.mxu0 %v2375
      %2471 = vmatpush1.msra.mxu0 %v2374
      %2472 = vmatprep.subr.mxu0 %v2377
      %2473 = vmatpush1.msra.mxu0 %v2376
      %2474 = vmatprep.subr.mxu0 %v2379
      %2475 = vmatpush1.msra.mxu0 %v2378
      %2476 = vmatprep.subr.mxu0 %v2381
      %2477 = vmatpush1.msra.mxu0 %v2380
      %2478 = vmatprep.subr.mxu0 0.0
      %2479 = vmatpush1.msra.mxu0 0.0
      %2480 = vmatprep.subr.mxu0 0.0
      %2481 = vmatpush1.msra.mxu0 0.0
      %2482 = vmatprep.subr.mxu0 0.0
      %2483 = vmatpush1.msra.mxu0 0.0
      %2484 = vmatprep.subr.mxu0 0.0
      %2485 = vmatpush1.msra.mxu0 0.0
      %2486 = vmatprep.subr.mxu0 0.0
      %2487 = vmatpush1.msra.mxu0 0.0
      %2488 = vmatprep.subr.mxu0 0.0
      %2489 = vmatpush1.msra.mxu0 0.0
      %2490 = vmatprep.subr.mxu0 0.0
      %2491 = vmatpush1.msra.mxu0 0.0
      %2492 = vmatprep.subr.mxu0 0.0
      %2493 = vmatpush1.msra.mxu0 0.0
      %2494 = vmatprep.subr.mxu0 0.0
      %2495 = vmatpush1.msra.mxu0 0.0
      %2496 = vmatprep.subr.mxu0 0.0
      %2497 = vmatpush1.msra.mxu0 0.0
      %2498 = vmatprep.subr.mxu0 0.0
      %2499 = vmatpush1.msra.mxu0 0.0
      %2500 = vmatprep.subr.mxu0 0.0
      %2501 = vmatpush1.msra.mxu0 0.0
      %2502 = vmatprep.subr.mxu0 0.0
      %2503 = vmatpush1.msra.mxu0 0.0
      %2504 = vmatprep.subr.mxu0 0.0
      %2505 = vmatpush1.msra.mxu0 0.0
      %2506 = vmatprep.subr.mxu0 0.0
      %2507 = vmatpush1.msra.mxu0 0.0
      %2508 = vmatprep.subr.mxu0 0.0
      %2509 = vmatpush1.msra.mxu0 0.0
      %2510 = vmatprep.subr.mxu0 0.0
      %2511 = vmatpush1.msra.mxu0 0.0
      %2512 = vmatprep.subr.mxu0 0.0
      %2513 = vmatpush1.msra.mxu0 0.0
      %2514 = vmatprep.subr.mxu0 0.0
      %2515 = vmatpush1.msra.mxu0 0.0
      %2516 = vmatprep.subr.mxu0 0.0
      %2517 = vmatpush1.msra.mxu0 0.0
      %2518 = vmatprep.subr.mxu0 0.0
      %2519 = vmatpush1.msra.mxu0 0.0
      %2520 = vmatprep.subr.mxu0 0.0
      %2521 = vmatpush1.msra.mxu0 0.0
      %2522 = vmatprep.subr.mxu0 0.0
      %2523 = vmatpush1.msra.mxu0 0.0
      %2524 = vmatprep.mubr.f32.mxu0 0.0
      %2525 = vmatmul.mubr.f32.gmra.mrb[0].mxu0 %v2458
      %v2526 = vpop.f32.mrb[0].mxu0
      %v2527 = vadd.f32 0.0, %v2526
      %v2528 = vpop.f32.mrb[0].mxu0
      %v2529 = vadd.f32 0.0, %v2528
      %2530 = vdwg.mxu0
      %v2531 = vxor.u32 %v2527, 2147483648
      %v2532 = vxor.u32 %v2529, 2147483648
      %v2533 = vmul.f32 %v2531, 1.442695
      %v2534 = vpow.pop %v2533
      %v2535 = vmul.f32 %v2532, 1.442695
      %v2536 = vpow.pop %v2535
      %v2537 = vadd.f32 %v2534, 1.0
      %v2538 = vadd.f32 %v2536, 1.0
      %v2539 = vrcp.pop %v2537
      %v2540 = vmul.f32 1.0, %v2539
      %v2541 = vrcp.pop %v2538
      %v2542 = vmul.f32 1.0, %v2541
      %v2543 = vmul.f32 %v2527, %v2540
      %v2544 = vmul.f32 %v2529, %v2542
      %v2545 = vmul.f32 %v2543, 1.6666666
      %v2546 = vmul.f32 %v2544, 1.6666666
      %vm2547 = vcmask 916480
      %v2549 = vsel %vm2547, %v2546, 0
      %2551 = vmatprep.subr.mxu0 0.0
      %2552 = vmatpush1.msra.mxu0 %v2382
      %2553 = vmatprep.subr.mxu0 0.0
      %2554 = vmatpush1.msra.mxu0 %v2383
      %2555 = vmatprep.subr.mxu0 0.0
      %2556 = vmatpush1.msra.mxu0 %v2384
      %2557 = vmatprep.subr.mxu0 0.0
      %2558 = vmatpush1.msra.mxu0 %v2385
      %2559 = vmatprep.subr.mxu0 0.0
      %2560 = vmatpush1.msra.mxu0 %v2386
      %2561 = vmatprep.subr.mxu0 0.0
      %2562 = vmatpush1.msra.mxu0 %v2387
      %2563 = vmatprep.subr.mxu0 0.0
      %2564 = vmatpush1.msra.mxu0 %v2388
      %2565 = vmatprep.subr.mxu0 0.0
      %2566 = vmatpush1.msra.mxu0 %v2389
      %2567 = vmatprep.subr.mxu0 0.0
      %2568 = vmatpush1.msra.mxu0 %v2390
      %2569 = vmatprep.subr.mxu0 0.0
      %2570 = vmatpush1.msra.mxu0 %v2391
      %2571 = vmatprep.subr.mxu0 0.0
      %2572 = vmatpush1.msra.mxu0 %v2392
      %2573 = vmatprep.subr.mxu0 0.0
      %2574 = vmatpush1.msra.mxu0 %v2393
      %2575 = vmatprep.subr.mxu0 0.0
      %2576 = vmatpush1.msra.mxu0 %v2394
      %2577 = vmatprep.subr.mxu0 0.0
      %2578 = vmatpush1.msra.mxu0 %v2395
      %2579 = vmatprep.subr.mxu0 0.0
      %2580 = vmatpush1.msra.mxu0 %v2396
      %2581 = vmatprep.subr.mxu0 0.0
      %2582 = vmatpush1.msra.mxu0 %v2397
      %2583 = vmatprep.subr.mxu0 0.0
      %2584 = vmatpush1.msra.mxu0 %v2398
      %2585 = vmatprep.subr.mxu0 0.0
      %2586 = vmatpush1.msra.mxu0 %v2399
      %2587 = vmatprep.subr.mxu0 0.0
      %2588 = vmatpush1.msra.mxu0 %v2400
      %2589 = vmatprep.subr.mxu0 0.0
      %2590 = vmatpush1.msra.mxu0 %v2401
      %2591 = vmatprep.subr.mxu0 0.0
      %2592 = vmatpush1.msra.mxu0 %v2402
      %2593 = vmatprep.subr.mxu0 0.0
      %2594 = vmatpush1.msra.mxu0 %v2403
      %2595 = vmatprep.subr.mxu0 0.0
      %2596 = vmatpush1.msra.mxu0 %v2404
      %2597 = vmatprep.subr.mxu0 0.0
      %2598 = vmatpush1.msra.mxu0 %v2405
      %2599 = vmatprep.subr.mxu0 0.0
      %2600 = vmatpush1.msra.mxu0 %v2406
      %2601 = vmatprep.subr.mxu0 0.0
      %2602 = vmatpush1.msra.mxu0 %v2407
      %2603 = vmatprep.subr.mxu0 0.0
      %2604 = vmatpush1.msra.mxu0 %v2408
      %2605 = vmatprep.subr.mxu0 0.0
      %2606 = vmatpush1.msra.mxu0 %v2409
      %2607 = vmatprep.subr.mxu0 0.0
      %2608 = vmatpush1.msra.mxu0 %v2410
      %2609 = vmatprep.subr.mxu0 0.0
      %2610 = vmatpush1.msra.mxu0 %v2411
      %2611 = vmatprep.subr.mxu0 0.0
      %2612 = vmatpush1.msra.mxu0 0.0
      %2613 = vmatprep.subr.mxu0 0.0
      %2614 = vmatpush1.msra.mxu0 0.0
      %2615 = vmatprep.mubr.f32.mxu0 %v2549
      %2616 = vmatmul.mubr.f32.gmra.mrb[0].mxu0 %v2545
      %v2617 = vpop.f32.mrb[0].mxu0
      %v2618 = vadd.f32 0.0, %v2617
      %v2619 = vpop.f32.mrb[0].mxu0
      %2620 = vdwg.mxu0
      %v2621 = vxor.u32 %v2030, 2147483648
      %v2622 = vmul.f32 %v2621, 1.442695
      %v2623 = vpow.pop %v2622
      %v2624 = vadd.f32 %v2623, 1.0
      %v2625 = vrcp.pop %v2624
      %v2626 = vmul.f32 1.0, %v2625
      %v2627 = vmul.f32 %v2030, %v2626
      %v2628 = vmul.f32 %v2627, 1.6666666
      %v2629 = vld [vmem:[%s20] sm:$0xff]
      %v2630 = vld [vmem:[%s20 + $0x8] sm:$0xff]
      %v2631 = vld [vmem:[%s20 + $0x10] sm:$0xff]
      %v2632 = vld [vmem:[%s22] sm:$0xff]
      %v2633 = vld [vmem:[%s22 + $0x8] sm:$0xff]
      %v2634 = vld [vmem:[%s23] sm:$0xff]
      %v2635 = vld [vmem:[%s21] sm:$0x1]
      %2637 = vrot.lane.b32.xlu0 %v2628, 120
      %v2638 = vpop.permute.xlu0 %2637
      %2641 = vrot.lane.b32.xlu0 %v2618, 120
      %v2642 = vpop.permute.xlu0 %2641
      %2644 = vrot.lane.b32.xlu0 %v2618, 96
      %v2645 = vpop.permute.xlu0 %2644
      %v2647 = vsel %vm2444, %v2638, %v2642
      %v2648 = vsel %vm957, %v2647, %v2645
      %v2650 = vlaneseq
      %v2651 = vshrl.u32 %v2650, 7
      %v2652 = vsub.s32 0, %v2651
      %v2653 = vrot.slane %v2635, %v2652
      %v2656 = vsel %vm2447, %v2648, 0
      %2658 = vmatprep.subr.mxu0 0.0
      %2659 = vmatpush1.msra.mxu0 %v2629
      %2660 = vmatprep.subr.mxu0 0.0
      %2661 = vmatpush1.msra.mxu0 %v2630
      %2662 = vmatprep.subr.mxu0 0.0
      %2663 = vmatpush1.msra.mxu0 %v2631
      %2664 = vmatprep.subr.mxu0 0.0
      %2665 = vmatpush1.msra.mxu0 0.0
      %2666 = vmatprep.subr.mxu0 0.0
      %2667 = vmatpush1.msra.mxu0 0.0
      %2668 = vmatprep.subr.mxu0 0.0
      %2669 = vmatpush1.msra.mxu0 0.0
      %2670 = vmatprep.subr.mxu0 0.0
      %2671 = vmatpush1.msra.mxu0 0.0
      %2672 = vmatprep.subr.mxu0 0.0
      %2673 = vmatpush1.msra.mxu0 0.0
      %2674 = vmatprep.subr.mxu0 0.0
      %2675 = vmatpush1.msra.mxu0 0.0
      %2676 = vmatprep.subr.mxu0 0.0
      %2677 = vmatpush1.msra.mxu0 0.0
      %2678 = vmatprep.subr.mxu0 0.0
      %2679 = vmatpush1.msra.mxu0 0.0
      %2680 = vmatprep.subr.mxu0 0.0
      %2681 = vmatpush1.msra.mxu0 0.0
      %2682 = vmatprep.subr.mxu0 0.0
      %2683 = vmatpush1.msra.mxu0 0.0
      %2684 = vmatprep.subr.mxu0 0.0
      %2685 = vmatpush1.msra.mxu0 0.0
      %2686 = vmatprep.subr.mxu0 0.0
      %2687 = vmatpush1.msra.mxu0 0.0
      %2688 = vmatprep.subr.mxu0 0.0
      %2689 = vmatpush1.msra.mxu0 0.0
      %2690 = vmatprep.subr.mxu0 0.0
      %2691 = vmatpush1.msra.mxu0 0.0
      %2692 = vmatprep.subr.mxu0 0.0
      %2693 = vmatpush1.msra.mxu0 0.0
      %2694 = vmatprep.subr.mxu0 0.0
      %2695 = vmatpush1.msra.mxu0 0.0
      %2696 = vmatprep.subr.mxu0 0.0
      %2697 = vmatpush1.msra.mxu0 0.0
      %2698 = vmatprep.subr.mxu0 0.0
      %2699 = vmatpush1.msra.mxu0 0.0
      %2700 = vmatprep.subr.mxu0 0.0
      %2701 = vmatpush1.msra.mxu0 0.0
      %2702 = vmatprep.subr.mxu0 0.0
      %2703 = vmatpush1.msra.mxu0 0.0
      %2704 = vmatprep.subr.mxu0 0.0
      %2705 = vmatpush1.msra.mxu0 0.0
      %2706 = vmatprep.subr.mxu0 0.0
      %2707 = vmatpush1.msra.mxu0 0.0
      %2708 = vmatprep.subr.mxu0 0.0
      %2709 = vmatpush1.msra.mxu0 0.0
      %2710 = vmatprep.subr.mxu0 0.0
      %2711 = vmatpush1.msra.mxu0 0.0
      %2712 = vmatprep.subr.mxu0 0.0
      %2713 = vmatpush1.msra.mxu0 0.0
      %2714 = vmatprep.subr.mxu0 0.0
      %2715 = vmatpush1.msra.mxu0 0.0
      %2716 = vmatprep.subr.mxu0 0.0
      %2717 = vmatpush1.msra.mxu0 0.0
      %2718 = vmatprep.subr.mxu0 0.0
      %2719 = vmatpush1.msra.mxu0 0.0
      %2720 = vmatprep.subr.mxu0 0.0
      %2721 = vmatpush1.msra.mxu0 0.0
      %2722 = vmatprep.mubr.f32.mxu0 0.0
      %2723 = vmatmul.mubr.f32.gmra.mrb[0].mxu0 %v2656
      %v2724 = vpop.f32.mrb[0].mxu0
      %v2725 = vadd.f32 %v2653, %v2724
      %v2726 = vpop.f32.mrb[0].mxu0
      %2727 = vdwg.mxu0
      %2728 = vrot.lane.b32.xlu0 %v2618, 104
      %v2729 = vpop.permute.xlu0 %2728
      %2731 = vrot.lane.b32.xlu0 %v2618, 80
      %v2732 = vpop.permute.xlu0 %2731
      %v2734 = vsel %vm2444, %v2729, %v2732
      %v2735 = vsel %vm2444, %v2642, %v2645
      %v2737 = vsel %vm957, %v2734, 0
      %2739 = vmatprep.subr.mxu0 0.0
      %2740 = vmatpush1.msra.mxu0 %v2632
      %2741 = vmatprep.subr.mxu0 0.0
      %2742 = vmatpush1.msra.mxu0 %v2633
      %2743 = vmatprep.subr.mxu0 0.0
      %2744 = vmatpush1.msra.mxu0 0.0
      %2745 = vmatprep.subr.mxu0 0.0
      %2746 = vmatpush1.msra.mxu0 0.0
      %2747 = vmatprep.subr.mxu0 0.0
      %2748 = vmatpush1.msra.mxu0 0.0
      %2749 = vmatprep.subr.mxu0 0.0
      %2750 = vmatpush1.msra.mxu0 0.0
      %2751 = vmatprep.subr.mxu0 0.0
      %2752 = vmatpush1.msra.mxu0 0.0
      %2753 = vmatprep.subr.mxu0 0.0
      %2754 = vmatpush1.msra.mxu0 0.0
      %2755 = vmatprep.subr.mxu0 0.0
      %2756 = vmatpush1.msra.mxu0 0.0
      %2757 = vmatprep.subr.mxu0 0.0
      %2758 = vmatpush1.msra.mxu0 0.0
      %2759 = vmatprep.subr.mxu0 0.0
      %2760 = vmatpush1.msra.mxu0 0.0
      %2761 = vmatprep.subr.mxu0 0.0
      %2762 = vmatpush1.msra.mxu0 0.0
      %2763 = vmatprep.subr.mxu0 0.0
      %2764 = vmatpush1.msra.mxu0 0.0
      %2765 = vmatprep.subr.mxu0 0.0
      %2766 = vmatpush1.msra.mxu0 0.0
      %2767 = vmatprep.subr.mxu0 0.0
      %2768 = vmatpush1.msra.mxu0 0.0
      %2769 = vmatprep.subr.mxu0 0.0
      %2770 = vmatpush1.msra.mxu0 0.0
      %2771 = vmatprep.subr.mxu0 0.0
      %2772 = vmatpush1.msra.mxu0 0.0
      %2773 = vmatprep.subr.mxu0 0.0
      %2774 = vmatpush1.msra.mxu0 0.0
      %2775 = vmatprep.subr.mxu0 0.0
      %2776 = vmatpush1.msra.mxu0 0.0
      %2777 = vmatprep.subr.mxu0 0.0
      %2778 = vmatpush1.msra.mxu0 0.0
      %2779 = vmatprep.subr.mxu0 0.0
      %2780 = vmatpush1.msra.mxu0 0.0
      %2781 = vmatprep.subr.mxu0 0.0
      %2782 = vmatpush1.msra.mxu0 0.0
      %2783 = vmatprep.subr.mxu0 0.0
      %2784 = vmatpush1.msra.mxu0 0.0
      %2785 = vmatprep.subr.mxu0 0.0
      %2786 = vmatpush1.msra.mxu0 0.0
      %2787 = vmatprep.subr.mxu0 0.0
      %2788 = vmatpush1.msra.mxu0 0.0
      %2789 = vmatprep.subr.mxu0 0.0
      %2790 = vmatpush1.msra.mxu0 0.0
      %2791 = vmatprep.subr.mxu0 0.0
      %2792 = vmatpush1.msra.mxu0 0.0
      %2793 = vmatprep.subr.mxu0 0.0
      %2794 = vmatpush1.msra.mxu0 0.0
      %2795 = vmatprep.subr.mxu0 0.0
      %2796 = vmatpush1.msra.mxu0 0.0
      %2797 = vmatprep.subr.mxu0 0.0
      %2798 = vmatpush1.msra.mxu0 0.0
      %2799 = vmatprep.subr.mxu0 0.0
      %2800 = vmatpush1.msra.mxu0 0.0
      %2801 = vmatprep.subr.mxu0 0.0
      %2802 = vmatpush1.msra.mxu0 0.0
      %2803 = vmatprep.mubr.f32.mxu0 0.0
      %2804 = vmatmul.mubr.f32.gmra.mrb[0].mxu0 %v2737
      %v2805 = vpop.f32.mrb[0].mxu0
      %v2806 = vadd.f32 0.0, %v2805
      %v2807 = vpop.f32.mrb[0].mxu0
      %2808 = vdwg.mxu0
      %v2810 = vsel %vm957, %v2735, 0
      %2812 = vmatprep.subr.mxu0 0.0
      %2813 = vmatpush1.msra.mxu0 %v2632
      %2814 = vmatprep.subr.mxu0 0.0
      %2815 = vmatpush1.msra.mxu0 %v2633
      %2816 = vmatprep.subr.mxu0 0.0
      %2817 = vmatpush1.msra.mxu0 0.0
      %2818 = vmatprep.subr.mxu0 0.0
      %2819 = vmatpush1.msra.mxu0 0.0
      %2820 = vmatprep.subr.mxu0 0.0
      %2821 = vmatpush1.msra.mxu0 0.0
      %2822 = vmatprep.subr.mxu0 0.0
      %2823 = vmatpush1.msra.mxu0 0.0
      %2824 = vmatprep.subr.mxu0 0.0
      %2825 = vmatpush1.msra.mxu0 0.0
      %2826 = vmatprep.subr.mxu0 0.0
      %2827 = vmatpush1.msra.mxu0 0.0
      %2828 = vmatprep.subr.mxu0 0.0
      %2829 = vmatpush1.msra.mxu0 0.0
      %2830 = vmatprep.subr.mxu0 0.0
      %2831 = vmatpush1.msra.mxu0 0.0
      %2832 = vmatprep.subr.mxu0 0.0
      %2833 = vmatpush1.msra.mxu0 0.0
      %2834 = vmatprep.subr.mxu0 0.0
      %2835 = vmatpush1.msra.mxu0 0.0
      %2836 = vmatprep.subr.mxu0 0.0
      %2837 = vmatpush1.msra.mxu0 0.0
      %2838 = vmatprep.subr.mxu0 0.0
      %2839 = vmatpush1.msra.mxu0 0.0
      %2840 = vmatprep.subr.mxu0 0.0
      %2841 = vmatpush1.msra.mxu0 0.0
      %2842 = vmatprep.subr.mxu0 0.0
      %2843 = vmatpush1.msra.mxu0 0.0
      %2844 = vmatprep.subr.mxu0 0.0
      %2845 = vmatpush1.msra.mxu0 0.0
      %2846 = vmatprep.subr.mxu0 0.0
      %2847 = vmatpush1.msra.mxu0 0.0
      %2848 = vmatprep.subr.mxu0 0.0
      %2849 = vmatpush1.msra.mxu0 0.0
      %2850 = vmatprep.subr.mxu0 0.0
      %2851 = vmatpush1.msra.mxu0 0.0
      %2852 = vmatprep.subr.mxu0 0.0
      %2853 = vmatpush1.msra.mxu0 0.0
      %2854 = vmatprep.subr.mxu0 0.0
      %2855 = vmatpush1.msra.mxu0 0.0
      %2856 = vmatprep.subr.mxu0 0.0
      %2857 = vmatpush1.msra.mxu0 0.0
      %2858 = vmatprep.subr.mxu0 0.0
      %2859 = vmatpush1.msra.mxu0 0.0
      %2860 = vmatprep.subr.mxu0 0.0
      %2861 = vmatpush1.msra.mxu0 0.0
      %2862 = vmatprep.subr.mxu0 0.0
      %2863 = vmatpush1.msra.mxu0 0.0
      %2864 = vmatprep.subr.mxu0 0.0
      %2865 = vmatpush1.msra.mxu0 0.0
      %2866 = vmatprep.subr.mxu0 0.0
      %2867 = vmatpush1.msra.mxu0 0.0
      %2868 = vmatprep.subr.mxu0 0.0
      %2869 = vmatpush1.msra.mxu0 0.0
      %2870 = vmatprep.subr.mxu0 0.0
      %2871 = vmatpush1.msra.mxu0 0.0
      %2872 = vmatprep.subr.mxu0 0.0
      %2873 = vmatpush1.msra.mxu0 0.0
      %2874 = vmatprep.subr.mxu0 0.0
      %2875 = vmatpush1.msra.mxu0 0.0
      %2876 = vmatprep.mubr.f32.mxu0 0.0
      %2877 = vmatmul.mubr.f32.gmra.mrb[0].mxu0 %v2810
      %v2878 = vpop.f32.mrb[0].mxu0
      %v2879 = vadd.f32 0.0, %v2878
      %v2880 = vpop.f32.mrb[0].mxu0
      %2881 = vdwg.mxu0
      %2883 = vrot.lane.b32.xlu0 %v2879, 112
      %v2884 = vpop.permute.xlu0 %2883
      %v2886 = vsub.f32 %v2806, %v2884
      %2887 = vrot.lane.b32.xlu0 %v2879, 16
      %v2888 = vpop.permute.xlu0 %2887
      %v2890 = vadd.f32 %v2806, %v2888
      %2891 = vrot.lane.b32.xlu0 %v2618, 64
      %v2892 = vpop.permute.xlu0 %2891
      %v2893 = vsel %vm2444, %v2892, 0
      %2895 = vmatprep.subr.mxu0 0.0
      %2896 = vmatpush1.msra.mxu0 %v2634
      %2897 = vmatprep.subr.mxu0 0.0
      %2898 = vmatpush1.msra.mxu0 0.0
      %2899 = vmatprep.subr.mxu0 0.0
      %2900 = vmatpush1.msra.mxu0 0.0
      %2901 = vmatprep.subr.mxu0 0.0
      %2902 = vmatpush1.msra.mxu0 0.0
      %2903 = vmatprep.subr.mxu0 0.0
      %2904 = vmatpush1.msra.mxu0 0.0
      %2905 = vmatprep.subr.mxu0 0.0
      %2906 = vmatpush1.msra.mxu0 0.0
      %2907 = vmatprep.subr.mxu0 0.0
      %2908 = vmatpush1.msra.mxu0 0.0
      %2909 = vmatprep.subr.mxu0 0.0
      %2910 = vmatpush1.msra.mxu0 0.0
      %2911 = vmatprep.subr.mxu0 0.0
      %2912 = vmatpush1.msra.mxu0 0.0
      %2913 = vmatprep.subr.mxu0 0.0
      %2914 = vmatpush1.msra.mxu0 0.0
      %2915 = vmatprep.subr.mxu0 0.0
      %2916 = vmatpush1.msra.mxu0 0.0
      %2917 = vmatprep.subr.mxu0 0.0
      %2918 = vmatpush1.msra.mxu0 0.0
      %2919 = vmatprep.subr.mxu0 0.0
      %2920 = vmatpush1.msra.mxu0 0.0
      %2921 = vmatprep.subr.mxu0 0.0
      %2922 = vmatpush1.msra.mxu0 0.0
      %2923 = vmatprep.subr.mxu0 0.0
      %2924 = vmatpush1.msra.mxu0 0.0
      %2925 = vmatprep.subr.mxu0 0.0
      %2926 = vmatpush1.msra.mxu0 0.0
      %2927 = vmatprep.subr.mxu0 0.0
      %2928 = vmatpush1.msra.mxu0 0.0
      %2929 = vmatprep.subr.mxu0 0.0
      %2930 = vmatpush1.msra.mxu0 0.0
      %2931 = vmatprep.subr.mxu0 0.0
      %2932 = vmatpush1.msra.mxu0 0.0
      %2933 = vmatprep.subr.mxu0 0.0
      %2934 = vmatpush1.msra.mxu0 0.0
      %2935 = vmatprep.subr.mxu0 0.0
      %2936 = vmatpush1.msra.mxu0 0.0
      %2937 = vmatprep.subr.mxu0 0.0
      %2938 = vmatpush1.msra.mxu0 0.0
      %2939 = vmatprep.subr.mxu0 0.0
      %2940 = vmatpush1.msra.mxu0 0.0
      %2941 = vmatprep.subr.mxu0 0.0
      %2942 = vmatpush1.msra.mxu0 0.0
      %2943 = vmatprep.subr.mxu0 0.0
      %2944 = vmatpush1.msra.mxu0 0.0
      %2945 = vmatprep.subr.mxu0 0.0
      %2946 = vmatpush1.msra.mxu0 0.0
      %2947 = vmatprep.subr.mxu0 0.0
      %2948 = vmatpush1.msra.mxu0 0.0
      %2949 = vmatprep.subr.mxu0 0.0
      %2950 = vmatpush1.msra.mxu0 0.0
      %2951 = vmatprep.subr.mxu0 0.0
      %2952 = vmatpush1.msra.mxu0 0.0
      %2953 = vmatprep.subr.mxu0 0.0
      %2954 = vmatpush1.msra.mxu0 0.0
      %2955 = vmatprep.subr.mxu0 0.0
      %2956 = vmatpush1.msra.mxu0 0.0
      %2957 = vmatprep.subr.mxu0 0.0
      %2958 = vmatpush1.msra.mxu0 0.0
      %2959 = vmatprep.mubr.f32.mxu0 0.0
      %2960 = vmatmul.mubr.f32.gmra.mrb[0].mxu0 %v2893
      %v2961 = vpop.f32.mrb[0].mxu0
      %v2962 = vadd.f32 0.0, %v2961
      %v2963 = vpop.f32.mrb[0].mxu0
      %2964 = vdwg.mxu0
      %v2965 = vsel %vm2444, %v2645, 0
      %2967 = vmatprep.subr.mxu0 0.0
      %2968 = vmatpush1.msra.mxu0 %v2634
      %2969 = vmatprep.subr.mxu0 0.0
      %2970 = vmatpush1.msra.mxu0 0.0
      %2971 = vmatprep.subr.mxu0 0.0
      %2972 = vmatpush1.msra.mxu0 0.0
      %2973 = vmatprep.subr.mxu0 0.0
      %2974 = vmatpush1.msra.mxu0 0.0
      %2975 = vmatprep.subr.mxu0 0.0
      %2976 = vmatpush1.msra.mxu0 0.0
      %2977 = vmatprep.subr.mxu0 0.0
      %2978 = vmatpush1.msra.mxu0 0.0
      %2979 = vmatprep.subr.mxu0 0.0
      %2980 = vmatpush1.msra.mxu0 0.0
      %2981 = vmatprep.subr.mxu0 0.0
      %2982 = vmatpush1.msra.mxu0 0.0
      %2983 = vmatprep.subr.mxu0 0.0
      %2984 = vmatpush1.msra.mxu0 0.0
      %2985 = vmatprep.subr.mxu0 0.0
      %2986 = vmatpush1.msra.mxu0 0.0
      %2987 = vmatprep.subr.mxu0 0.0
      %2988 = vmatpush1.msra.mxu0 0.0
      %2989 = vmatprep.subr.mxu0 0.0
      %2990 = vmatpush1.msra.mxu0 0.0
      %2991 = vmatprep.subr.mxu0 0.0
      %2992 = vmatpush1.msra.mxu0 0.0
      %2993 = vmatprep.subr.mxu0 0.0
      %2994 = vmatpush1.msra.mxu0 0.0
      %2995 = vmatprep.subr.mxu0 0.0
      %2996 = vmatpush1.msra.mxu0 0.0
      %2997 = vmatprep.subr.mxu0 0.0
      %2998 = vmatpush1.msra.mxu0 0.0
      %2999 = vmatprep.subr.mxu0 0.0
      %3000 = vmatpush1.msra.mxu0 0.0
      %3001 = vmatprep.subr.mxu0 0.0
      %3002 = vmatpush1.msra.mxu0 0.0
      %3003 = vmatprep.subr.mxu0 0.0
      %3004 = vmatpush1.msra.mxu0 0.0
      %3005 = vmatprep.subr.mxu0 0.0
      %3006 = vmatpush1.msra.mxu0 0.0
      %3007 = vmatprep.subr.mxu0 0.0
      %3008 = vmatpush1.msra.mxu0 0.0
      %3009 = vmatprep.subr.mxu0 0.0
      %3010 = vmatpush1.msra.mxu0 0.0
      %3011 = vmatprep.subr.mxu0 0.0
      %3012 = vmatpush1.msra.mxu0 0.0
      %3013 = vmatprep.subr.mxu0 0.0
      %3014 = vmatpush1.msra.mxu0 0.0
      %3015 = vmatprep.subr.mxu0 0.0
      %3016 = vmatpush1.msra.mxu0 0.0
      %3017 = vmatprep.subr.mxu0 0.0
      %3018 = vmatpush1.msra.mxu0 0.0
      %3019 = vmatprep.subr.mxu0 0.0
      %3020 = vmatpush1.msra.mxu0 0.0
      %3021 = vmatprep.subr.mxu0 0.0
      %3022 = vmatpush1.msra.mxu0 0.0
      %3023 = vmatprep.subr.mxu0 0.0
      %3024 = vmatpush1.msra.mxu0 0.0
      %3025 = vmatprep.subr.mxu0 0.0
      %3026 = vmatpush1.msra.mxu0 0.0
      %3027 = vmatprep.subr.mxu0 0.0
      %3028 = vmatpush1.msra.mxu0 0.0
      %3029 = vmatprep.subr.mxu0 0.0
      %3030 = vmatpush1.msra.mxu0 0.0
      %3031 = vmatprep.mubr.f32.mxu0 0.0
      %3032 = vmatmul.mubr.f32.gmra.mrb[0].mxu0 %v2965
      %v3033 = vpop.f32.mrb[0].mxu0
      %v3034 = vadd.f32 0.0, %v3033
      %v3035 = vpop.f32.mrb[0].mxu0
      %3036 = vdwg.mxu0
      %3038 = vrot.lane.b32.xlu0 %v3034, 120
      %v3039 = vpop.permute.xlu0 %3038
      %v3041 = vsub.f32 %v2962, %v3039
      %3042 = vrot.lane.b32.xlu0 %v3034, 8
      %v3043 = vpop.permute.xlu0 %3042
      %v3045 = vadd.f32 %v2962, %v3043
      %v3046 = vld [vmem:[%s26] sm:$0x3]
      %v3047 = vld [vmem:[%s24] sm:$0x1]
      %v3048 = vld [vmem:[%s25] sm:$0x1]
      %vm3049 = vcmask 31744
      %v3050 = vsel %vm3049, %v2030, 0.0
      %3051 = vadd.xlane.f32.xlu0 %v3050
      %v3052 = vpop.xlane.xlu0 %3051
      %v3053 = vrcp.pop 4.0
      %v3054 = vmul.f32 %v3052, %v3053
      %v3055 = vsub.f32 %v2030, %v3054
      %v3056 = vmul.f32 %v3055, %v3055
      %v3057 = vsel %vm3049, %v3056, 0.0
      %3058 = vadd.xlane.f32.xlu0 %v3057
      %v3059 = vpop.xlane.xlu0 %3058
      %v3060 = vmul.f32 %v3059, %v3053
      %v3061 = vadd.f32 %v3060, 1e-05
      %v3062 = vrsqrt.pop %v3061
      %v3063 = vmul.f32 %v3055, %v3062
      %v3065 = vlaneseq
      %v3066 = vshrl.u32 %v3065, 7
      %v3067 = vsub.s32 0, %v3066
      %v3068 = vrot.slane %v3047, %v3067
      %v3070 = vmul.f32 %v3063, %v3068
      %v3072 = vlaneseq
      %v3073 = vshrl.u32 %v3072, 7
      %v3074 = vsub.s32 0, %v3073
      %v3075 = vrot.slane %v3048, %v3074
      %v3077 = vadd.f32 %v3070, %v3075
      %v3078 = vmul.f32 %v3077, 0.6
      %v3079 = vmul.f32 %v3077, 0.4
      %v3080 = vxor.u32 %v3077, 2147483648
      %v3081 = vmul.f32 %v3080, 1.442695
      %v3082 = vpow.pop %v3081
      %v3083 = vadd.f32 %v3082, 1.0
      %v3084 = vrcp.pop %v3083
      %v3085 = vmul.f32 1.0, %v3084
      %v3086 = vmul.f32 %v3085, 2.0
      %v3087 = vsub.f32 %v3086, 1.0
      %v3088 = vmul.f32 %v3079, %v3087
      %v3089 = vadd.f32 %v3078, %v3088
      %v3090 = vlaneseq
      %v3091 = vshrl.u32 %v3090, 7
      %v3092 = vsub.s32 0, %v3091
      %v3093 = vrot.slane %v3046, %v3092
      %v3094 = vmul.f32 %v3089, %v3093
      %v3095 = vsel %vm3049, %v3094, 0.0
      %3096 = vadd.xlane.f32.xlu0 %v3095
      %v3097 = vpop.xlane.xlu0 %3096
      %3098 = vrot.lane.b32.xlu0 %v2030, 124
      %v3099 = vpop.permute.xlu0 %3098
      %v3101 = vsel %vm3049, %v3099, 0.0
      %3102 = vadd.xlane.f32.xlu0 %v3101
      %v3103 = vpop.xlane.xlu0 %3102
      %v3104 = vmul.f32 %v3103, %v3053
      %v3105 = vsub.f32 %v2030, %v3104
      %v3106 = vmul.f32 %v3105, %v3105
      %3108 = vrot.lane.b32.xlu0 %v3106, 124
      %v3109 = vpop.permute.xlu0 %3108
      %v3111 = vsel %vm3049, %v3109, 0.0
      %3112 = vadd.xlane.f32.xlu0 %v3111
      %v3113 = vpop.xlane.xlu0 %3112
      %v3114 = vmul.f32 %v3113, %v3053
      %v3115 = vadd.f32 %v3114, 1e-05
      %v3116 = vrsqrt.pop %v3115
      %v3117 = vmul.f32 %v3105, %v3116
      %3118 = vrot.lane.b32.xlu0 %v3068, 4
      %v3119 = vpop.permute.xlu0 %3118
      %v3121 = vmul.f32 %v3117, %v3119
      %3122 = vrot.lane.b32.xlu0 %v3075, 4
      %v3123 = vpop.permute.xlu0 %3122
      %v3125 = vadd.f32 %v3121, %v3123
      %v3126 = vmul.f32 %v3125, 0.6
      %v3127 = vmul.f32 %v3125, 0.4
      %v3128 = vxor.u32 %v3125, 2147483648
      %v3129 = vmul.f32 %v3128, 1.442695
      %v3130 = vpow.pop %v3129
      %v3131 = vadd.f32 %v3130, 1.0
      %v3132 = vrcp.pop %v3131
      %v3133 = vmul.f32 1.0, %v3132
      %v3134 = vmul.f32 %v3133, 2.0
      %v3135 = vsub.f32 %v3134, 1.0
      %v3136 = vmul.f32 %v3127, %v3135
      %v3137 = vadd.f32 %v3126, %v3136
      %v3138 = vlaneseq
      %v3139 = vshrl.u32 %v3138, 7
      %v3140 = vsub.s32 1, %v3139
      %v3141 = vrot.slane %v3046, %v3140
      %3143 = vrot.lane.b32.xlu0 %v3141, 4
      %v3144 = vpop.permute.xlu0 %3143
      %v3146 = vmul.f32 %v3137, %v3144
      %3148 = vrot.lane.b32.xlu0 %v3146, 124
      %v3149 = vpop.permute.xlu0 %3148
      %v3151 = vsel %vm3049, %v3149, 0.0
      %3152 = vadd.xlane.f32.xlu0 %v3151
      %v3153 = vpop.xlane.xlu0 %3152
      %vm3154 = vcmask 7168
      %v3155 = vsel %vm3154, %v3097, %v3153
      %v3156 = vld [vmem:[%s863] sm:$0xff]
      %3158 = vset.pattern.permute.xlu0 0
      %3159 = vperm.xlu0 %3158, %v3156
      %v3160 = vpop.permute.xlu0 %3159
      %v3162 = vmul.f32 %v3160, %v2725
      %3163 = vset.pattern.permute.xlu0 1
      %3164 = vperm.xlu0 %3163, %v3156
      %v3165 = vpop.permute.xlu0 %3164
      %v3167 = vmul.f32 %v3165, %v2890
      %3169 = vrot.lane.b32.xlu0 %v3167, 112
      %v3170 = vpop.permute.xlu0 %3169
      %v3172 = vadd.f32 %v3162, %v3170
      %3173 = vset.pattern.permute.xlu0 2
      %3174 = vperm.xlu0 %3173, %v3156
      %v3175 = vpop.permute.xlu0 %3174
      %v3177 = vmul.f32 %v3175, %v2725
      %3179 = vrot.lane.b32.xlu0 %v3177, 120
      %v3180 = vpop.permute.xlu0 %3179
      %v3182 = vadd.f32 %v3172, %v3180
      %3183 = vset.pattern.permute.xlu0 3
      %3184 = vperm.xlu0 %3183, %v3156
      %v3185 = vpop.permute.xlu0 %3184
      %v3187 = vmul.f32 %v3185, %v2886
      %v3188 = vadd.f32 %v3182, %v3187
      %3189 = vset.pattern.permute.xlu0 4
      %3190 = vperm.xlu0 %3189, %v3156
      %v3191 = vpop.permute.xlu0 %3190
      %v3193 = vmul.f32 %v3191, %v3045
      %3195 = vrot.lane.b32.xlu0 %v3193, 120
      %v3196 = vpop.permute.xlu0 %3195
      %v3198 = vadd.f32 %v3188, %v3196
      %3199 = vset.pattern.permute.xlu0 5
      %3200 = vperm.xlu0 %3199, %v3156
      %v3201 = vpop.permute.xlu0 %3200
      %v3203 = vmul.f32 %v3201, %v2890
      %3205 = vrot.lane.b32.xlu0 %v3203, 104
      %v3206 = vpop.permute.xlu0 %3205
      %v3208 = vadd.f32 %v3198, %v3206
      %3209 = vset.pattern.permute.xlu0 6
      %3210 = vperm.xlu0 %3209, %v3156
      %v3211 = vpop.permute.xlu0 %3210
      %v3213 = vmul.f32 %v3211, %v2725
      %3215 = vrot.lane.b32.xlu0 %v3213, 112
      %v3216 = vpop.permute.xlu0 %3215
      %v3218 = vadd.f32 %v3208, %v3216
      %3219 = vset.pattern.permute.xlu0 7
      %3220 = vperm.xlu0 %3219, %v3156
      %v3221 = vpop.permute.xlu0 %3220
      %v3223 = vmul.f32 %v3221, %v2886
      %3225 = vrot.lane.b32.xlu0 %v3223, 120
      %v3226 = vpop.permute.xlu0 %3225
      %v3228 = vadd.f32 %v3218, %v3226
      %3229 = vset.pattern.permute.xlu0 8
      %3230 = vperm.xlu0 %3229, %v3156
      %v3231 = vpop.permute.xlu0 %3230
      %v3233 = vmul.f32 %v3231, %v3041
      %v3234 = vadd.f32 %v3228, %v3233
      %3235 = vset.pattern.permute.xlu0 9
      %3236 = vperm.xlu0 %3235, %v3156
      %v3237 = vpop.permute.xlu0 %3236
      %v3239 = vmul.f32 %v3237, %v2725
      %3240 = vset.pattern.permute.xlu0 10
      %3241 = vperm.xlu0 %3240, %v3156
      %v3242 = vpop.permute.xlu0 %3241
      %v3244 = vmul.f32 %v3242, %v2890
      %3246 = vrot.lane.b32.xlu0 %v3244, 112
      %v3247 = vpop.permute.xlu0 %3246
      %v3249 = vadd.f32 %v3239, %v3247
      %3250 = vset.pattern.permute.xlu0 11
      %3251 = vperm.xlu0 %3250, %v3156
      %v3252 = vpop.permute.xlu0 %3251
      %v3254 = vmul.f32 %v3252, %v2725
      %3256 = vrot.lane.b32.xlu0 %v3254, 120
      %v3257 = vpop.permute.xlu0 %3256
      %v3259 = vadd.f32 %v3249, %v3257
      %3260 = vset.pattern.permute.xlu0 12
      %3261 = vperm.xlu0 %3260, %v3156
      %v3262 = vpop.permute.xlu0 %3261
      %v3264 = vmul.f32 %v3262, %v2886
      %v3265 = vadd.f32 %v3259, %v3264
      %3266 = vset.pattern.permute.xlu0 13
      %3267 = vperm.xlu0 %3266, %v3156
      %v3268 = vpop.permute.xlu0 %3267
      %v3270 = vmul.f32 %v3268, %v3045
      %3272 = vrot.lane.b32.xlu0 %v3270, 120
      %v3273 = vpop.permute.xlu0 %3272
      %v3275 = vadd.f32 %v3265, %v3273
      %3276 = vset.pattern.permute.xlu0 14
      %3277 = vperm.xlu0 %3276, %v3156
      %v3278 = vpop.permute.xlu0 %3277
      %v3280 = vmul.f32 %v3278, %v2890
      %3282 = vrot.lane.b32.xlu0 %v3280, 104
      %v3283 = vpop.permute.xlu0 %3282
      %v3285 = vadd.f32 %v3275, %v3283
      %3286 = vset.pattern.permute.xlu0 15
      %3287 = vperm.xlu0 %3286, %v3156
      %v3288 = vpop.permute.xlu0 %3287
      %v3290 = vmul.f32 %v3288, %v2725
      %3292 = vrot.lane.b32.xlu0 %v3290, 112
      %v3293 = vpop.permute.xlu0 %3292
      %v3295 = vadd.f32 %v3285, %v3293
      %3296 = vset.pattern.permute.xlu0 16
      %3297 = vperm.xlu0 %3296, %v3156
      %v3298 = vpop.permute.xlu0 %3297
      %v3300 = vmul.f32 %v3298, %v2886
      %3302 = vrot.lane.b32.xlu0 %v3300, 120
      %v3303 = vpop.permute.xlu0 %3302
      %v3305 = vadd.f32 %v3295, %v3303
      %3306 = vset.pattern.permute.xlu0 17
      %3307 = vperm.xlu0 %3306, %v3156
      %v3308 = vpop.permute.xlu0 %3307
      %v3310 = vmul.f32 %v3308, %v3041
      %v3311 = vadd.f32 %v3305, %v3310
      %3312 = vset.pattern.permute.xlu0 18
      %3313 = vperm.xlu0 %3312, %v3156
      %v3314 = vpop.permute.xlu0 %3313
      %v3316 = vmul.f32 %v3314, %v2725
      %3317 = vset.pattern.permute.xlu0 19
      %3318 = vperm.xlu0 %3317, %v3156
      %v3319 = vpop.permute.xlu0 %3318
      %v3321 = vmul.f32 %v3319, %v2890
      %3323 = vrot.lane.b32.xlu0 %v3321, 112
      %v3324 = vpop.permute.xlu0 %3323
      %v3326 = vadd.f32 %v3316, %v3324
      %3327 = vset.pattern.permute.xlu0 20
      %3328 = vperm.xlu0 %3327, %v3156
      %v3329 = vpop.permute.xlu0 %3328
      %v3331 = vmul.f32 %v3329, %v2725
      %3333 = vrot.lane.b32.xlu0 %v3331, 120
      %v3334 = vpop.permute.xlu0 %3333
      %v3336 = vadd.f32 %v3326, %v3334
      %3337 = vset.pattern.permute.xlu0 21
      %3338 = vperm.xlu0 %3337, %v3156
      %v3339 = vpop.permute.xlu0 %3338
      %v3341 = vmul.f32 %v3339, %v2886
      %v3342 = vadd.f32 %v3336, %v3341
      %3343 = vset.pattern.permute.xlu0 22
      %3344 = vperm.xlu0 %3343, %v3156
      %v3345 = vpop.permute.xlu0 %3344
      %v3347 = vmul.f32 %v3345, %v3045
      %3349 = vrot.lane.b32.xlu0 %v3347, 120
      %v3350 = vpop.permute.xlu0 %3349
      %v3352 = vadd.f32 %v3342, %v3350
      %3353 = vset.pattern.permute.xlu0 23
      %3354 = vperm.xlu0 %3353, %v3156
      %v3355 = vpop.permute.xlu0 %3354
      %v3357 = vmul.f32 %v3355, %v2890
      %3359 = vrot.lane.b32.xlu0 %v3357, 104
      %v3360 = vpop.permute.xlu0 %3359
      %v3362 = vadd.f32 %v3352, %v3360
      %3363 = vset.pattern.permute.xlu0 24
      %3364 = vperm.xlu0 %3363, %v3156
      %v3365 = vpop.permute.xlu0 %3364
      %v3367 = vmul.f32 %v3365, %v2725
      %3369 = vrot.lane.b32.xlu0 %v3367, 112
      %v3370 = vpop.permute.xlu0 %3369
      %v3372 = vadd.f32 %v3362, %v3370
      %3373 = vset.pattern.permute.xlu0 25
      %3374 = vperm.xlu0 %3373, %v3156
      %v3375 = vpop.permute.xlu0 %3374
      %v3377 = vmul.f32 %v3375, %v2886
      %3379 = vrot.lane.b32.xlu0 %v3377, 120
      %v3380 = vpop.permute.xlu0 %3379
      %v3382 = vadd.f32 %v3372, %v3380
      %3383 = vset.pattern.permute.xlu0 26
      %3384 = vperm.xlu0 %3383, %v3156
      %v3385 = vpop.permute.xlu0 %3384
      %v3387 = vmul.f32 %v3385, %v3041
      %v3388 = vadd.f32 %v3382, %v3387
      %3389 = vset.pattern.permute.xlu0 27
      %3390 = vperm.xlu0 %3389, %v3156
      %v3391 = vpop.permute.xlu0 %3390
      %v3393 = vmul.f32 %v3391, %v2725
      %3394 = vset.pattern.permute.xlu0 28
      %3395 = vperm.xlu0 %3394, %v3156
      %v3396 = vpop.permute.xlu0 %3395
      %v3398 = vmul.f32 %v3396, %v2890
      %3400 = vrot.lane.b32.xlu0 %v3398, 112
      %v3401 = vpop.permute.xlu0 %3400
      %v3403 = vadd.f32 %v3393, %v3401
      %3404 = vset.pattern.permute.xlu0 29
      %3405 = vperm.xlu0 %3404, %v3156
      %v3406 = vpop.permute.xlu0 %3405
      %v3408 = vmul.f32 %v3406, %v2725
      %3410 = vrot.lane.b32.xlu0 %v3408, 120
      %v3411 = vpop.permute.xlu0 %3410
      %v3413 = vadd.f32 %v3403, %v3411
      %3414 = vset.pattern.permute.xlu0 30
      %3415 = vperm.xlu0 %3414, %v3156
      %v3416 = vpop.permute.xlu0 %3415
      %v3418 = vmul.f32 %v3416, %v2886
      %v3419 = vadd.f32 %v3413, %v3418
      %3420 = vset.pattern.permute.xlu0 31
      %3421 = vperm.xlu0 %3420, %v3156
      %v3422 = vpop.permute.xlu0 %3421
      %v3424 = vmul.f32 %v3422, %v3045
      %3426 = vrot.lane.b32.xlu0 %v3424, 120
      %v3427 = vpop.permute.xlu0 %3426
      %v3429 = vadd.f32 %v3419, %v3427
      %3430 = vset.pattern.permute.xlu0 32
      %3431 = vperm.xlu0 %3430, %v3156
      %v3432 = vpop.permute.xlu0 %3431
      %v3434 = vmul.f32 %v3432, %v2890
      %3436 = vrot.lane.b32.xlu0 %v3434, 104
      %v3437 = vpop.permute.xlu0 %3436
      %v3439 = vadd.f32 %v3429, %v3437
      %3440 = vset.pattern.permute.xlu0 33
      %3441 = vperm.xlu0 %3440, %v3156
      %v3442 = vpop.permute.xlu0 %3441
      %v3444 = vmul.f32 %v3442, %v2725
      %3446 = vrot.lane.b32.xlu0 %v3444, 112
      %v3447 = vpop.permute.xlu0 %3446
      %v3449 = vadd.f32 %v3439, %v3447
      %3450 = vset.pattern.permute.xlu0 34
      %3451 = vperm.xlu0 %3450, %v3156
      %v3452 = vpop.permute.xlu0 %3451
      %v3454 = vmul.f32 %v3452, %v2886
      %3456 = vrot.lane.b32.xlu0 %v3454, 120
      %v3457 = vpop.permute.xlu0 %3456
      %v3459 = vadd.f32 %v3449, %v3457
      %3460 = vset.pattern.permute.xlu0 35
      %3461 = vperm.xlu0 %3460, %v3156
      %v3462 = vpop.permute.xlu0 %3461
      %v3464 = vmul.f32 %v3462, %v3041
      %v3465 = vadd.f32 %v3459, %v3464
      %3466 = vset.pattern.permute.xlu0 36
      %3467 = vperm.xlu0 %3466, %v3156
      %v3468 = vpop.permute.xlu0 %3467
      %v3470 = vmul.f32 %v3468, %v2725
      %3471 = vset.pattern.permute.xlu0 37
      %3472 = vperm.xlu0 %3471, %v3156
      %v3473 = vpop.permute.xlu0 %3472
      %v3475 = vmul.f32 %v3473, %v2890
      %3477 = vrot.lane.b32.xlu0 %v3475, 112
      %v3478 = vpop.permute.xlu0 %3477
      %v3480 = vadd.f32 %v3470, %v3478
      %3481 = vset.pattern.permute.xlu0 38
      %3482 = vperm.xlu0 %3481, %v3156
      %v3483 = vpop.permute.xlu0 %3482
      %v3485 = vmul.f32 %v3483, %v2725
      %3487 = vrot.lane.b32.xlu0 %v3485, 120
      %v3488 = vpop.permute.xlu0 %3487
      %v3490 = vadd.f32 %v3480, %v3488
      %3491 = vset.pattern.permute.xlu0 39
      %3492 = vperm.xlu0 %3491, %v3156
      %v3493 = vpop.permute.xlu0 %3492
      %v3495 = vmul.f32 %v3493, %v2886
      %v3496 = vadd.f32 %v3490, %v3495
      %3497 = vset.pattern.permute.xlu0 40
      %3498 = vperm.xlu0 %3497, %v3156
      %v3499 = vpop.permute.xlu0 %3498
      %v3501 = vmul.f32 %v3499, %v3045
      %3503 = vrot.lane.b32.xlu0 %v3501, 120
      %v3504 = vpop.permute.xlu0 %3503
      %v3506 = vadd.f32 %v3496, %v3504
      %3507 = vset.pattern.permute.xlu0 41
      %3508 = vperm.xlu0 %3507, %v3156
      %v3509 = vpop.permute.xlu0 %3508
      %v3511 = vmul.f32 %v3509, %v2890
      %3513 = vrot.lane.b32.xlu0 %v3511, 104
      %v3514 = vpop.permute.xlu0 %3513
      %v3516 = vadd.f32 %v3506, %v3514
      %3517 = vset.pattern.permute.xlu0 42
      %3518 = vperm.xlu0 %3517, %v3156
      %v3519 = vpop.permute.xlu0 %3518
      %v3521 = vmul.f32 %v3519, %v2725
      %3523 = vrot.lane.b32.xlu0 %v3521, 112
      %v3524 = vpop.permute.xlu0 %3523
      %v3526 = vadd.f32 %v3516, %v3524
      %3527 = vset.pattern.permute.xlu0 43
      %3528 = vperm.xlu0 %3527, %v3156
      %v3529 = vpop.permute.xlu0 %3528
      %v3531 = vmul.f32 %v3529, %v2886
      %3533 = vrot.lane.b32.xlu0 %v3531, 120
      %v3534 = vpop.permute.xlu0 %3533
      %v3536 = vadd.f32 %v3526, %v3534
      %3537 = vset.pattern.permute.xlu0 44
      %3538 = vperm.xlu0 %3537, %v3156
      %v3539 = vpop.permute.xlu0 %3538
      %v3541 = vmul.f32 %v3539, %v3041
      %v3542 = vadd.f32 %v3536, %v3541
      %3543 = vset.pattern.permute.xlu0 45
      %3544 = vperm.xlu0 %3543, %v3156
      %v3545 = vpop.permute.xlu0 %3544
      %v3547 = vmul.f32 %v3545, %v2725
      %3548 = vset.pattern.permute.xlu0 46
      %3549 = vperm.xlu0 %3548, %v3156
      %v3550 = vpop.permute.xlu0 %3549
      %v3552 = vmul.f32 %v3550, %v2890
      %3554 = vrot.lane.b32.xlu0 %v3552, 112
      %v3555 = vpop.permute.xlu0 %3554
      %v3557 = vadd.f32 %v3547, %v3555
      %3558 = vset.pattern.permute.xlu0 47
      %3559 = vperm.xlu0 %3558, %v3156
      %v3560 = vpop.permute.xlu0 %3559
      %v3562 = vmul.f32 %v3560, %v2725
      %3564 = vrot.lane.b32.xlu0 %v3562, 120
      %v3565 = vpop.permute.xlu0 %3564
      %v3567 = vadd.f32 %v3557, %v3565
      %3568 = vset.pattern.permute.xlu0 48
      %3569 = vperm.xlu0 %3568, %v3156
      %v3570 = vpop.permute.xlu0 %3569
      %v3572 = vmul.f32 %v3570, %v2886
      %v3573 = vadd.f32 %v3567, %v3572
      %3574 = vset.pattern.permute.xlu0 49
      %3575 = vperm.xlu0 %3574, %v3156
      %v3576 = vpop.permute.xlu0 %3575
      %v3578 = vmul.f32 %v3576, %v3045
      %3580 = vrot.lane.b32.xlu0 %v3578, 120
      %v3581 = vpop.permute.xlu0 %3580
      %v3583 = vadd.f32 %v3573, %v3581
      %3584 = vset.pattern.permute.xlu0 50
      %3585 = vperm.xlu0 %3584, %v3156
      %v3586 = vpop.permute.xlu0 %3585
      %v3588 = vmul.f32 %v3586, %v2890
      %3590 = vrot.lane.b32.xlu0 %v3588, 104
      %v3591 = vpop.permute.xlu0 %3590
      %v3593 = vadd.f32 %v3583, %v3591
      %3594 = vset.pattern.permute.xlu0 51
      %3595 = vperm.xlu0 %3594, %v3156
      %v3596 = vpop.permute.xlu0 %3595
      %v3598 = vmul.f32 %v3596, %v2725
      %3600 = vrot.lane.b32.xlu0 %v3598, 112
      %v3601 = vpop.permute.xlu0 %3600
      %v3603 = vadd.f32 %v3593, %v3601
      %3604 = vset.pattern.permute.xlu0 52
      %3605 = vperm.xlu0 %3604, %v3156
      %v3606 = vpop.permute.xlu0 %3605
      %v3608 = vmul.f32 %v3606, %v2886
      %3610 = vrot.lane.b32.xlu0 %v3608, 120
      %v3611 = vpop.permute.xlu0 %3610
      %v3613 = vadd.f32 %v3603, %v3611
      %3614 = vset.pattern.permute.xlu0 53
      %3615 = vperm.xlu0 %3614, %v3156
      %v3616 = vpop.permute.xlu0 %3615
      %v3618 = vmul.f32 %v3616, %v3041
      %v3619 = vadd.f32 %v3613, %v3618
      %3620 = vset.pattern.permute.xlu0 54
      %3621 = vperm.xlu0 %3620, %v3156
      %v3622 = vpop.permute.xlu0 %3621
      %v3624 = vmul.f32 %v3622, %v2725
      %3625 = vset.pattern.permute.xlu0 55
      %3626 = vperm.xlu0 %3625, %v3156
      %v3627 = vpop.permute.xlu0 %3626
      %v3629 = vmul.f32 %v3627, %v2890
      %3631 = vrot.lane.b32.xlu0 %v3629, 112
      %v3632 = vpop.permute.xlu0 %3631
      %v3634 = vadd.f32 %v3624, %v3632
      %3635 = vset.pattern.permute.xlu0 56
      %3636 = vperm.xlu0 %3635, %v3156
      %v3637 = vpop.permute.xlu0 %3636
      %v3639 = vmul.f32 %v3637, %v2725
      %3641 = vrot.lane.b32.xlu0 %v3639, 120
      %v3642 = vpop.permute.xlu0 %3641
      %v3644 = vadd.f32 %v3634, %v3642
      %3645 = vset.pattern.permute.xlu0 57
      %3646 = vperm.xlu0 %3645, %v3156
      %v3647 = vpop.permute.xlu0 %3646
      %v3649 = vmul.f32 %v3647, %v2886
      %v3650 = vadd.f32 %v3644, %v3649
      %3651 = vset.pattern.permute.xlu0 58
      %3652 = vperm.xlu0 %3651, %v3156
      %v3653 = vpop.permute.xlu0 %3652
      %v3655 = vmul.f32 %v3653, %v3045
      %3657 = vrot.lane.b32.xlu0 %v3655, 120
      %v3658 = vpop.permute.xlu0 %3657
      %v3660 = vadd.f32 %v3650, %v3658
      %3661 = vset.pattern.permute.xlu0 59
      %3662 = vperm.xlu0 %3661, %v3156
      %v3663 = vpop.permute.xlu0 %3662
      %v3665 = vmul.f32 %v3663, %v2890
      %3667 = vrot.lane.b32.xlu0 %v3665, 104
      %v3668 = vpop.permute.xlu0 %3667
      %v3670 = vadd.f32 %v3660, %v3668
      %3671 = vset.pattern.permute.xlu0 60
      %3672 = vperm.xlu0 %3671, %v3156
      %v3673 = vpop.permute.xlu0 %3672
      %v3675 = vmul.f32 %v3673, %v2725
      %3677 = vrot.lane.b32.xlu0 %v3675, 112
      %v3678 = vpop.permute.xlu0 %3677
      %v3680 = vadd.f32 %v3670, %v3678
      %3681 = vset.pattern.permute.xlu0 61
      %3682 = vperm.xlu0 %3681, %v3156
      %v3683 = vpop.permute.xlu0 %3682
      %v3685 = vmul.f32 %v3683, %v2886
      %3687 = vrot.lane.b32.xlu0 %v3685, 120
      %v3688 = vpop.permute.xlu0 %3687
      %v3690 = vadd.f32 %v3680, %v3688
      %3691 = vset.pattern.permute.xlu0 62
      %3692 = vperm.xlu0 %3691, %v3156
      %v3693 = vpop.permute.xlu0 %3692
      %v3695 = vmul.f32 %v3693, %v3041
      %v3696 = vadd.f32 %v3690, %v3695
      %3697 = vset.pattern.permute.xlu0 63
      %3698 = vperm.xlu0 %3697, %v3156
      %v3699 = vpop.permute.xlu0 %3698
      %v3701 = vmul.f32 %v3699, %v2725
      %3702 = vset.pattern.permute.xlu0 64
      %3703 = vperm.xlu0 %3702, %v3156
      %v3704 = vpop.permute.xlu0 %3703
      %v3706 = vmul.f32 %v3704, %v2890
      %3708 = vrot.lane.b32.xlu0 %v3706, 112
      %v3709 = vpop.permute.xlu0 %3708
      %v3711 = vadd.f32 %v3701, %v3709
      %3712 = vset.pattern.permute.xlu0 65
      %3713 = vperm.xlu0 %3712, %v3156
      %v3714 = vpop.permute.xlu0 %3713
      %v3716 = vmul.f32 %v3714, %v2725
      %3718 = vrot.lane.b32.xlu0 %v3716, 120
      %v3719 = vpop.permute.xlu0 %3718
      %v3721 = vadd.f32 %v3711, %v3719
      %3722 = vset.pattern.permute.xlu0 66
      %3723 = vperm.xlu0 %3722, %v3156
      %v3724 = vpop.permute.xlu0 %3723
      %v3726 = vmul.f32 %v3724, %v2886
      %v3727 = vadd.f32 %v3721, %v3726
      %3728 = vset.pattern.permute.xlu0 67
      %3729 = vperm.xlu0 %3728, %v3156
      %v3730 = vpop.permute.xlu0 %3729
      %v3732 = vmul.f32 %v3730, %v3045
      %3734 = vrot.lane.b32.xlu0 %v3732, 120
      %v3735 = vpop.permute.xlu0 %3734
      %v3737 = vadd.f32 %v3727, %v3735
      %3738 = vset.pattern.permute.xlu0 68
      %3739 = vperm.xlu0 %3738, %v3156
      %v3740 = vpop.permute.xlu0 %3739
      %v3742 = vmul.f32 %v3740, %v2890
      %3744 = vrot.lane.b32.xlu0 %v3742, 104
      %v3745 = vpop.permute.xlu0 %3744
      %v3747 = vadd.f32 %v3737, %v3745
      %3748 = vset.pattern.permute.xlu0 69
      %3749 = vperm.xlu0 %3748, %v3156
      %v3750 = vpop.permute.xlu0 %3749
      %v3752 = vmul.f32 %v3750, %v2725
      %3754 = vrot.lane.b32.xlu0 %v3752, 112
      %v3755 = vpop.permute.xlu0 %3754
      %v3757 = vadd.f32 %v3747, %v3755
      %3758 = vset.pattern.permute.xlu0 70
      %3759 = vperm.xlu0 %3758, %v3156
      %v3760 = vpop.permute.xlu0 %3759
      %v3762 = vmul.f32 %v3760, %v2886
      %3764 = vrot.lane.b32.xlu0 %v3762, 120
      %v3765 = vpop.permute.xlu0 %3764
      %v3767 = vadd.f32 %v3757, %v3765
      %3768 = vset.pattern.permute.xlu0 71
      %3769 = vperm.xlu0 %3768, %v3156
      %v3770 = vpop.permute.xlu0 %3769
      %v3772 = vmul.f32 %v3770, %v3041
      %v3773 = vadd.f32 %v3767, %v3772
      %3774 = vset.pattern.permute.xlu0 72
      %3775 = vperm.xlu0 %3774, %v3156
      %v3776 = vpop.permute.xlu0 %3775
      %v3778 = vmul.f32 %v3776, %v2725
      %3779 = vset.pattern.permute.xlu0 73
      %3780 = vperm.xlu0 %3779, %v3156
      %v3781 = vpop.permute.xlu0 %3780
      %v3783 = vmul.f32 %v3781, %v2890
      %3785 = vrot.lane.b32.xlu0 %v3783, 112
      %v3786 = vpop.permute.xlu0 %3785
      %v3788 = vadd.f32 %v3778, %v3786
      %3789 = vset.pattern.permute.xlu0 74
      %3790 = vperm.xlu0 %3789, %v3156
      %v3791 = vpop.permute.xlu0 %3790
      %v3793 = vmul.f32 %v3791, %v2725
      %3795 = vrot.lane.b32.xlu0 %v3793, 120
      %v3796 = vpop.permute.xlu0 %3795
      %v3798 = vadd.f32 %v3788, %v3796
      %3799 = vset.pattern.permute.xlu0 75
      %3800 = vperm.xlu0 %3799, %v3156
      %v3801 = vpop.permute.xlu0 %3800
      %v3803 = vmul.f32 %v3801, %v2886
      %v3804 = vadd.f32 %v3798, %v3803
      %3805 = vset.pattern.permute.xlu0 76
      %3806 = vperm.xlu0 %3805, %v3156
      %v3807 = vpop.permute.xlu0 %3806
      %v3809 = vmul.f32 %v3807, %v3045
      %3811 = vrot.lane.b32.xlu0 %v3809, 120
      %v3812 = vpop.permute.xlu0 %3811
      %v3814 = vadd.f32 %v3804, %v3812
      %3815 = vset.pattern.permute.xlu0 77
      %3816 = vperm.xlu0 %3815, %v3156
      %v3817 = vpop.permute.xlu0 %3816
      %v3819 = vmul.f32 %v3817, %v2890
      %3821 = vrot.lane.b32.xlu0 %v3819, 104
      %v3822 = vpop.permute.xlu0 %3821
      %v3824 = vadd.f32 %v3814, %v3822
      %3825 = vset.pattern.permute.xlu0 78
      %3826 = vperm.xlu0 %3825, %v3156
      %v3827 = vpop.permute.xlu0 %3826
      %v3829 = vmul.f32 %v3827, %v2725
      %3831 = vrot.lane.b32.xlu0 %v3829, 112
      %v3832 = vpop.permute.xlu0 %3831
      %v3834 = vadd.f32 %v3824, %v3832
      %3835 = vset.pattern.permute.xlu0 79
      %3836 = vperm.xlu0 %3835, %v3156
      %v3837 = vpop.permute.xlu0 %3836
      %v3839 = vmul.f32 %v3837, %v2886
      %3841 = vrot.lane.b32.xlu0 %v3839, 120
      %v3842 = vpop.permute.xlu0 %3841
      %v3844 = vadd.f32 %v3834, %v3842
      %3845 = vset.pattern.permute.xlu0 80
      %3846 = vperm.xlu0 %3845, %v3156
      %v3847 = vpop.permute.xlu0 %3846
      %v3849 = vmul.f32 %v3847, %v3041
      %v3850 = vadd.f32 %v3844, %v3849
      %3852 = vrot.lane.b32.xlu0 %v3311, 8
      %v3853 = vpop.permute.xlu0 %3852
      %3856 = vrot.lane.b32.xlu0 %v3388, 16
      %v3857 = vpop.permute.xlu0 %3856
      %3860 = vrot.lane.b32.xlu0 %v3465, 24
      %v3861 = vpop.permute.xlu0 %3860
      %3864 = vrot.lane.b32.xlu0 %v3542, 32
      %v3865 = vpop.permute.xlu0 %3864
      %3868 = vrot.lane.b32.xlu0 %v3619, 40
      %v3869 = vpop.permute.xlu0 %3868
      %3872 = vrot.lane.b32.xlu0 %v3696, 48
      %v3873 = vpop.permute.xlu0 %3872
      %3876 = vrot.lane.b32.xlu0 %v3773, 56
      %v3877 = vpop.permute.xlu0 %3876
      %3880 = vrot.lane.b32.xlu0 %v3850, 64
      %v3881 = vpop.permute.xlu0 %3880
      %v3883 = vsel %vm2444, %v3234, %v3853
      %v3884 = vsel %vm957, %v3883, %v3857
      %v3885 = vsel %vm2447, %v3884, %v3861
      %v3886 = vsel %vm1950, %v3885, %v3865
      %v3887 = vsel %vm881, %v3886, %v3869
      %v3888 = vsel %vm1959, %v3887, %v3873
      %v3889 = vsel %vm2452, %v3888, %v3877
      %v3890 = vsel %vm2454, %v3889, %v3881
      %3892 = vrot.lane.b32.xlu0 %v3155, 72
      %v3893 = vpop.permute.xlu0 %3892
      %v3895 = vsel %vm2456, %v3890, %v3893
      %vm3896 = vcmask 605184
      %v3897 = vsel %vm3896, %v3895, 0.0
      %3898 = vst [vmem:[%s867] sm:$0xff] %v3897
      %p3899 = scmp.lt.s32.totalorder %s38, 1
      %s3900 = scalar_select %p3899, %s38, 1
      %s3901 = smul.addr %s3900, 8
      %s3902 = scalar_lea.vmem %s27, %s3901
      // Predicated region
      $region129: #{forward.2} parent=127 // pred_check
        %p3903 = pneg %p643
      $region130: #{forward.2} parent=127 // pred_check_branch
        %3905 = sbr.rel (%p3903) target = $region132
      $region131: #{forward.2} parent=127 // pred_region
        _
      $region132: #{forward.2} parent=127 // pred_fallthru
        _
    $region128: #{forward.2} parent=5 // pred_fallthru
      _
    %p3906 = scmp.le.s32.totalorder 2, %s33
    // Predicated region
    $region133: #{forward.2} parent=5 // pred_check
      %p3907 = pneg %p3906
    $region134: #{forward.2} parent=5 // pred_check_branch
      %3909 = sbr.rel (%p3907) target = $region136
    $region135: #{forward.2} parent=5 // pred_region
      %s3910 = ssub.s32 %s33, 2
      // Predicated region
      $region137: #{forward.2} parent=135 // pred_check
        %p3911 = pneg %p649
      $region138: #{forward.2} parent=135 // pred_check_branch
        %3913 = sbr.rel (%p3911) target = $region140
      $region139: #{forward.2} parent=135 // pred_region
        %p3914 = scmp.lt.s32.totalorder %s39, 1
        %s3915 = scalar_select %p3914, %s39, 1
        %s3916 = smul.addr %s3915, 8
        %s3917 = scalar_lea.vmem %s27, %s3916
      $region140: #{forward.2} parent=135 // pred_fallthru
        _
    $region136: #{forward.2} parent=5 // pred_fallthru
      _
  $region6: #{forward.2} parent=0 // loop_footer
    %s37 = sadd.s32 1, %s33
  $region7: #{forward.2} parent=0 // loop_footer_branch
    %32 = sbr.rel target = $region3
  $region8: #{forward.2} parent=0 // loop_exit
    _

// kernel: forward.3
$region0: #{forward.3}
  #allocation0 [shape = 'u32[]', space=smem, size = 0x4, offset = 0x4, fixed_abs, tag = 'smem constant byte address 0x4 - core index']
  #allocation1 [shape = 'u32[144,128]{1,0:T(1,128)}', space=vmem, size = 0x12000, scoped, tag = 'internal scratch']
  %s0 = inlined_call_operand.vmem [shape: f32[8,72], index: 0, kind: input, shape index: {}]
  %s1 = inlined_call_operand.vmem [shape: f32[72,128], index: 1, kind: input, shape index: {}]
  %s2 = inlined_call_operand.vmem [shape: f32[1,128], index: 2, kind: input, shape index: {}]
  %s3 = inlined_call_operand.vmem [shape: f32[8,128], index: 3, kind: output, shape index: {}]
  %s4 = sld [smem:[#allocation0]]
  $region22: #{forward.3} parent=0
    _
  %s6 = ssub.s32 1, %s4
  %s7 = scalar_select 0, %s6, %s4
  // Predicated region
  $region2: #{forward.3} parent=0 // pred_check
    _
  $region3: #{forward.3} parent=0 // pred_check_branch
    %9 = sbr.rel (0) target = $region5
  $region4: #{forward.3} parent=0 // pred_region
    _
  $region5: #{forward.3} parent=0 // pred_fallthru
    _
  // Predicated region
  $region6: #{forward.3} parent=0 // pred_check
    _
  $region7: #{forward.3} parent=0 // pred_check_branch
    %11 = sbr.rel (0) target = $region9
  $region8: #{forward.3} parent=0 // pred_region
    _
  $region9: #{forward.3} parent=0 // pred_fallthru
    _
  // Predicated region
  $region10: #{forward.3} parent=0 // pred_check
    _
  $region11: #{forward.3} parent=0 // pred_check_branch
    %13 = sbr.rel (0) target = $region13
  $region12: #{forward.3} parent=0 // pred_region
    _
  $region13: #{forward.3} parent=0 // pred_fallthru
    _
  %v14 = vld [vmem:[%s0] sm:$0xff]
  %v15 = vld [vmem:[%s1] sm:$0xff]
  %v16 = vld [vmem:[%s1 + $0x8] sm:$0xff]
  %v17 = vld [vmem:[%s1 + $0x10] sm:$0xff]
  %v18 = vld [vmem:[%s1 + $0x18] sm:$0xff]
  %v19 = vld [vmem:[%s1 + $0x20] sm:$0xff]
  %v20 = vld [vmem:[%s1 + $0x28] sm:$0xff]
  %v21 = vld [vmem:[%s1 + $0x30] sm:$0xff]
  %v22 = vld [vmem:[%s1 + $0x38] sm:$0xff]
  %v23 = vld [vmem:[%s1 + $0x40] sm:$0xff]
  %v24 = vld [vmem:[%s2] sm:$0x1]
  %v26 = vlaneseq
  %v27 = vshrl.u32 %v26, 7
  %v28 = vsub.s32 0, %v27
  %v29 = vrot.slane %v24, %v28
  %vm31 = vcmask 588800
  %v33 = vsel %vm31, %v14, 0
  %35 = vmatprep.subr.mxu0 0.0
  %36 = vmatpush1.msra.mxu0 %v15
  %37 = vmatprep.subr.mxu0 0.0
  %38 = vmatpush1.msra.mxu0 %v16
  %39 = vmatprep.subr.mxu0 0.0
  %40 = vmatpush1.msra.mxu0 %v17
  %41 = vmatprep.subr.mxu0 0.0
  %42 = vmatpush1.msra.mxu0 %v18
  %43 = vmatprep.subr.mxu0 0.0
  %44 = vmatpush1.msra.mxu0 %v19
  %45 = vmatprep.subr.mxu0 0.0
  %46 = vmatpush1.msra.mxu0 %v20
  %47 = vmatprep.subr.mxu0 0.0
  %48 = vmatpush1.msra.mxu0 %v21
  %49 = vmatprep.subr.mxu0 0.0
  %50 = vmatpush1.msra.mxu0 %v22
  %51 = vmatprep.subr.mxu0 0.0
  %52 = vmatpush1.msra.mxu0 %v23
  %53 = vmatprep.subr.mxu0 0.0
  %54 = vmatpush1.msra.mxu0 0.0
  %55 = vmatprep.subr.mxu0 0.0
  %56 = vmatpush1.msra.mxu0 0.0
  %57 = vmatprep.subr.mxu0 0.0
  %58 = vmatpush1.msra.mxu0 0.0
  %59 = vmatprep.subr.mxu0 0.0
  %60 = vmatpush1.msra.mxu0 0.0
  %61 = vmatprep.subr.mxu0 0.0
  %62 = vmatpush1.msra.mxu0 0.0
  %63 = vmatprep.subr.mxu0 0.0
  %64 = vmatpush1.msra.mxu0 0.0
  %65 = vmatprep.subr.mxu0 0.0
  %66 = vmatpush1.msra.mxu0 0.0
  %67 = vmatprep.subr.mxu0 0.0
  %68 = vmatpush1.msra.mxu0 0.0
  %69 = vmatprep.subr.mxu0 0.0
  %70 = vmatpush1.msra.mxu0 0.0
  %71 = vmatprep.subr.mxu0 0.0
  %72 = vmatpush1.msra.mxu0 0.0
  %73 = vmatprep.subr.mxu0 0.0
  %74 = vmatpush1.msra.mxu0 0.0
  %75 = vmatprep.subr.mxu0 0.0
  %76 = vmatpush1.msra.mxu0 0.0
  %77 = vmatprep.subr.mxu0 0.0
  %78 = vmatpush1.msra.mxu0 0.0
  %79 = vmatprep.subr.mxu0 0.0
  %80 = vmatpush1.msra.mxu0 0.0
  %81 = vmatprep.subr.mxu0 0.0
  %82 = vmatpush1.msra.mxu0 0.0
  %83 = vmatprep.subr.mxu0 0.0
  %84 = vmatpush1.msra.mxu0 0.0
  %85 = vmatprep.subr.mxu0 0.0
  %86 = vmatpush1.msra.mxu0 0.0
  %87 = vmatprep.subr.mxu0 0.0
  %88 = vmatpush1.msra.mxu0 0.0
  %89 = vmatprep.subr.mxu0 0.0
  %90 = vmatpush1.msra.mxu0 0.0
  %91 = vmatprep.subr.mxu0 0.0
  %92 = vmatpush1.msra.mxu0 0.0
  %93 = vmatprep.subr.mxu0 0.0
  %94 = vmatpush1.msra.mxu0 0.0
  %95 = vmatprep.subr.mxu0 0.0
  %96 = vmatpush1.msra.mxu0 0.0
  %97 = vmatprep.subr.mxu0 0.0
  %98 = vmatpush1.msra.mxu0 0.0
  %99 = vmatprep.mubr.f32.mxu0 0.0
  %100 = vmatmul.mubr.f32.gmra.mrb[0].mxu0 %v33
  %v101 = vpop.f32.mrb[0].mxu0
  %v102 = vadd.f32 %v29, %v101
  %v103 = vpop.f32.mrb[0].mxu0
  %104 = vdwg.mxu0
  %105 = vst [vmem:[%s3] sm:$0xff] %v102
  // Predicated region
  $region14: #{forward.3} parent=0 // pred_check
    _
  $region15: #{forward.3} parent=0 // pred_check_branch
    %107 = sbr.rel (0) target = $region17
  $region16: #{forward.3} parent=0 // pred_region
    _
  $region17: #{forward.3} parent=0 // pred_fallthru
    _
  // Predicated region
  $region18: #{forward.3} parent=0 // pred_check
    _
  $region19: #{forward.3} parent=0 // pred_check_branch
    %109 = sbr.rel (0) target = $region21
  $region20: #{forward.3} parent=0 // pred_region
    _
  $region21: #{forward.3} parent=0 // pred_fallthru
    _

</llo_original>
